<compile_context>
chip_gen: v7x
topology: tpu7x:2x2x1
jax: 0.10.0
libtpu: 0.0.40
codegen_flags: <defaults>
</compile_context>

<pallas_src>
import math

import numpy as np
import jax
import jax.numpy as jnp
from jax.experimental import pallas as pl
from jax.experimental.pallas import tpu as pltpu

# ---- configuration (mirrors the tcnn configs chosen above) -------------------
N_INPUT_DIMS = 3
N_OUTPUT_DIMS = 16
N_FREQUENCIES = 6
N_NEURONS = 64

ENC_DIM = N_INPUT_DIMS * 2 * N_FREQUENCIES            # 36
PADDED_IN = ((ENC_DIM + 15) // 16) * 16               # 48 (tcnn pads to mult of 16)
PAD_ONES = PADDED_IN - ENC_DIM                        # 12, padded with 1.0
AUG = N_INPUT_DIMS + 1                                # x augmented with a ones row

TILE_B = 512                                          # batch tile (lane axis)

# ---- host-side encoding constants (passed into the kernel as inputs) ---------
_k = np.arange(ENC_DIM)
_dim = _k // (2 * N_FREQUENCIES)                      # input dim per column
_freq = (_k % (2 * N_FREQUENCIES)) // 2               # frequency index per column
ENC_SCALE = (2.0 ** _freq).astype(np.float32) * np.pi       # (36,)
ENC_PHASE = (_k % 2).astype(np.float32) * (np.pi / 2.0)     # (36,) sin/cos interleave


def _make_enc_matrix():
    """(36, 4) matrix S so that enc_arg = S @ [x; 1] (scale + phase folded in)."""
    s = np.zeros((ENC_DIM, AUG), np.float32)
    s[_k, _dim] = ENC_SCALE
    s[:, -1] = ENC_PHASE
    return jnp.asarray(s)


def _mlp_encoding_kernel(xaug_ref, senc_ref, w0t_ref, b0_ref, w1t_ref, w2t_ref,
                         o_ref):
    # Feature-major layout: batch fills the 128-lane axis everywhere.
    x_aug = xaug_ref[...]                                  # (4, TILE_B) f32

    # ---- Frequency encoding: one tiny f32 matmul + lane-dense sin -----------
    enc_arg = jnp.dot(senc_ref[...], x_aug,
                      preferred_element_type=jnp.float32)  # (36, TILE_B)
    enc = jnp.sin(enc_arg)                                 # (36, TILE_B) f32

    # ---- FullyFusedMLP: f32 operands, f32 MXU accumulation -------------------
    h0 = jnp.dot(w0t_ref[...], enc,
                 preferred_element_type=jnp.float32)       # (64, TILE_B)
    h0 = jnp.maximum(h0 + b0_ref[...], 0.0)                # bias = folded 1-pad

    h1 = jnp.dot(w1t_ref[...], h0,
                 preferred_element_type=jnp.float32)       # (64, TILE_B)
    h1 = jnp.maximum(h1, 0.0)

    out = jnp.dot(w2t_ref[...], h1,
                  preferred_element_type=jnp.float32)      # (16, TILE_B)

    o_ref[...] = out.astype(o_ref.dtype)                   # .float() semantics


@jax.jit
def tcnn_network_with_input_encoding(x, w0, w1, w2):
    """x: (N, 3) float32; w0: (48, 64), w1: (64, 64), w2: (64, 16).

    Returns (N, 16) float32.
    """
    n = x.shape[0]
    n_pad = pl.cdiv(n, TILE_B) * TILE_B
    grid = (n_pad // TILE_B,)

    # Feature-major input, augmented with a ones row (folds the phase add).
    x_aug = jnp.concatenate(
        [x.astype(jnp.float32), jnp.ones((n, 1), jnp.float32)], axis=1)  # (n, 4)
    if n_pad != n:
        x_aug = jnp.pad(x_aug, ((0, n_pad - n), (0, 0)))
    x_t = x_aug.T                                                       # (4, n_pad)

    s_enc = _make_enc_matrix()                                          # (36, 4) f32

    # Pre-transposed f32 weights; fold tcnn's 1.0-padding (cols 36..47) into a bias.
    w0 = w0.astype(jnp.float32)
    w0t = w0[:ENC_DIM].T                                     # (64, 36) f32
    b0 = w0[ENC_DIM:].sum(axis=0).reshape(N_NEURONS, 1)      # (64, 1) f32
    w1t = w1.astype(jnp.float32).T                            # (64, 64) f32
    w2t = w2.astype(jnp.float32).T                            # (16, 64) f32

    out_t = pl.pallas_call(
        _mlp_encoding_kernel,
        out_shape=jax.ShapeDtypeStruct((N_OUTPUT_DIMS, n_pad), jnp.float32),
        grid_spec=pltpu.PrefetchScalarGridSpec(
            num_scalar_prefetch=0,
            grid=grid,
            in_specs=[
                pl.BlockSpec((AUG, TILE_B), lambda i: (0, i)),              # x (transposed)
                pl.BlockSpec((ENC_DIM, AUG), lambda i: (0, 0)),             # encoding matrix
                pl.BlockSpec((N_NEURONS, ENC_DIM), lambda i: (0, 0)),       # W0^T
                pl.BlockSpec((N_NEURONS, 1), lambda i: (0, 0)),             # b0
                pl.BlockSpec((N_NEURONS, N_NEURONS), lambda i: (0, 0)),     # W1^T
                pl.BlockSpec((N_OUTPUT_DIMS, N_NEURONS), lambda i: (0, 0)), # W2^T
            ],
            out_specs=pl.BlockSpec((N_OUTPUT_DIMS, TILE_B), lambda i: (0, i)),
        ),
        compiler_params=pltpu.CompilerParams(
            dimension_semantics=("parallel",)),
    )(x_t, s_enc, w0t, b0, w1t, w2t)

    return out_t[:, :n].T                                   # (n, 16) f32


def _reference(x, w0, w1, w2):
    """Pure-JAX f32 reference for correctness checking."""
    x_rep = jnp.repeat(x, 2 * N_FREQUENCIES, axis=1)                  # (N, 36)
    enc = jnp.sin(x_rep * ENC_SCALE[None, :] + ENC_PHASE[None, :])
    enc = jnp.concatenate(
        [enc, jnp.ones((x.shape[0], PAD_ONES), jnp.float32)], axis=1)  # (N, 48)
    h = jax.nn.relu(enc @ w0)
    h = jax.nn.relu(h @ w1)
    return h @ w2


def _init_params(key):
    """Deterministic synthetic weights (tcnn-style layout: (fan_in, fan_out))."""
    k0, k1, k2 = jax.random.split(key, 3)
    w0 = jax.random.normal(k0, (PADDED_IN, N_NEURONS), jnp.float32) / math.sqrt(PADDED_IN)
    w1 = jax.random.normal(k1, (N_NEURONS, N_NEURONS), jnp.float32) / math.sqrt(N_NEURONS)
    w2 = jax.random.normal(k2, (N_NEURONS, N_OUTPUT_DIMS), jnp.float32) / math.sqrt(N_NEURONS)
    return w0, w1, w2


if __name__ == "__main__":
    key = jax.random.PRNGKey(0)
    k_x, k_w = jax.random.split(key)

    N = 1000  # deliberately NOT a multiple of TILE_B: exercises remainder padding
    x = jax.random.uniform(k_x, (N, N_INPUT_DIMS), jnp.float32)  # positions in [0, 1)
    w0, w1, w2 = _init_params(k_w)

    out = jax.block_until_ready(tcnn_network_with_input_encoding(x, w0, w1, w2))

    ref = _reference(x, w0, w1, w2)
    np.testing.assert_allclose(np.asarray(out), np.asarray(ref), rtol=1e-4, atol=1e-4)
    assert out.shape == (N, N_OUTPUT_DIMS) and out.dtype == jnp.float32

    print("KERNEL_OK")
</pallas_src>

<mosaic_0001>
module attributes {stable_mosaic.version = 11 : i64} {
  func.func @_mlp_encoding_kernel(%arg0: i32, %arg1: memref<4x512xf32, #tpu.memory_space<vmem>>, %arg2: memref<36x4xf32, #tpu.memory_space<vmem>>, %arg3: memref<64x36xf32, #tpu.memory_space<vmem>>, %arg4: memref<64x1xf32, #tpu.memory_space<vmem>>, %arg5: memref<64x64xf32, #tpu.memory_space<vmem>>, %arg6: memref<16x64xf32, #tpu.memory_space<vmem>>, %arg7: memref<16x512xf32, #tpu.memory_space<vmem>>) attributes {dimension_semantics = [#tpu.dimension_semantics<parallel>], iteration_bounds = array<i64: 2>, scalar_prefetch = 0 : i64, scratch_operands = 0 : i64, tpu.core_type = #tpu.core_type<tc>, window_params = [{transform_indices = @transform_0, window_bounds = array<i64: 4, 512>}, {pipeline_mode = #tpu.pipeline_mode<synchronous>, transform_indices = @transform_1, window_bounds = array<i64: 36, 4>}, {pipeline_mode = #tpu.pipeline_mode<synchronous>, transform_indices = @transform_2, window_bounds = array<i64: 64, 36>}, {pipeline_mode = #tpu.pipeline_mode<synchronous>, transform_indices = @transform_3, window_bounds = array<i64: 64, 1>}, {pipeline_mode = #tpu.pipeline_mode<synchronous>, transform_indices = @transform_4, window_bounds = array<i64: 64, 64>}, {pipeline_mode = #tpu.pipeline_mode<synchronous>, transform_indices = @transform_5, window_bounds = array<i64: 16, 64>}, {transform_indices = @transform_6, window_bounds = array<i64: 16, 512>}]} {
    %c0 = arith.constant 0 : index
    %c0_0 = arith.constant 0 : index
    %0 = vector.load %arg1[%c0, %c0_0] : memref<4x512xf32, #tpu.memory_space<vmem>>, vector<4x512xf32>
    %c0_1 = arith.constant 0 : index
    %c0_2 = arith.constant 0 : index
    %1 = vector.load %arg2[%c0_1, %c0_2] : memref<36x4xf32, #tpu.memory_space<vmem>>, vector<36x4xf32>
    %cst = arith.constant dense<0.000000e+00> : vector<36x512xf32>
    %2 = tpu.matmul %1, %0, %cst {dimension_numbers = #tpu.dot_dimension_numbers<[1], [0], [0], [1], [0, 0, 1, 1], [], []>} : vector<36x4xf32>, vector<4x512xf32>, vector<36x512xf32> -> vector<36x512xf32>
    %3 = math.sin %2 : vector<36x512xf32>
    %c0_3 = arith.constant 0 : index
    %c0_4 = arith.constant 0 : index
    %4 = vector.load %arg3[%c0_3, %c0_4] : memref<64x36xf32, #tpu.memory_space<vmem>>, vector<64x36xf32>
    %cst_5 = arith.constant dense<0.000000e+00> : vector<64x512xf32>
    %5 = tpu.matmul %4, %3, %cst_5 {dimension_numbers = #tpu.dot_dimension_numbers<[1], [0], [0], [1], [0, 0, 1, 1], [], []>} : vector<64x36xf32>, vector<36x512xf32>, vector<64x512xf32> -> vector<64x512xf32>
    %c0_6 = arith.constant 0 : index
    %c0_7 = arith.constant 0 : index
    %6 = vector.load %arg4[%c0_6, %c0_7] : memref<64x1xf32, #tpu.memory_space<vmem>>, vector<64x1xf32>
    %7 = vector.broadcast %6 : vector<64x1xf32> to vector<64x512xf32>
    %8 = arith.addf %5, %7 : vector<64x512xf32>
    %cst_8 = arith.constant 0.000000e+00 : f32
    %9 = vector.broadcast %cst_8 : f32 to vector<64x512xf32>
    %10 = arith.maximumf %8, %9 : vector<64x512xf32>
    %c0_9 = arith.constant 0 : index
    %c0_10 = arith.constant 0 : index
    %11 = vector.load %arg5[%c0_9, %c0_10] : memref<64x64xf32, #tpu.memory_space<vmem>>, vector<64x64xf32>
    %cst_11 = arith.constant dense<0.000000e+00> : vector<64x512xf32>
    %12 = tpu.matmul %11, %10, %cst_11 {dimension_numbers = #tpu.dot_dimension_numbers<[1], [0], [0], [1], [0, 0, 1, 1], [], []>} : vector<64x64xf32>, vector<64x512xf32>, vector<64x512xf32> -> vector<64x512xf32>
    %cst_12 = arith.constant 0.000000e+00 : f32
    %13 = vector.broadcast %cst_12 : f32 to vector<64x512xf32>
    %14 = arith.maximumf %12, %13 : vector<64x512xf32>
    %c0_13 = arith.constant 0 : index
    %c0_14 = arith.constant 0 : index
    %15 = vector.load %arg6[%c0_13, %c0_14] : memref<16x64xf32, #tpu.memory_space<vmem>>, vector<16x64xf32>
    %cst_15 = arith.constant dense<0.000000e+00> : vector<16x512xf32>
    %16 = tpu.matmul %15, %14, %cst_15 {dimension_numbers = #tpu.dot_dimension_numbers<[1], [0], [0], [1], [0, 0, 1, 1], [], []>} : vector<16x64xf32>, vector<64x512xf32>, vector<16x512xf32> -> vector<16x512xf32>
    %c0_16 = arith.constant 0 : index
    %c0_17 = arith.constant 0 : index
    %17 = vector.load %arg7[%c0_16, %c0_17] : memref<16x512xf32, #tpu.memory_space<vmem>>, vector<16x512xf32>
    tpu.vector_store %arg7[%c0_16, %c0_17], %16 {strides = array<i32>} : memref<16x512xf32, #tpu.memory_space<vmem>>, vector<16x512xf32>,
    return
  }
  func.func @transform_0(%arg0: i32) -> (i32, i32) {
    %c0_i32 = arith.constant 0 : i32
    %c0_i32_0 = arith.constant 0 : i32
    return %c0_i32, %arg0 : i32, i32
  }
  func.func @transform_1(%arg0: i32) -> (i32, i32) {
    %c0_i32 = arith.constant 0 : i32
    %c0_i32_0 = arith.constant 0 : i32
    %c0_i32_1 = arith.constant 0 : i32
    return %c0_i32, %c0_i32_0 : i32, i32
  }
  func.func @transform_2(%arg0: i32) -> (i32, i32) {
    %c0_i32 = arith.constant 0 : i32
    %c0_i32_0 = arith.constant 0 : i32
    %c0_i32_1 = arith.constant 0 : i32
    return %c0_i32, %c0_i32_0 : i32, i32
  }
  func.func @transform_3(%arg0: i32) -> (i32, i32) {
    %c0_i32 = arith.constant 0 : i32
    %c0_i32_0 = arith.constant 0 : i32
    %c0_i32_1 = arith.constant 0 : i32
    return %c0_i32, %c0_i32_0 : i32, i32
  }
  func.func @transform_4(%arg0: i32) -> (i32, i32) {
    %c0_i32 = arith.constant 0 : i32
    %c0_i32_0 = arith.constant 0 : i32
    %c0_i32_1 = arith.constant 0 : i32
    return %c0_i32, %c0_i32_0 : i32, i32
  }
  func.func @transform_5(%arg0: i32) -> (i32, i32) {
    %c0_i32 = arith.constant 0 : i32
    %c0_i32_0 = arith.constant 0 : i32
    %c0_i32_1 = arith.constant 0 : i32
    return %c0_i32, %c0_i32_0 : i32, i32
  }
  func.func @transform_6(%arg0: i32) -> (i32, i32) {
    %c0_i32 = arith.constant 0 : i32
    %c0_i32_0 = arith.constant 0 : i32
    return %c0_i32, %arg0 : i32, i32
  }
}

</mosaic_0001>

<llo_original>
// kernel: tcnn_network_with_input_encoding.1
$region0: #{tcnn_network_with_input_encoding.1}
  #allocation0 [shape = 'u32[]', space=smem, size = 0x4, offset = 0x4, fixed_abs, tag = 'smem constant byte address 0x4 - core index']
  #allocation1 [shape = 'u32[144,128]{1,0:T(1,128)}', space=vmem, size = 0x12000, scoped, tag = 'internal scratch']
  %s0 = inlined_call_operand.vmem [shape: f32[4,1024], index: 0, kind: input, shape index: {}]
  %s1 = inlined_call_operand.vmem [shape: f32[36,4], index: 1, kind: input, shape index: {}]
  %s2 = inlined_call_operand.vmem [shape: f32[64,36], index: 2, kind: input, shape index: {}]
  %s3 = inlined_call_operand.vmem [shape: f32[64,1], index: 3, kind: input, shape index: {}]
  %s4 = inlined_call_operand.vmem [shape: f32[64,64], index: 4, kind: input, shape index: {}]
  %s5 = inlined_call_operand.vmem [shape: f32[16,64], index: 5, kind: input, shape index: {}]
  %s6 = inlined_call_operand.vmem [shape: f32[16,1024], index: 6, kind: output, shape index: {}]
  %s7 = sld [smem:[#allocation0]]
  $region76: #{tcnn_network_with_input_encoding.1} parent=0
    _
  %s9 = ssub.s32 1, %s7
  %s10 = scalar_select 0, %s9, %s7
  $region1: #{tcnn_network_with_input_encoding.1} parent=0
    #allocation2 [shape = 'u8[65536]{0}', space=vmem, size = 0x10000, scoped, tag = 'output window, operand 0']
    loop: start=0, step=1, limit=4
    $region2: #{tcnn_network_with_input_encoding.1} parent=1 // loop_pre_header
      _
    $region3: #{tcnn_network_with_input_encoding.1} parent=1 // loop_header
      %s12 = sphi 0, %s16
      %p13 = scmp.ge.s32.totalorder %s12, 4
      %s22 = sphi 0, %s24
      %s25 = sphi 0, %s22
      %s26 = sphi 0, %s25
      %s42 = sphi 0, %s26
      %s46 = sphi 0, %s46
      %s48 = sphi 0, %s46
      %s49 = sphi 0, %s48
      %s63 = sphi 0, %s49
      %s67 = sphi 0, %s67
      %s69 = sphi 0, %s67
      %s70 = sphi 0, %s69
      %s84 = sphi 0, %s70
      %s88 = sphi 0, %s88
      %s90 = sphi 0, %s88
      %s91 = sphi 0, %s90
      %s105 = sphi 0, %s91
      %s109 = sphi 0, %s109
      %s111 = sphi 0, %s109
      %s112 = sphi 0, %s111
      %s126 = sphi 0, %s112
      %s130 = sphi 0, %s130
      %s132 = sphi 0, %s130
      %s133 = sphi 0, %s132
      %s147 = sphi 0, %s133
      %s153 = sphi 0, %s155
      %s156 = sphi 0, %s153
      %s157 = sphi 0, %s156
      %s173 = sphi 0, %s157
    $region4: #{tcnn_network_with_input_encoding.1} parent=1 // loop_header_branch
      %15 = sbr.rel (%p13) target = $region8
    $region5: #{tcnn_network_with_input_encoding.1} parent=1 // loop_body
      %s17 = ssub.s32 %s12, 1
      %s18 = ssub.s32 %s12, 2
      %s19 = sadd.s32 %s12, 1
      %s20 = ssub.s32 %s12, %s19
      %p21 = scmp.eq.s32.totalorder %s20, 0
      %s23 = sadd.s32 %s22, 1
      %s24 = scalar_select %p21, %s22, %s23
      %p27 = pneg %p21
      %p28 = scmp.eq.s32.totalorder %s12, 1
      %p29 = por %p27, %p28
      %p30 = scmp.ne.s32.totalorder %s22, %s25
      %p31 = scmp.eq.s32.totalorder %s12, 0
      %p32 = por %p30, %p31
      %p33 = scmp.ne.s32.totalorder %s22, %s25
      %p34 = scmp.eq.s32.totalorder %s17, 1
      %p35 = por %p33, %p34
      %p36 = scmp.ne.s32.totalorder %s25, %s26
      %p37 = scmp.eq.s32.totalorder %s17, 0
      %p38 = por %p36, %p37
      %p39 = scmp.ne.s32.totalorder %s25, %s26
      %p40 = scmp.eq.s32.totalorder %s18, 1
      %p41 = por %p39, %p40
      %p43 = scmp.ne.s32.totalorder %s26, %s42
      %p44 = scmp.eq.s32.totalorder %s18, 0
      %p45 = por %p43, %p44
      %s47 = sadd.s32 %s46, 1
      %p50 = scmp.eq.s32.totalorder %s12, 1
      %p51 = scmp.ne.s32.totalorder %s46, %s48
      %p52 = scmp.eq.s32.totalorder %s12, 0
      %p53 = por %p51, %p52
      %p54 = scmp.ne.s32.totalorder %s46, %s48
      %p55 = scmp.eq.s32.totalorder %s17, 1
      %p56 = por %p54, %p55
      %p57 = scmp.ne.s32.totalorder %s48, %s49
      %p58 = scmp.eq.s32.totalorder %s17, 0
      %p59 = por %p57, %p58
      %p60 = scmp.ne.s32.totalorder %s48, %s49
      %p61 = scmp.eq.s32.totalorder %s18, 1
      %p62 = por %p60, %p61
      %p64 = scmp.ne.s32.totalorder %s49, %s63
      %p65 = scmp.eq.s32.totalorder %s18, 0
      %p66 = por %p64, %p65
      %s68 = sadd.s32 %s67, 1
      %p71 = scmp.eq.s32.totalorder %s12, 1
      %p72 = scmp.ne.s32.totalorder %s67, %s69
      %p73 = scmp.eq.s32.totalorder %s12, 0
      %p74 = por %p72, %p73
      %p75 = scmp.ne.s32.totalorder %s67, %s69
      %p76 = scmp.eq.s32.totalorder %s17, 1
      %p77 = por %p75, %p76
      %p78 = scmp.ne.s32.totalorder %s69, %s70
      %p79 = scmp.eq.s32.totalorder %s17, 0
      %p80 = por %p78, %p79
      %p81 = scmp.ne.s32.totalorder %s69, %s70
      %p82 = scmp.eq.s32.totalorder %s18, 1
      %p83 = por %p81, %p82
      %p85 = scmp.ne.s32.totalorder %s70, %s84
      %p86 = scmp.eq.s32.totalorder %s18, 0
      %p87 = por %p85, %p86
      %s89 = sadd.s32 %s88, 1
      %p92 = scmp.eq.s32.totalorder %s12, 1
      %p93 = scmp.ne.s32.totalorder %s88, %s90
      %p94 = scmp.eq.s32.totalorder %s12, 0
      %p95 = por %p93, %p94
      %p96 = scmp.ne.s32.totalorder %s88, %s90
      %p97 = scmp.eq.s32.totalorder %s17, 1
      %p98 = por %p96, %p97
      %p99 = scmp.ne.s32.totalorder %s90, %s91
      %p100 = scmp.eq.s32.totalorder %s17, 0
      %p101 = por %p99, %p100
      %p102 = scmp.ne.s32.totalorder %s90, %s91
      %p103 = scmp.eq.s32.totalorder %s18, 1
      %p104 = por %p102, %p103
      %p106 = scmp.ne.s32.totalorder %s91, %s105
      %p107 = scmp.eq.s32.totalorder %s18, 0
      %p108 = por %p106, %p107
      %s110 = sadd.s32 %s109, 1
      %p113 = scmp.eq.s32.totalorder %s12, 1
      %p114 = scmp.ne.s32.totalorder %s109, %s111
      %p115 = scmp.eq.s32.totalorder %s12, 0
      %p116 = por %p114, %p115
      %p117 = scmp.ne.s32.totalorder %s109, %s111
      %p118 = scmp.eq.s32.totalorder %s17, 1
      %p119 = por %p117, %p118
      %p120 = scmp.ne.s32.totalorder %s111, %s112
      %p121 = scmp.eq.s32.totalorder %s17, 0
      %p122 = por %p120, %p121
      %p123 = scmp.ne.s32.totalorder %s111, %s112
      %p124 = scmp.eq.s32.totalorder %s18, 1
      %p125 = por %p123, %p124
      %p127 = scmp.ne.s32.totalorder %s112, %s126
      %p128 = scmp.eq.s32.totalorder %s18, 0
      %p129 = por %p127, %p128
      %s131 = sadd.s32 %s130, 1
      %p134 = scmp.eq.s32.totalorder %s12, 1
      %p135 = scmp.ne.s32.totalorder %s130, %s132
      %p136 = scmp.eq.s32.totalorder %s12, 0
      %p137 = por %p135, %p136
      %p138 = scmp.ne.s32.totalorder %s130, %s132
      %p139 = scmp.eq.s32.totalorder %s17, 1
      %p140 = por %p138, %p139
      %p141 = scmp.ne.s32.totalorder %s132, %s133
      %p142 = scmp.eq.s32.totalorder %s17, 0
      %p143 = por %p141, %p142
      %p144 = scmp.ne.s32.totalorder %s132, %s133
      %p145 = scmp.eq.s32.totalorder %s18, 1
      %p146 = por %p144, %p145
      %p148 = scmp.ne.s32.totalorder %s133, %s147
      %p149 = scmp.eq.s32.totalorder %s18, 0
      %p150 = por %p148, %p149
      %s151 = ssub.s32 %s12, %s19
      %p152 = scmp.eq.s32.totalorder %s151, 0
      %s154 = sadd.s32 %s153, 1
      %s155 = scalar_select %p152, %s153, %s154
      %p158 = pneg %p152
      %p159 = scmp.eq.s32.totalorder %s12, 1
      %p160 = por %p158, %p159
      %p161 = scmp.ne.s32.totalorder %s153, %s156
      %p162 = scmp.eq.s32.totalorder %s12, 0
      %p163 = por %p161, %p162
      %p164 = scmp.ne.s32.totalorder %s153, %s156
      %p165 = scmp.eq.s32.totalorder %s17, 1
      %p166 = por %p164, %p165
      %p167 = scmp.ne.s32.totalorder %s156, %s157
      %p168 = scmp.eq.s32.totalorder %s17, 0
      %p169 = por %p167, %p168
      %p170 = scmp.ne.s32.totalorder %s156, %s157
      %p171 = scmp.eq.s32.totalorder %s18, 1
      %p172 = por %p170, %p171
      %p174 = scmp.ne.s32.totalorder %s157, %s173
      %p175 = scmp.eq.s32.totalorder %s18, 0
      %p176 = por %p174, %p175
      %p177 = scmp.le.s32.totalorder 1, %s12
      %p178 = scmp.lt.s32.totalorder %s12, 3
      %p179 = pnand %p177, %p178
      %p180 = pneg %p179
      // Predicated region
      $region9: #{tcnn_network_with_input_encoding.1} parent=5 // pred_check
        _
      $region10: #{tcnn_network_with_input_encoding.1} parent=5 // pred_check_branch
        %182 = sbr.rel (%p179) target = $region12
      $region11: #{tcnn_network_with_input_encoding.1} parent=5 // pred_region
        %s183 = ssub.s32 %s12, 1
        // Predicated region
        $region13: #{tcnn_network_with_input_encoding.1} parent=11 // pred_check
          %p184 = pneg %p59
        $region14: #{tcnn_network_with_input_encoding.1} parent=11 // pred_check_branch
          %186 = sbr.rel (%p184) target = $region16
        $region15: #{tcnn_network_with_input_encoding.1} parent=11 // pred_region
          _
        $region16: #{tcnn_network_with_input_encoding.1} parent=11 // pred_fallthru
          _
        // Predicated region
        $region17: #{tcnn_network_with_input_encoding.1} parent=11 // pred_check
          %p187 = pneg %p80
        $region18: #{tcnn_network_with_input_encoding.1} parent=11 // pred_check_branch
          %189 = sbr.rel (%p187) target = $region20
        $region19: #{tcnn_network_with_input_encoding.1} parent=11 // pred_region
          _
        $region20: #{tcnn_network_with_input_encoding.1} parent=11 // pred_fallthru
          _
        // Predicated region
        $region21: #{tcnn_network_with_input_encoding.1} parent=11 // pred_check
          %p190 = pneg %p101
        $region22: #{tcnn_network_with_input_encoding.1} parent=11 // pred_check_branch
          %192 = sbr.rel (%p190) target = $region24
        $region23: #{tcnn_network_with_input_encoding.1} parent=11 // pred_region
          _
        $region24: #{tcnn_network_with_input_encoding.1} parent=11 // pred_fallthru
          _
        // Predicated region
        $region25: #{tcnn_network_with_input_encoding.1} parent=11 // pred_check
          %p193 = pneg %p122
        $region26: #{tcnn_network_with_input_encoding.1} parent=11 // pred_check_branch
          %195 = sbr.rel (%p193) target = $region28
        $region27: #{tcnn_network_with_input_encoding.1} parent=11 // pred_region
          _
        $region28: #{tcnn_network_with_input_encoding.1} parent=11 // pred_fallthru
          _
        // Predicated region
        $region29: #{tcnn_network_with_input_encoding.1} parent=11 // pred_check
          %p196 = pneg %p143
        $region30: #{tcnn_network_with_input_encoding.1} parent=11 // pred_check_branch
          %198 = sbr.rel (%p196) target = $region32
        $region31: #{tcnn_network_with_input_encoding.1} parent=11 // pred_region
          _
        $region32: #{tcnn_network_with_input_encoding.1} parent=11 // pred_fallthru
          _
      $region12: #{tcnn_network_with_input_encoding.1} parent=5 // pred_fallthru
        _
      %p199 = scmp.lt.s32.totalorder %s12, 2
      // Predicated region
      $region33: #{tcnn_network_with_input_encoding.1} parent=5 // pred_check
        %p200 = pneg %p199
      $region34: #{tcnn_network_with_input_encoding.1} parent=5 // pred_check_branch
        %202 = sbr.rel (%p200) target = $region36
      $region35: #{tcnn_network_with_input_encoding.1} parent=5 // pred_region
        // Predicated region
        $region37: #{tcnn_network_with_input_encoding.1} parent=35 // pred_check
          %p203 = pneg %p32
        $region38: #{tcnn_network_with_input_encoding.1} parent=35 // pred_check_branch
          %205 = sbr.rel (%p203) target = $region40
        $region39: #{tcnn_network_with_input_encoding.1} parent=35 // pred_region
          %s206 = smul.u32 4, %s12
          %p207 = scmp.lt.s32.totalorder %s206, 7
          %s208 = scalar_select %p207, %s206, 7
          %s209 = smul.addr %s208, 4
          %s210 = scalar_lea.vmem %s0, %s209
          %s211 = smul.u32 4, %s12
        $region40: #{tcnn_network_with_input_encoding.1} parent=35 // pred_fallthru
          _
      $region36: #{tcnn_network_with_input_encoding.1} parent=5 // pred_fallthru
        _
      %p212 = scmp.le.s32.totalorder 1, %s12
      %p213 = scmp.lt.s32.totalorder %s12, 3
      %p214 = pnand %p212, %p213
      %p215 = pneg %p214
      // Predicated region
      $region41: #{tcnn_network_with_input_encoding.1} parent=5 // pred_check
        _
      $region42: #{tcnn_network_with_input_encoding.1} parent=5 // pred_check_branch
        %217 = sbr.rel (%p214) target = $region44
      $region43: #{tcnn_network_with_input_encoding.1} parent=5 // pred_region
        %s218 = ssub.s32 %s12, 1
        %s219 = smul.u32 4, %s17
        %p220 = scmp.lt.s32.totalorder %s219, 7
        %s221 = scalar_select %p220, %s219, 7
        %s222 = smul.addr %s221, 4
        %s223 = scalar_lea.vmem %s0, %s222
        %p224 = pneg %p38
        %p225 = pneg %p35
        %p226 = pneg %p59
        %p227 = pneg %p56
        %p228 = pneg %p80
        %p229 = pneg %p77
        %p230 = pneg %p101
        %p231 = pneg %p98
        %p232 = pneg %p122
        %p233 = pneg %p119
        %p234 = pneg %p143
        %p235 = pneg %p140
        %p236 = pneg %p169
        %p237 = pneg %p166
        %s238 = sand.u32 %s156, 1
        %s239 = sand.u32 %s156, 1
        %s240 = smul.addr %s239, 64
        %s241 = scalar_lea.vmem [#allocation2], %s240
        %s242 = smul.u32 4, %s17
        %p243 = scmp.lt.s32.totalorder %s242, 7
        %s244 = scalar_select %p243, %s242, 7
        %s245 = smul.addr %s244, 4
        %s246 = scalar_lea.vmem %s0, %s245
        %s247 = smul.u32 4, %s17
        %s248 = smul.u32 4, %s17
        %v249 = vld [vmem:[%s246] sm:$0xff]
        %v250 = vld [vmem:[%s246 + $0x8] sm:$0xff]
        %v251 = vld [vmem:[%s1] sm:$0xff]
        %v252 = vld [vmem:[%s1 + $0x8] sm:$0xff]
        %v253 = vld [vmem:[%s1 + $0x10] sm:$0xff]
        %v254 = vld [vmem:[%s1 + $0x18] sm:$0xff]
        %v255 = vld [vmem:[%s1 + $0x20] sm:$0xf]
        %v258 = vcombine.high %v249, %v249
        %v259 = vcombine.high %v250, %v250
        %vm260 = vcmask 31744
        %v262 = vsel %vm260, %v251, 0
        %v265 = vsel %vm260, %v252, 0
        %v268 = vsel %vm260, %v253, 0
        %v271 = vsel %vm260, %v254, 0
        %v274 = vsel %vm260, %v255, 0
        %vm276 = vcmask 1043456
        %v277 = vsel %vm276, %v249, 0
        %v279 = vsel %vm276, %v258, 0
        %v281 = vsel %vm276, %v250, 0
        %v283 = vsel %vm276, %v259, 0
        %285 = vmatprep.subr.mxu0 %v279
        %286 = vmatpush1.msra.mxu0 %v277
        %287 = vmatprep.subr.mxu0 0.0
        %288 = vmatpush1.msra.mxu0 0.0
        %289 = vmatprep.subr.mxu0 0.0
        %290 = vmatpush1.msra.mxu0 0.0
        %291 = vmatprep.subr.mxu0 0.0
        %292 = vmatpush1.msra.mxu0 0.0
        %293 = vmatprep.subr.mxu0 0.0
        %294 = vmatpush1.msra.mxu0 0.0
        %295 = vmatprep.subr.mxu0 0.0
        %296 = vmatpush1.msra.mxu0 0.0
        %297 = vmatprep.subr.mxu0 0.0
        %298 = vmatpush1.msra.mxu0 0.0
        %299 = vmatprep.subr.mxu0 0.0
        %300 = vmatpush1.msra.mxu0 0.0
        %301 = vmatprep.subr.mxu0 0.0
        %302 = vmatpush1.msra.mxu0 0.0
        %303 = vmatprep.subr.mxu0 0.0
        %304 = vmatpush1.msra.mxu0 0.0
        %305 = vmatprep.subr.mxu0 0.0
        %306 = vmatpush1.msra.mxu0 0.0
        %307 = vmatprep.subr.mxu0 0.0
        %308 = vmatpush1.msra.mxu0 0.0
        %309 = vmatprep.subr.mxu0 0.0
        %310 = vmatpush1.msra.mxu0 0.0
        %311 = vmatprep.subr.mxu0 0.0
        %312 = vmatpush1.msra.mxu0 0.0
        %313 = vmatprep.subr.mxu0 0.0
        %314 = vmatpush1.msra.mxu0 0.0
        %315 = vmatprep.subr.mxu0 0.0
        %316 = vmatpush1.msra.mxu0 0.0
        %317 = vmatprep.subr.mxu0 0.0
        %318 = vmatpush1.msra.mxu0 0.0
        %319 = vmatprep.subr.mxu0 0.0
        %320 = vmatpush1.msra.mxu0 0.0
        %321 = vmatprep.subr.mxu0 0.0
        %322 = vmatpush1.msra.mxu0 0.0
        %323 = vmatprep.subr.mxu0 0.0
        %324 = vmatpush1.msra.mxu0 0.0
        %325 = vmatprep.subr.mxu0 0.0
        %326 = vmatpush1.msra.mxu0 0.0
        %327 = vmatprep.subr.mxu0 0.0
        %328 = vmatpush1.msra.mxu0 0.0
        %329 = vmatprep.subr.mxu0 0.0
        %330 = vmatpush1.msra.mxu0 0.0
        %331 = vmatprep.subr.mxu0 0.0
        %332 = vmatpush1.msra.mxu0 0.0
        %333 = vmatprep.subr.mxu0 0.0
        %334 = vmatpush1.msra.mxu0 0.0
        %335 = vmatprep.subr.mxu0 0.0
        %336 = vmatpush1.msra.mxu0 0.0
        %337 = vmatprep.subr.mxu0 0.0
        %338 = vmatpush1.msra.mxu0 0.0
        %339 = vmatprep.subr.mxu0 0.0
        %340 = vmatpush1.msra.mxu0 0.0
        %341 = vmatprep.subr.mxu0 0.0
        %342 = vmatpush1.msra.mxu0 0.0
        %343 = vmatprep.subr.mxu0 0.0
        %344 = vmatpush1.msra.mxu0 0.0
        %345 = vmatprep.subr.mxu0 0.0
        %346 = vmatpush1.msra.mxu0 0.0
        %347 = vmatprep.subr.mxu0 0.0
        %348 = vmatpush1.msra.mxu0 0.0
        %349 = vmatprep.mubr.f32.mxu0 0.0
        %350 = vmatmul.mubr.f32.gmra.mrb[0].mxu0 %v262
        %v351 = vpop.f32.mrb[0].mxu0
        %v352 = vadd.f32 0.0, %v351
        %v353 = vpop.f32.mrb[0].mxu0
        %v354 = vadd.f32 0.0, %v353
        %355 = vmatprep.mubr.f32.mxu0 0.0
        %356 = vmatmul.mubr.f32.gmra.mrb[0].mxu0 %v265
        %v357 = vpop.f32.mrb[0].mxu0
        %v358 = vadd.f32 0.0, %v357
        %v359 = vpop.f32.mrb[0].mxu0
        %v360 = vadd.f32 0.0, %v359
        %361 = vmatprep.mubr.f32.mxu0 0.0
        %362 = vmatmul.mubr.f32.gmra.mrb[0].mxu0 %v268
        %v363 = vpop.f32.mrb[0].mxu0
        %v364 = vadd.f32 0.0, %v363
        %v365 = vpop.f32.mrb[0].mxu0
        %v366 = vadd.f32 0.0, %v365
        %367 = vmatprep.mubr.f32.mxu0 0.0
        %368 = vmatmul.mubr.f32.gmra.mrb[0].mxu0 %v271
        %v369 = vpop.f32.mrb[0].mxu0
        %v370 = vadd.f32 0.0, %v369
        %v371 = vpop.f32.mrb[0].mxu0
        %v372 = vadd.f32 0.0, %v371
        %373 = vmatprep.mubr.f32.mxu0 0.0
        %374 = vmatmul.mubr.f32.gmra.mrb[0].mxu0 %v274
        %v375 = vpop.f32.mrb[0].mxu0
        %v376 = vadd.f32 0.0, %v375
        %v377 = vpop.f32.mrb[0].mxu0
        %v378 = vadd.f32 0.0, %v377
        %379 = vdwg.mxu0
        %380 = vmatprep.subr.mxu0 %v283
        %381 = vmatpush1.msra.mxu0 %v281
        %382 = vmatprep.subr.mxu0 0.0
        %383 = vmatpush1.msra.mxu0 0.0
        %384 = vmatprep.subr.mxu0 0.0
        %385 = vmatpush1.msra.mxu0 0.0
        %386 = vmatprep.subr.mxu0 0.0
        %387 = vmatpush1.msra.mxu0 0.0
        %388 = vmatprep.subr.mxu0 0.0
        %389 = vmatpush1.msra.mxu0 0.0
        %390 = vmatprep.subr.mxu0 0.0
        %391 = vmatpush1.msra.mxu0 0.0
        %392 = vmatprep.subr.mxu0 0.0
        %393 = vmatpush1.msra.mxu0 0.0
        %394 = vmatprep.subr.mxu0 0.0
        %395 = vmatpush1.msra.mxu0 0.0
        %396 = vmatprep.subr.mxu0 0.0
        %397 = vmatpush1.msra.mxu0 0.0
        %398 = vmatprep.subr.mxu0 0.0
        %399 = vmatpush1.msra.mxu0 0.0
        %400 = vmatprep.subr.mxu0 0.0
        %401 = vmatpush1.msra.mxu0 0.0
        %402 = vmatprep.subr.mxu0 0.0
        %403 = vmatpush1.msra.mxu0 0.0
        %404 = vmatprep.subr.mxu0 0.0
        %405 = vmatpush1.msra.mxu0 0.0
        %406 = vmatprep.subr.mxu0 0.0
        %407 = vmatpush1.msra.mxu0 0.0
        %408 = vmatprep.subr.mxu0 0.0
        %409 = vmatpush1.msra.mxu0 0.0
        %410 = vmatprep.subr.mxu0 0.0
        %411 = vmatpush1.msra.mxu0 0.0
        %412 = vmatprep.subr.mxu0 0.0
        %413 = vmatpush1.msra.mxu0 0.0
        %414 = vmatprep.subr.mxu0 0.0
        %415 = vmatpush1.msra.mxu0 0.0
        %416 = vmatprep.subr.mxu0 0.0
        %417 = vmatpush1.msra.mxu0 0.0
        %418 = vmatprep.subr.mxu0 0.0
        %419 = vmatpush1.msra.mxu0 0.0
        %420 = vmatprep.subr.mxu0 0.0
        %421 = vmatpush1.msra.mxu0 0.0
        %422 = vmatprep.subr.mxu0 0.0
        %423 = vmatpush1.msra.mxu0 0.0
        %424 = vmatprep.subr.mxu0 0.0
        %425 = vmatpush1.msra.mxu0 0.0
        %426 = vmatprep.subr.mxu0 0.0
        %427 = vmatpush1.msra.mxu0 0.0
        %428 = vmatprep.subr.mxu0 0.0
        %429 = vmatpush1.msra.mxu0 0.0
        %430 = vmatprep.subr.mxu0 0.0
        %431 = vmatpush1.msra.mxu0 0.0
        %432 = vmatprep.subr.mxu0 0.0
        %433 = vmatpush1.msra.mxu0 0.0
        %434 = vmatprep.subr.mxu0 0.0
        %435 = vmatpush1.msra.mxu0 0.0
        %436 = vmatprep.subr.mxu0 0.0
        %437 = vmatpush1.msra.mxu0 0.0
        %438 = vmatprep.subr.mxu0 0.0
        %439 = vmatpush1.msra.mxu0 0.0
        %440 = vmatprep.subr.mxu0 0.0
        %441 = vmatpush1.msra.mxu0 0.0
        %442 = vmatprep.subr.mxu0 0.0
        %443 = vmatpush1.msra.mxu0 0.0
        %444 = vmatprep.mubr.f32.mxu0 0.0
        %445 = vmatmul.mubr.f32.gmra.mrb[0].mxu0 %v262
        %v446 = vpop.f32.mrb[0].mxu0
        %v447 = vadd.f32 0.0, %v446
        %v448 = vpop.f32.mrb[0].mxu0
        %v449 = vadd.f32 0.0, %v448
        %450 = vmatprep.mubr.f32.mxu0 0.0
        %451 = vmatmul.mubr.f32.gmra.mrb[0].mxu0 %v265
        %v452 = vpop.f32.mrb[0].mxu0
        %v453 = vadd.f32 0.0, %v452
        %v454 = vpop.f32.mrb[0].mxu0
        %v455 = vadd.f32 0.0, %v454
        %456 = vmatprep.mubr.f32.mxu0 0.0
        %457 = vmatmul.mubr.f32.gmra.mrb[0].mxu0 %v268
        %v458 = vpop.f32.mrb[0].mxu0
        %v459 = vadd.f32 0.0, %v458
        %v460 = vpop.f32.mrb[0].mxu0
        %v461 = vadd.f32 0.0, %v460
        %462 = vmatprep.mubr.f32.mxu0 0.0
        %463 = vmatmul.mubr.f32.gmra.mrb[0].mxu0 %v271
        %v464 = vpop.f32.mrb[0].mxu0
        %v465 = vadd.f32 0.0, %v464
        %v466 = vpop.f32.mrb[0].mxu0
        %v467 = vadd.f32 0.0, %v466
        %468 = vmatprep.mubr.f32.mxu0 0.0
        %469 = vmatmul.mubr.f32.gmra.mrb[0].mxu0 %v274
        %v470 = vpop.f32.mrb[0].mxu0
        %v471 = vadd.f32 0.0, %v470
        %v472 = vpop.f32.mrb[0].mxu0
        %v473 = vadd.f32 0.0, %v472
        %474 = vdwg.mxu0
        %v475 = vand.u32 2147483647, %v352
        %vm476 = vcmp.le.f32.partialorder %v475, 0.7853982
        %vm477 = vcmp.lt.s32.totalorder %v352, 0
        %v478 = vand.u32 %v352, 2139095040
        %v479 = vshrl.u32 %v478, 23
        %v480 = vsub.s32 %v479, 127
        %v481 = vand.u32 2147483647, %v352
        %v482 = vand.u32 %v481, 8388607
        %v483 = vor.u32 %v482, 8388608
        %v484 = vsub.s32 0, %v483
        %v485 = vadd.s32 %v480, 1
        %vm486 = vcmp.gt.s32.totalorder %v485, 0
        %v487 = vsel %vm486, %v485, 0
        %v488 = vshrl.u32 %v487, 5
        %v489 = vand.u32 %v487, 31
        %v490 = vsub.s32 32, %v489
        %v491 = vshrl.u32 683565275, %v490
        %v492 = vshll.u32 683565275, %v489
        %v493 = vshrl.u32 2475754826, %v490
        %v494 = vor.u32 %v492, %v493
        %v495 = vshll.u32 2475754826, %v489
        %v496 = vshrl.u32 2131351028, %v490
        %v497 = vor.u32 %v495, %v496
        %v498 = vshll.u32 2131351028, %v489
        %v499 = vshrl.u32 2102212464, %v490
        %v500 = vor.u32 %v498, %v499
        %v501 = vshll.u32 2102212464, %v489
        %v502 = vshrl.u32 920167782, %v490
        %v503 = vor.u32 %v501, %v502
        %v504 = vshll.u32 920167782, %v489
        %v505 = vshrl.u32 1326507024, %v490
        %v506 = vor.u32 %v504, %v505
        %vm507 = vcmp.lt.s32.totalorder %v488, 1
        %vm508 = vcmp.lt.s32.totalorder %v488, 2
        %vm509 = vcmp.lt.s32.totalorder %v488, 3
        %vm510 = vcmp.lt.s32.totalorder %v488, 4
        %v511 = vsel %vm507, %v491, %v494
        %v512 = vsel %vm510, %v500, 2102212464
        %v513 = vsel %vm509, %v497, %v512
        %v514 = vsel %vm508, %v511, %v513
        %v515 = vsel %vm507, %v494, %v497
        %v516 = vsel %vm510, %v503, 920167782
        %v517 = vsel %vm509, %v500, %v516
        %v518 = vsel %vm508, %v515, %v517
        %v519 = vsel %vm507, %v497, %v500
        %v520 = vsel %vm510, %v506, 1326507024
        %v521 = vsel %vm509, %v503, %v520
        %v522 = vsel %vm508, %v519, %v521
        %v523 = vshll.u32 %v483, 8
        %v524 = vmul.u32.u64.compose %v523, %v522
        %v525 = vextract.low.u32 %v524
        %v526 = vextract.high.u32 %v524
        %v527 = vmul.u32.u64.compose %v523, %v518
        %v528 = vextract.low.u32 %v527
        %v529 = vextract.high.u32 %v527
        %v530 = vmul.u32 %v523, %v514
        %v531 = vadd.s32 %v526, %v528
        %vm532 = vc.u32 %v526, %v528
        %v533 = vadd.s32 %v529, 1
        %v534 = vsel %vm532, %v533, %v529
        %v535 = vadd.s32 %v530, %v534
        %v536 = vadd.s32 %v535, 536870912
        %v537 = vshrl.u32 %v536, 30
        %v538 = vshll.u32 %v537, 30
        %v539 = vsub.s32 %v535, %v538
        %vm540 = vcmp.lt.s32.totalorder %v539, 0
        %v541 = vsub.s32 0, %v539
        %v542 = vsel %vm540, %v541, %v539
        %v543 = vclz %v542
        %v544 = vsub.s32 %v543, 2
        %vm545 = vcmp.gt.s32.totalorder 0, %v544
        %v546 = vsel %vm545, 0, %v544
        %v547 = vsub.s32 32, %v546
        %v548 = vshll.u32 %v539, %v546
        %v549 = vshrl.u32 %v531, %v547
        %v550 = vor.u32 %v548, %v549
        %v551 = vsub.s32 4294967266, %v546
        %v552 = vadd.s32 %v551, 127
        %v553 = vshll.u32 %v552, 23
        %v554 = vor.u32 4788187, %v553
        %v555 = vand.u32 2147483647, %v554
        %v557 = vcvt.s32.f32 %v550
        %v558 = vmul.f32 %v557, %v555
        %v559 = vxor.u32 %v558, 2147483648
        %v560 = vsel %vm477, %v559, %v558
        %v561 = vsub.s32 4, %v537
        %v562 = vsel %vm477, %v561, %v537
        %v563 = vsel %vm476, %v352, %v560
        %v564 = vsel %vm476, 0, %v562
        %v565 = vcosq.f32.pop %v563
        %v566 = vsinq.f32.pop %v563
        %vm567 = vweird.f32 %v352
        %v568 = vadd.s32 %v564, 3
        %v569 = vand.u32 %v568, 3
        %vm570 = vcmp.lt.s32.totalorder %v569, 2
        %vm571 = vcmp.eq.s32.totalorder %v569, 0
        %v572 = vxor.u32 %v566, 2147483648
        %v573 = vsel %vm571, %v565, %v572
        %vm574 = vcmp.eq.s32.totalorder %v569, 2
        %v575 = vxor.u32 %v565, 2147483648
        %v576 = vsel %vm574, %v575, %v566
        %v577 = vsel %vm570, %v573, %v576
        %v578 = vsel %vm567, nan, %v577
        %v579 = vand.u32 2147483647, %v354
        %vm580 = vcmp.le.f32.partialorder %v579, 0.7853982
        %vm581 = vcmp.lt.s32.totalorder %v354, 0
        %v582 = vand.u32 %v354, 2139095040
        %v583 = vshrl.u32 %v582, 23
        %v584 = vsub.s32 %v583, 127
        %v585 = vand.u32 2147483647, %v354
        %v586 = vand.u32 %v585, 8388607
        %v587 = vor.u32 %v586, 8388608
        %v588 = vsub.s32 0, %v587
        %v589 = vadd.s32 %v584, 1
        %vm590 = vcmp.gt.s32.totalorder %v589, 0
        %v591 = vsel %vm590, %v589, 0
        %v592 = vshrl.u32 %v591, 5
        %v593 = vand.u32 %v591, 31
        %v594 = vsub.s32 32, %v593
        %v595 = vshrl.u32 683565275, %v594
        %v596 = vshll.u32 683565275, %v593
        %v597 = vshrl.u32 2475754826, %v594
        %v598 = vor.u32 %v596, %v597
        %v599 = vshll.u32 2475754826, %v593
        %v600 = vshrl.u32 2131351028, %v594
        %v601 = vor.u32 %v599, %v600
        %v602 = vshll.u32 2131351028, %v593
        %v603 = vshrl.u32 2102212464, %v594
        %v604 = vor.u32 %v602, %v603
        %v605 = vshll.u32 2102212464, %v593
        %v606 = vshrl.u32 920167782, %v594
        %v607 = vor.u32 %v605, %v606
        %v608 = vshll.u32 920167782, %v593
        %v609 = vshrl.u32 1326507024, %v594
        %v610 = vor.u32 %v608, %v609
        %vm611 = vcmp.lt.s32.totalorder %v592, 1
        %vm612 = vcmp.lt.s32.totalorder %v592, 2
        %vm613 = vcmp.lt.s32.totalorder %v592, 3
        %vm614 = vcmp.lt.s32.totalorder %v592, 4
        %v615 = vsel %vm611, %v595, %v598
        %v616 = vsel %vm614, %v604, 2102212464
        %v617 = vsel %vm613, %v601, %v616
        %v618 = vsel %vm612, %v615, %v617
        %v619 = vsel %vm611, %v598, %v601
        %v620 = vsel %vm614, %v607, 920167782
        %v621 = vsel %vm613, %v604, %v620
        %v622 = vsel %vm612, %v619, %v621
        %v623 = vsel %vm611, %v601, %v604
        %v624 = vsel %vm614, %v610, 1326507024
        %v625 = vsel %vm613, %v607, %v624
        %v626 = vsel %vm612, %v623, %v625
        %v627 = vshll.u32 %v587, 8
        %v628 = vmul.u32.u64.compose %v627, %v626
        %v629 = vextract.low.u32 %v628
        %v630 = vextract.high.u32 %v628
        %v631 = vmul.u32.u64.compose %v627, %v622
        %v632 = vextract.low.u32 %v631
        %v633 = vextract.high.u32 %v631
        %v634 = vmul.u32 %v627, %v618
        %v635 = vadd.s32 %v630, %v632
        %vm636 = vc.u32 %v630, %v632
        %v637 = vadd.s32 %v633, 1
        %v638 = vsel %vm636, %v637, %v633
        %v639 = vadd.s32 %v634, %v638
        %v640 = vadd.s32 %v639, 536870912
        %v641 = vshrl.u32 %v640, 30
        %v642 = vshll.u32 %v641, 30
        %v643 = vsub.s32 %v639, %v642
        %vm644 = vcmp.lt.s32.totalorder %v643, 0
        %v645 = vsub.s32 0, %v643
        %v646 = vsel %vm644, %v645, %v643
        %v647 = vclz %v646
        %v648 = vsub.s32 %v647, 2
        %vm649 = vcmp.gt.s32.totalorder 0, %v648
        %v650 = vsel %vm649, 0, %v648
        %v651 = vsub.s32 32, %v650
        %v652 = vshll.u32 %v643, %v650
        %v653 = vshrl.u32 %v635, %v651
        %v654 = vor.u32 %v652, %v653
        %v655 = vsub.s32 4294967266, %v650
        %v656 = vadd.s32 %v655, 127
        %v657 = vshll.u32 %v656, 23
        %v658 = vor.u32 4788187, %v657
        %v659 = vand.u32 2147483647, %v658
        %v661 = vcvt.s32.f32 %v654
        %v662 = vmul.f32 %v661, %v659
        %v663 = vxor.u32 %v662, 2147483648
        %v664 = vsel %vm581, %v663, %v662
        %v665 = vsub.s32 4, %v641
        %v666 = vsel %vm581, %v665, %v641
        %v667 = vsel %vm580, %v354, %v664
        %v668 = vsel %vm580, 0, %v666
        %v669 = vcosq.f32.pop %v667
        %v670 = vsinq.f32.pop %v667
        %vm671 = vweird.f32 %v354
        %v672 = vadd.s32 %v668, 3
        %v673 = vand.u32 %v672, 3
        %vm674 = vcmp.lt.s32.totalorder %v673, 2
        %vm675 = vcmp.eq.s32.totalorder %v673, 0
        %v676 = vxor.u32 %v670, 2147483648
        %v677 = vsel %vm675, %v669, %v676
        %vm678 = vcmp.eq.s32.totalorder %v673, 2
        %v679 = vxor.u32 %v669, 2147483648
        %v680 = vsel %vm678, %v679, %v670
        %v681 = vsel %vm674, %v677, %v680
        %v682 = vsel %vm671, nan, %v681
        %v683 = vand.u32 2147483647, %v447
        %vm684 = vcmp.le.f32.partialorder %v683, 0.7853982
        %vm685 = vcmp.lt.s32.totalorder %v447, 0
        %v686 = vand.u32 %v447, 2139095040
        %v687 = vshrl.u32 %v686, 23
        %v688 = vsub.s32 %v687, 127
        %v689 = vand.u32 2147483647, %v447
        %v690 = vand.u32 %v689, 8388607
        %v691 = vor.u32 %v690, 8388608
        %v692 = vsub.s32 0, %v691
        %v693 = vadd.s32 %v688, 1
        %vm694 = vcmp.gt.s32.totalorder %v693, 0
        %v695 = vsel %vm694, %v693, 0
        %v696 = vshrl.u32 %v695, 5
        %v697 = vand.u32 %v695, 31
        %v698 = vsub.s32 32, %v697
        %v699 = vshrl.u32 683565275, %v698
        %v700 = vshll.u32 683565275, %v697
        %v701 = vshrl.u32 2475754826, %v698
        %v702 = vor.u32 %v700, %v701
        %v703 = vshll.u32 2475754826, %v697
        %v704 = vshrl.u32 2131351028, %v698
        %v705 = vor.u32 %v703, %v704
        %v706 = vshll.u32 2131351028, %v697
        %v707 = vshrl.u32 2102212464, %v698
        %v708 = vor.u32 %v706, %v707
        %v709 = vshll.u32 2102212464, %v697
        %v710 = vshrl.u32 920167782, %v698
        %v711 = vor.u32 %v709, %v710
        %v712 = vshll.u32 920167782, %v697
        %v713 = vshrl.u32 1326507024, %v698
        %v714 = vor.u32 %v712, %v713
        %vm715 = vcmp.lt.s32.totalorder %v696, 1
        %vm716 = vcmp.lt.s32.totalorder %v696, 2
        %vm717 = vcmp.lt.s32.totalorder %v696, 3
        %vm718 = vcmp.lt.s32.totalorder %v696, 4
        %v719 = vsel %vm715, %v699, %v702
        %v720 = vsel %vm718, %v708, 2102212464
        %v721 = vsel %vm717, %v705, %v720
        %v722 = vsel %vm716, %v719, %v721
        %v723 = vsel %vm715, %v702, %v705
        %v724 = vsel %vm718, %v711, 920167782
        %v725 = vsel %vm717, %v708, %v724
        %v726 = vsel %vm716, %v723, %v725
        %v727 = vsel %vm715, %v705, %v708
        %v728 = vsel %vm718, %v714, 1326507024
        %v729 = vsel %vm717, %v711, %v728
        %v730 = vsel %vm716, %v727, %v729
        %v731 = vshll.u32 %v691, 8
        %v732 = vmul.u32.u64.compose %v731, %v730
        %v733 = vextract.low.u32 %v732
        %v734 = vextract.high.u32 %v732
        %v735 = vmul.u32.u64.compose %v731, %v726
        %v736 = vextract.low.u32 %v735
        %v737 = vextract.high.u32 %v735
        %v738 = vmul.u32 %v731, %v722
        %v739 = vadd.s32 %v734, %v736
        %vm740 = vc.u32 %v734, %v736
        %v741 = vadd.s32 %v737, 1
        %v742 = vsel %vm740, %v741, %v737
        %v743 = vadd.s32 %v738, %v742
        %v744 = vadd.s32 %v743, 536870912
        %v745 = vshrl.u32 %v744, 30
        %v746 = vshll.u32 %v745, 30
        %v747 = vsub.s32 %v743, %v746
        %vm748 = vcmp.lt.s32.totalorder %v747, 0
        %v749 = vsub.s32 0, %v747
        %v750 = vsel %vm748, %v749, %v747
        %v751 = vclz %v750
        %v752 = vsub.s32 %v751, 2
        %vm753 = vcmp.gt.s32.totalorder 0, %v752
        %v754 = vsel %vm753, 0, %v752
        %v755 = vsub.s32 32, %v754
        %v756 = vshll.u32 %v747, %v754
        %v757 = vshrl.u32 %v739, %v755
        %v758 = vor.u32 %v756, %v757
        %v759 = vsub.s32 4294967266, %v754
        %v760 = vadd.s32 %v759, 127
        %v761 = vshll.u32 %v760, 23
        %v762 = vor.u32 4788187, %v761
        %v763 = vand.u32 2147483647, %v762
        %v765 = vcvt.s32.f32 %v758
        %v766 = vmul.f32 %v765, %v763
        %v767 = vxor.u32 %v766, 2147483648
        %v768 = vsel %vm685, %v767, %v766
        %v769 = vsub.s32 4, %v745
        %v770 = vsel %vm685, %v769, %v745
        %v771 = vsel %vm684, %v447, %v768
        %v772 = vsel %vm684, 0, %v770
        %v773 = vcosq.f32.pop %v771
        %v774 = vsinq.f32.pop %v771
        %vm775 = vweird.f32 %v447
        %v776 = vadd.s32 %v772, 3
        %v777 = vand.u32 %v776, 3
        %vm778 = vcmp.lt.s32.totalorder %v777, 2
        %vm779 = vcmp.eq.s32.totalorder %v777, 0
        %v780 = vxor.u32 %v774, 2147483648
        %v781 = vsel %vm779, %v773, %v780
        %vm782 = vcmp.eq.s32.totalorder %v777, 2
        %v783 = vxor.u32 %v773, 2147483648
        %v784 = vsel %vm782, %v783, %v774
        %v785 = vsel %vm778, %v781, %v784
        %v786 = vsel %vm775, nan, %v785
        %v787 = vand.u32 2147483647, %v449
        %vm788 = vcmp.le.f32.partialorder %v787, 0.7853982
        %vm789 = vcmp.lt.s32.totalorder %v449, 0
        %v790 = vand.u32 %v449, 2139095040
        %v791 = vshrl.u32 %v790, 23
        %v792 = vsub.s32 %v791, 127
        %v793 = vand.u32 2147483647, %v449
        %v794 = vand.u32 %v793, 8388607
        %v795 = vor.u32 %v794, 8388608
        %v796 = vsub.s32 0, %v795
        %v797 = vadd.s32 %v792, 1
        %vm798 = vcmp.gt.s32.totalorder %v797, 0
        %v799 = vsel %vm798, %v797, 0
        %v800 = vshrl.u32 %v799, 5
        %v801 = vand.u32 %v799, 31
        %v802 = vsub.s32 32, %v801
        %v803 = vshrl.u32 683565275, %v802
        %v804 = vshll.u32 683565275, %v801
        %v805 = vshrl.u32 2475754826, %v802
        %v806 = vor.u32 %v804, %v805
        %v807 = vshll.u32 2475754826, %v801
        %v808 = vshrl.u32 2131351028, %v802
        %v809 = vor.u32 %v807, %v808
        %v810 = vshll.u32 2131351028, %v801
        %v811 = vshrl.u32 2102212464, %v802
        %v812 = vor.u32 %v810, %v811
        %v813 = vshll.u32 2102212464, %v801
        %v814 = vshrl.u32 920167782, %v802
        %v815 = vor.u32 %v813, %v814
        %v816 = vshll.u32 920167782, %v801
        %v817 = vshrl.u32 1326507024, %v802
        %v818 = vor.u32 %v816, %v817
        %vm819 = vcmp.lt.s32.totalorder %v800, 1
        %vm820 = vcmp.lt.s32.totalorder %v800, 2
        %vm821 = vcmp.lt.s32.totalorder %v800, 3
        %vm822 = vcmp.lt.s32.totalorder %v800, 4
        %v823 = vsel %vm819, %v803, %v806
        %v824 = vsel %vm822, %v812, 2102212464
        %v825 = vsel %vm821, %v809, %v824
        %v826 = vsel %vm820, %v823, %v825
        %v827 = vsel %vm819, %v806, %v809
        %v828 = vsel %vm822, %v815, 920167782
        %v829 = vsel %vm821, %v812, %v828
        %v830 = vsel %vm820, %v827, %v829
        %v831 = vsel %vm819, %v809, %v812
        %v832 = vsel %vm822, %v818, 1326507024
        %v833 = vsel %vm821, %v815, %v832
        %v834 = vsel %vm820, %v831, %v833
        %v835 = vshll.u32 %v795, 8
        %v836 = vmul.u32.u64.compose %v835, %v834
        %v837 = vextract.low.u32 %v836
        %v838 = vextract.high.u32 %v836
        %v839 = vmul.u32.u64.compose %v835, %v830
        %v840 = vextract.low.u32 %v839
        %v841 = vextract.high.u32 %v839
        %v842 = vmul.u32 %v835, %v826
        %v843 = vadd.s32 %v838, %v840
        %vm844 = vc.u32 %v838, %v840
        %v845 = vadd.s32 %v841, 1
        %v846 = vsel %vm844, %v845, %v841
        %v847 = vadd.s32 %v842, %v846
        %v848 = vadd.s32 %v847, 536870912
        %v849 = vshrl.u32 %v848, 30
        %v850 = vshll.u32 %v849, 30
        %v851 = vsub.s32 %v847, %v850
        %vm852 = vcmp.lt.s32.totalorder %v851, 0
        %v853 = vsub.s32 0, %v851
        %v854 = vsel %vm852, %v853, %v851
        %v855 = vclz %v854
        %v856 = vsub.s32 %v855, 2
        %vm857 = vcmp.gt.s32.totalorder 0, %v856
        %v858 = vsel %vm857, 0, %v856
        %v859 = vsub.s32 32, %v858
        %v860 = vshll.u32 %v851, %v858
        %v861 = vshrl.u32 %v843, %v859
        %v862 = vor.u32 %v860, %v861
        %v863 = vsub.s32 4294967266, %v858
        %v864 = vadd.s32 %v863, 127
        %v865 = vshll.u32 %v864, 23
        %v866 = vor.u32 4788187, %v865
        %v867 = vand.u32 2147483647, %v866
        %v869 = vcvt.s32.f32 %v862
        %v870 = vmul.f32 %v869, %v867
        %v871 = vxor.u32 %v870, 2147483648
        %v872 = vsel %vm789, %v871, %v870
        %v873 = vsub.s32 4, %v849
        %v874 = vsel %vm789, %v873, %v849
        %v875 = vsel %vm788, %v449, %v872
        %v876 = vsel %vm788, 0, %v874
        %v877 = vcosq.f32.pop %v875
        %v878 = vsinq.f32.pop %v875
        %vm879 = vweird.f32 %v449
        %v880 = vadd.s32 %v876, 3
        %v881 = vand.u32 %v880, 3
        %vm882 = vcmp.lt.s32.totalorder %v881, 2
        %vm883 = vcmp.eq.s32.totalorder %v881, 0
        %v884 = vxor.u32 %v878, 2147483648
        %v885 = vsel %vm883, %v877, %v884
        %vm886 = vcmp.eq.s32.totalorder %v881, 2
        %v887 = vxor.u32 %v877, 2147483648
        %v888 = vsel %vm886, %v887, %v878
        %v889 = vsel %vm882, %v885, %v888
        %v890 = vsel %vm879, nan, %v889
        %v891 = vand.u32 2147483647, %v358
        %vm892 = vcmp.le.f32.partialorder %v891, 0.7853982
        %vm893 = vcmp.lt.s32.totalorder %v358, 0
        %v894 = vand.u32 %v358, 2139095040
        %v895 = vshrl.u32 %v894, 23
        %v896 = vsub.s32 %v895, 127
        %v897 = vand.u32 2147483647, %v358
        %v898 = vand.u32 %v897, 8388607
        %v899 = vor.u32 %v898, 8388608
        %v900 = vsub.s32 0, %v899
        %v901 = vadd.s32 %v896, 1
        %vm902 = vcmp.gt.s32.totalorder %v901, 0
        %v903 = vsel %vm902, %v901, 0
        %v904 = vshrl.u32 %v903, 5
        %v905 = vand.u32 %v903, 31
        %v906 = vsub.s32 32, %v905
        %v907 = vshrl.u32 683565275, %v906
        %v908 = vshll.u32 683565275, %v905
        %v909 = vshrl.u32 2475754826, %v906
        %v910 = vor.u32 %v908, %v909
        %v911 = vshll.u32 2475754826, %v905
        %v912 = vshrl.u32 2131351028, %v906
        %v913 = vor.u32 %v911, %v912
        %v914 = vshll.u32 2131351028, %v905
        %v915 = vshrl.u32 2102212464, %v906
        %v916 = vor.u32 %v914, %v915
        %v917 = vshll.u32 2102212464, %v905
        %v918 = vshrl.u32 920167782, %v906
        %v919 = vor.u32 %v917, %v918
        %v920 = vshll.u32 920167782, %v905
        %v921 = vshrl.u32 1326507024, %v906
        %v922 = vor.u32 %v920, %v921
        %vm923 = vcmp.lt.s32.totalorder %v904, 1
        %vm924 = vcmp.lt.s32.totalorder %v904, 2
        %vm925 = vcmp.lt.s32.totalorder %v904, 3
        %vm926 = vcmp.lt.s32.totalorder %v904, 4
        %v927 = vsel %vm923, %v907, %v910
        %v928 = vsel %vm926, %v916, 2102212464
        %v929 = vsel %vm925, %v913, %v928
        %v930 = vsel %vm924, %v927, %v929
        %v931 = vsel %vm923, %v910, %v913
        %v932 = vsel %vm926, %v919, 920167782
        %v933 = vsel %vm925, %v916, %v932
        %v934 = vsel %vm924, %v931, %v933
        %v935 = vsel %vm923, %v913, %v916
        %v936 = vsel %vm926, %v922, 1326507024
        %v937 = vsel %vm925, %v919, %v936
        %v938 = vsel %vm924, %v935, %v937
        %v939 = vshll.u32 %v899, 8
        %v940 = vmul.u32.u64.compose %v939, %v938
        %v941 = vextract.low.u32 %v940
        %v942 = vextract.high.u32 %v940
        %v943 = vmul.u32.u64.compose %v939, %v934
        %v944 = vextract.low.u32 %v943
        %v945 = vextract.high.u32 %v943
        %v946 = vmul.u32 %v939, %v930
        %v947 = vadd.s32 %v942, %v944
        %vm948 = vc.u32 %v942, %v944
        %v949 = vadd.s32 %v945, 1
        %v950 = vsel %vm948, %v949, %v945
        %v951 = vadd.s32 %v946, %v950
        %v952 = vadd.s32 %v951, 536870912
        %v953 = vshrl.u32 %v952, 30
        %v954 = vshll.u32 %v953, 30
        %v955 = vsub.s32 %v951, %v954
        %vm956 = vcmp.lt.s32.totalorder %v955, 0
        %v957 = vsub.s32 0, %v955
        %v958 = vsel %vm956, %v957, %v955
        %v959 = vclz %v958
        %v960 = vsub.s32 %v959, 2
        %vm961 = vcmp.gt.s32.totalorder 0, %v960
        %v962 = vsel %vm961, 0, %v960
        %v963 = vsub.s32 32, %v962
        %v964 = vshll.u32 %v955, %v962
        %v965 = vshrl.u32 %v947, %v963
        %v966 = vor.u32 %v964, %v965
        %v967 = vsub.s32 4294967266, %v962
        %v968 = vadd.s32 %v967, 127
        %v969 = vshll.u32 %v968, 23
        %v970 = vor.u32 4788187, %v969
        %v971 = vand.u32 2147483647, %v970
        %v973 = vcvt.s32.f32 %v966
        %v974 = vmul.f32 %v973, %v971
        %v975 = vxor.u32 %v974, 2147483648
        %v976 = vsel %vm893, %v975, %v974
        %v977 = vsub.s32 4, %v953
        %v978 = vsel %vm893, %v977, %v953
        %v979 = vsel %vm892, %v358, %v976
        %v980 = vsel %vm892, 0, %v978
        %v981 = vcosq.f32.pop %v979
        %v982 = vsinq.f32.pop %v979
        %vm983 = vweird.f32 %v358
        %v984 = vadd.s32 %v980, 3
        %v985 = vand.u32 %v984, 3
        %vm986 = vcmp.lt.s32.totalorder %v985, 2
        %vm987 = vcmp.eq.s32.totalorder %v985, 0
        %v988 = vxor.u32 %v982, 2147483648
        %v989 = vsel %vm987, %v981, %v988
        %vm990 = vcmp.eq.s32.totalorder %v985, 2
        %v991 = vxor.u32 %v981, 2147483648
        %v992 = vsel %vm990, %v991, %v982
        %v993 = vsel %vm986, %v989, %v992
        %v994 = vsel %vm983, nan, %v993
        %v995 = vand.u32 2147483647, %v360
        %vm996 = vcmp.le.f32.partialorder %v995, 0.7853982
        %vm997 = vcmp.lt.s32.totalorder %v360, 0
        %v998 = vand.u32 %v360, 2139095040
        %v999 = vshrl.u32 %v998, 23
        %v1000 = vsub.s32 %v999, 127
        %v1001 = vand.u32 2147483647, %v360
        %v1002 = vand.u32 %v1001, 8388607
        %v1003 = vor.u32 %v1002, 8388608
        %v1004 = vsub.s32 0, %v1003
        %v1005 = vadd.s32 %v1000, 1
        %vm1006 = vcmp.gt.s32.totalorder %v1005, 0
        %v1007 = vsel %vm1006, %v1005, 0
        %v1008 = vshrl.u32 %v1007, 5
        %v1009 = vand.u32 %v1007, 31
        %v1010 = vsub.s32 32, %v1009
        %v1011 = vshrl.u32 683565275, %v1010
        %v1012 = vshll.u32 683565275, %v1009
        %v1013 = vshrl.u32 2475754826, %v1010
        %v1014 = vor.u32 %v1012, %v1013
        %v1015 = vshll.u32 2475754826, %v1009
        %v1016 = vshrl.u32 2131351028, %v1010
        %v1017 = vor.u32 %v1015, %v1016
        %v1018 = vshll.u32 2131351028, %v1009
        %v1019 = vshrl.u32 2102212464, %v1010
        %v1020 = vor.u32 %v1018, %v1019
        %v1021 = vshll.u32 2102212464, %v1009
        %v1022 = vshrl.u32 920167782, %v1010
        %v1023 = vor.u32 %v1021, %v1022
        %v1024 = vshll.u32 920167782, %v1009
        %v1025 = vshrl.u32 1326507024, %v1010
        %v1026 = vor.u32 %v1024, %v1025
        %vm1027 = vcmp.lt.s32.totalorder %v1008, 1
        %vm1028 = vcmp.lt.s32.totalorder %v1008, 2
        %vm1029 = vcmp.lt.s32.totalorder %v1008, 3
        %vm1030 = vcmp.lt.s32.totalorder %v1008, 4
        %v1031 = vsel %vm1027, %v1011, %v1014
        %v1032 = vsel %vm1030, %v1020, 2102212464
        %v1033 = vsel %vm1029, %v1017, %v1032
        %v1034 = vsel %vm1028, %v1031, %v1033
        %v1035 = vsel %vm1027, %v1014, %v1017
        %v1036 = vsel %vm1030, %v1023, 920167782
        %v1037 = vsel %vm1029, %v1020, %v1036
        %v1038 = vsel %vm1028, %v1035, %v1037
        %v1039 = vsel %vm1027, %v1017, %v1020
        %v1040 = vsel %vm1030, %v1026, 1326507024
        %v1041 = vsel %vm1029, %v1023, %v1040
        %v1042 = vsel %vm1028, %v1039, %v1041
        %v1043 = vshll.u32 %v1003, 8
        %v1044 = vmul.u32.u64.compose %v1043, %v1042
        %v1045 = vextract.low.u32 %v1044
        %v1046 = vextract.high.u32 %v1044
        %v1047 = vmul.u32.u64.compose %v1043, %v1038
        %v1048 = vextract.low.u32 %v1047
        %v1049 = vextract.high.u32 %v1047
        %v1050 = vmul.u32 %v1043, %v1034
        %v1051 = vadd.s32 %v1046, %v1048
        %vm1052 = vc.u32 %v1046, %v1048
        %v1053 = vadd.s32 %v1049, 1
        %v1054 = vsel %vm1052, %v1053, %v1049
        %v1055 = vadd.s32 %v1050, %v1054
        %v1056 = vadd.s32 %v1055, 536870912
        %v1057 = vshrl.u32 %v1056, 30
        %v1058 = vshll.u32 %v1057, 30
        %v1059 = vsub.s32 %v1055, %v1058
        %vm1060 = vcmp.lt.s32.totalorder %v1059, 0
        %v1061 = vsub.s32 0, %v1059
        %v1062 = vsel %vm1060, %v1061, %v1059
        %v1063 = vclz %v1062
        %v1064 = vsub.s32 %v1063, 2
        %vm1065 = vcmp.gt.s32.totalorder 0, %v1064
        %v1066 = vsel %vm1065, 0, %v1064
        %v1067 = vsub.s32 32, %v1066
        %v1068 = vshll.u32 %v1059, %v1066
        %v1069 = vshrl.u32 %v1051, %v1067
        %v1070 = vor.u32 %v1068, %v1069
        %v1071 = vsub.s32 4294967266, %v1066
        %v1072 = vadd.s32 %v1071, 127
        %v1073 = vshll.u32 %v1072, 23
        %v1074 = vor.u32 4788187, %v1073
        %v1075 = vand.u32 2147483647, %v1074
        %v1077 = vcvt.s32.f32 %v1070
        %v1078 = vmul.f32 %v1077, %v1075
        %v1079 = vxor.u32 %v1078, 2147483648
        %v1080 = vsel %vm997, %v1079, %v1078
        %v1081 = vsub.s32 4, %v1057
        %v1082 = vsel %vm997, %v1081, %v1057
        %v1083 = vsel %vm996, %v360, %v1080
        %v1084 = vsel %vm996, 0, %v1082
        %v1085 = vcosq.f32.pop %v1083
        %v1086 = vsinq.f32.pop %v1083
        %vm1087 = vweird.f32 %v360
        %v1088 = vadd.s32 %v1084, 3
        %v1089 = vand.u32 %v1088, 3
        %vm1090 = vcmp.lt.s32.totalorder %v1089, 2
        %vm1091 = vcmp.eq.s32.totalorder %v1089, 0
        %v1092 = vxor.u32 %v1086, 2147483648
        %v1093 = vsel %vm1091, %v1085, %v1092
        %vm1094 = vcmp.eq.s32.totalorder %v1089, 2
        %v1095 = vxor.u32 %v1085, 2147483648
        %v1096 = vsel %vm1094, %v1095, %v1086
        %v1097 = vsel %vm1090, %v1093, %v1096
        %v1098 = vsel %vm1087, nan, %v1097
        %v1099 = vand.u32 2147483647, %v453
        %vm1100 = vcmp.le.f32.partialorder %v1099, 0.7853982
        %vm1101 = vcmp.lt.s32.totalorder %v453, 0
        %v1102 = vand.u32 %v453, 2139095040
        %v1103 = vshrl.u32 %v1102, 23
        %v1104 = vsub.s32 %v1103, 127
        %v1105 = vand.u32 2147483647, %v453
        %v1106 = vand.u32 %v1105, 8388607
        %v1107 = vor.u32 %v1106, 8388608
        %v1108 = vsub.s32 0, %v1107
        %v1109 = vadd.s32 %v1104, 1
        %vm1110 = vcmp.gt.s32.totalorder %v1109, 0
        %v1111 = vsel %vm1110, %v1109, 0
        %v1112 = vshrl.u32 %v1111, 5
        %v1113 = vand.u32 %v1111, 31
        %v1114 = vsub.s32 32, %v1113
        %v1115 = vshrl.u32 683565275, %v1114
        %v1116 = vshll.u32 683565275, %v1113
        %v1117 = vshrl.u32 2475754826, %v1114
        %v1118 = vor.u32 %v1116, %v1117
        %v1119 = vshll.u32 2475754826, %v1113
        %v1120 = vshrl.u32 2131351028, %v1114
        %v1121 = vor.u32 %v1119, %v1120
        %v1122 = vshll.u32 2131351028, %v1113
        %v1123 = vshrl.u32 2102212464, %v1114
        %v1124 = vor.u32 %v1122, %v1123
        %v1125 = vshll.u32 2102212464, %v1113
        %v1126 = vshrl.u32 920167782, %v1114
        %v1127 = vor.u32 %v1125, %v1126
        %v1128 = vshll.u32 920167782, %v1113
        %v1129 = vshrl.u32 1326507024, %v1114
        %v1130 = vor.u32 %v1128, %v1129
        %vm1131 = vcmp.lt.s32.totalorder %v1112, 1
        %vm1132 = vcmp.lt.s32.totalorder %v1112, 2
        %vm1133 = vcmp.lt.s32.totalorder %v1112, 3
        %vm1134 = vcmp.lt.s32.totalorder %v1112, 4
        %v1135 = vsel %vm1131, %v1115, %v1118
        %v1136 = vsel %vm1134, %v1124, 2102212464
        %v1137 = vsel %vm1133, %v1121, %v1136
        %v1138 = vsel %vm1132, %v1135, %v1137
        %v1139 = vsel %vm1131, %v1118, %v1121
        %v1140 = vsel %vm1134, %v1127, 920167782
        %v1141 = vsel %vm1133, %v1124, %v1140
        %v1142 = vsel %vm1132, %v1139, %v1141
        %v1143 = vsel %vm1131, %v1121, %v1124
        %v1144 = vsel %vm1134, %v1130, 1326507024
        %v1145 = vsel %vm1133, %v1127, %v1144
        %v1146 = vsel %vm1132, %v1143, %v1145
        %v1147 = vshll.u32 %v1107, 8
        %v1148 = vmul.u32.u64.compose %v1147, %v1146
        %v1149 = vextract.low.u32 %v1148
        %v1150 = vextract.high.u32 %v1148
        %v1151 = vmul.u32.u64.compose %v1147, %v1142
        %v1152 = vextract.low.u32 %v1151
        %v1153 = vextract.high.u32 %v1151
        %v1154 = vmul.u32 %v1147, %v1138
        %v1155 = vadd.s32 %v1150, %v1152
        %vm1156 = vc.u32 %v1150, %v1152
        %v1157 = vadd.s32 %v1153, 1
        %v1158 = vsel %vm1156, %v1157, %v1153
        %v1159 = vadd.s32 %v1154, %v1158
        %v1160 = vadd.s32 %v1159, 536870912
        %v1161 = vshrl.u32 %v1160, 30
        %v1162 = vshll.u32 %v1161, 30
        %v1163 = vsub.s32 %v1159, %v1162
        %vm1164 = vcmp.lt.s32.totalorder %v1163, 0
        %v1165 = vsub.s32 0, %v1163
        %v1166 = vsel %vm1164, %v1165, %v1163
        %v1167 = vclz %v1166
        %v1168 = vsub.s32 %v1167, 2
        %vm1169 = vcmp.gt.s32.totalorder 0, %v1168
        %v1170 = vsel %vm1169, 0, %v1168
        %v1171 = vsub.s32 32, %v1170
        %v1172 = vshll.u32 %v1163, %v1170
        %v1173 = vshrl.u32 %v1155, %v1171
        %v1174 = vor.u32 %v1172, %v1173
        %v1175 = vsub.s32 4294967266, %v1170
        %v1176 = vadd.s32 %v1175, 127
        %v1177 = vshll.u32 %v1176, 23
        %v1178 = vor.u32 4788187, %v1177
        %v1179 = vand.u32 2147483647, %v1178
        %v1181 = vcvt.s32.f32 %v1174
        %v1182 = vmul.f32 %v1181, %v1179
        %v1183 = vxor.u32 %v1182, 2147483648
        %v1184 = vsel %vm1101, %v1183, %v1182
        %v1185 = vsub.s32 4, %v1161
        %v1186 = vsel %vm1101, %v1185, %v1161
        %v1187 = vsel %vm1100, %v453, %v1184
        %v1188 = vsel %vm1100, 0, %v1186
        %v1189 = vcosq.f32.pop %v1187
        %v1190 = vsinq.f32.pop %v1187
        %vm1191 = vweird.f32 %v453
        %v1192 = vadd.s32 %v1188, 3
        %v1193 = vand.u32 %v1192, 3
        %vm1194 = vcmp.lt.s32.totalorder %v1193, 2
        %vm1195 = vcmp.eq.s32.totalorder %v1193, 0
        %v1196 = vxor.u32 %v1190, 2147483648
        %v1197 = vsel %vm1195, %v1189, %v1196
        %vm1198 = vcmp.eq.s32.totalorder %v1193, 2
        %v1199 = vxor.u32 %v1189, 2147483648
        %v1200 = vsel %vm1198, %v1199, %v1190
        %v1201 = vsel %vm1194, %v1197, %v1200
        %v1202 = vsel %vm1191, nan, %v1201
        %v1203 = vand.u32 2147483647, %v455
        %vm1204 = vcmp.le.f32.partialorder %v1203, 0.7853982
        %vm1205 = vcmp.lt.s32.totalorder %v455, 0
        %v1206 = vand.u32 %v455, 2139095040
        %v1207 = vshrl.u32 %v1206, 23
        %v1208 = vsub.s32 %v1207, 127
        %v1209 = vand.u32 2147483647, %v455
        %v1210 = vand.u32 %v1209, 8388607
        %v1211 = vor.u32 %v1210, 8388608
        %v1212 = vsub.s32 0, %v1211
        %v1213 = vadd.s32 %v1208, 1
        %vm1214 = vcmp.gt.s32.totalorder %v1213, 0
        %v1215 = vsel %vm1214, %v1213, 0
        %v1216 = vshrl.u32 %v1215, 5
        %v1217 = vand.u32 %v1215, 31
        %v1218 = vsub.s32 32, %v1217
        %v1219 = vshrl.u32 683565275, %v1218
        %v1220 = vshll.u32 683565275, %v1217
        %v1221 = vshrl.u32 2475754826, %v1218
        %v1222 = vor.u32 %v1220, %v1221
        %v1223 = vshll.u32 2475754826, %v1217
        %v1224 = vshrl.u32 2131351028, %v1218
        %v1225 = vor.u32 %v1223, %v1224
        %v1226 = vshll.u32 2131351028, %v1217
        %v1227 = vshrl.u32 2102212464, %v1218
        %v1228 = vor.u32 %v1226, %v1227
        %v1229 = vshll.u32 2102212464, %v1217
        %v1230 = vshrl.u32 920167782, %v1218
        %v1231 = vor.u32 %v1229, %v1230
        %v1232 = vshll.u32 920167782, %v1217
        %v1233 = vshrl.u32 1326507024, %v1218
        %v1234 = vor.u32 %v1232, %v1233
        %vm1235 = vcmp.lt.s32.totalorder %v1216, 1
        %vm1236 = vcmp.lt.s32.totalorder %v1216, 2
        %vm1237 = vcmp.lt.s32.totalorder %v1216, 3
        %vm1238 = vcmp.lt.s32.totalorder %v1216, 4
        %v1239 = vsel %vm1235, %v1219, %v1222
        %v1240 = vsel %vm1238, %v1228, 2102212464
        %v1241 = vsel %vm1237, %v1225, %v1240
        %v1242 = vsel %vm1236, %v1239, %v1241
        %v1243 = vsel %vm1235, %v1222, %v1225
        %v1244 = vsel %vm1238, %v1231, 920167782
        %v1245 = vsel %vm1237, %v1228, %v1244
        %v1246 = vsel %vm1236, %v1243, %v1245
        %v1247 = vsel %vm1235, %v1225, %v1228
        %v1248 = vsel %vm1238, %v1234, 1326507024
        %v1249 = vsel %vm1237, %v1231, %v1248
        %v1250 = vsel %vm1236, %v1247, %v1249
        %v1251 = vshll.u32 %v1211, 8
        %v1252 = vmul.u32.u64.compose %v1251, %v1250
        %v1253 = vextract.low.u32 %v1252
        %v1254 = vextract.high.u32 %v1252
        %v1255 = vmul.u32.u64.compose %v1251, %v1246
        %v1256 = vextract.low.u32 %v1255
        %v1257 = vextract.high.u32 %v1255
        %v1258 = vmul.u32 %v1251, %v1242
        %v1259 = vadd.s32 %v1254, %v1256
        %vm1260 = vc.u32 %v1254, %v1256
        %v1261 = vadd.s32 %v1257, 1
        %v1262 = vsel %vm1260, %v1261, %v1257
        %v1263 = vadd.s32 %v1258, %v1262
        %v1264 = vadd.s32 %v1263, 536870912
        %v1265 = vshrl.u32 %v1264, 30
        %v1266 = vshll.u32 %v1265, 30
        %v1267 = vsub.s32 %v1263, %v1266
        %vm1268 = vcmp.lt.s32.totalorder %v1267, 0
        %v1269 = vsub.s32 0, %v1267
        %v1270 = vsel %vm1268, %v1269, %v1267
        %v1271 = vclz %v1270
        %v1272 = vsub.s32 %v1271, 2
        %vm1273 = vcmp.gt.s32.totalorder 0, %v1272
        %v1274 = vsel %vm1273, 0, %v1272
        %v1275 = vsub.s32 32, %v1274
        %v1276 = vshll.u32 %v1267, %v1274
        %v1277 = vshrl.u32 %v1259, %v1275
        %v1278 = vor.u32 %v1276, %v1277
        %v1279 = vsub.s32 4294967266, %v1274
        %v1280 = vadd.s32 %v1279, 127
        %v1281 = vshll.u32 %v1280, 23
        %v1282 = vor.u32 4788187, %v1281
        %v1283 = vand.u32 2147483647, %v1282
        %v1285 = vcvt.s32.f32 %v1278
        %v1286 = vmul.f32 %v1285, %v1283
        %v1287 = vxor.u32 %v1286, 2147483648
        %v1288 = vsel %vm1205, %v1287, %v1286
        %v1289 = vsub.s32 4, %v1265
        %v1290 = vsel %vm1205, %v1289, %v1265
        %v1291 = vsel %vm1204, %v455, %v1288
        %v1292 = vsel %vm1204, 0, %v1290
        %v1293 = vcosq.f32.pop %v1291
        %v1294 = vsinq.f32.pop %v1291
        %vm1295 = vweird.f32 %v455
        %v1296 = vadd.s32 %v1292, 3
        %v1297 = vand.u32 %v1296, 3
        %vm1298 = vcmp.lt.s32.totalorder %v1297, 2
        %vm1299 = vcmp.eq.s32.totalorder %v1297, 0
        %v1300 = vxor.u32 %v1294, 2147483648
        %v1301 = vsel %vm1299, %v1293, %v1300
        %vm1302 = vcmp.eq.s32.totalorder %v1297, 2
        %v1303 = vxor.u32 %v1293, 2147483648
        %v1304 = vsel %vm1302, %v1303, %v1294
        %v1305 = vsel %vm1298, %v1301, %v1304
        %v1306 = vsel %vm1295, nan, %v1305
        %v1307 = vand.u32 2147483647, %v364
        %vm1308 = vcmp.le.f32.partialorder %v1307, 0.7853982
        %vm1309 = vcmp.lt.s32.totalorder %v364, 0
        %v1310 = vand.u32 %v364, 2139095040
        %v1311 = vshrl.u32 %v1310, 23
        %v1312 = vsub.s32 %v1311, 127
        %v1313 = vand.u32 2147483647, %v364
        %v1314 = vand.u32 %v1313, 8388607
        %v1315 = vor.u32 %v1314, 8388608
        %v1316 = vsub.s32 0, %v1315
        %v1317 = vadd.s32 %v1312, 1
        %vm1318 = vcmp.gt.s32.totalorder %v1317, 0
        %v1319 = vsel %vm1318, %v1317, 0
        %v1320 = vshrl.u32 %v1319, 5
        %v1321 = vand.u32 %v1319, 31
        %v1322 = vsub.s32 32, %v1321
        %v1323 = vshrl.u32 683565275, %v1322
        %v1324 = vshll.u32 683565275, %v1321
        %v1325 = vshrl.u32 2475754826, %v1322
        %v1326 = vor.u32 %v1324, %v1325
        %v1327 = vshll.u32 2475754826, %v1321
        %v1328 = vshrl.u32 2131351028, %v1322
        %v1329 = vor.u32 %v1327, %v1328
        %v1330 = vshll.u32 2131351028, %v1321
        %v1331 = vshrl.u32 2102212464, %v1322
        %v1332 = vor.u32 %v1330, %v1331
        %v1333 = vshll.u32 2102212464, %v1321
        %v1334 = vshrl.u32 920167782, %v1322
        %v1335 = vor.u32 %v1333, %v1334
        %v1336 = vshll.u32 920167782, %v1321
        %v1337 = vshrl.u32 1326507024, %v1322
        %v1338 = vor.u32 %v1336, %v1337
        %vm1339 = vcmp.lt.s32.totalorder %v1320, 1
        %vm1340 = vcmp.lt.s32.totalorder %v1320, 2
        %vm1341 = vcmp.lt.s32.totalorder %v1320, 3
        %vm1342 = vcmp.lt.s32.totalorder %v1320, 4
        %v1343 = vsel %vm1339, %v1323, %v1326
        %v1344 = vsel %vm1342, %v1332, 2102212464
        %v1345 = vsel %vm1341, %v1329, %v1344
        %v1346 = vsel %vm1340, %v1343, %v1345
        %v1347 = vsel %vm1339, %v1326, %v1329
        %v1348 = vsel %vm1342, %v1335, 920167782
        %v1349 = vsel %vm1341, %v1332, %v1348
        %v1350 = vsel %vm1340, %v1347, %v1349
        %v1351 = vsel %vm1339, %v1329, %v1332
        %v1352 = vsel %vm1342, %v1338, 1326507024
        %v1353 = vsel %vm1341, %v1335, %v1352
        %v1354 = vsel %vm1340, %v1351, %v1353
        %v1355 = vshll.u32 %v1315, 8
        %v1356 = vmul.u32.u64.compose %v1355, %v1354
        %v1357 = vextract.low.u32 %v1356
        %v1358 = vextract.high.u32 %v1356
        %v1359 = vmul.u32.u64.compose %v1355, %v1350
        %v1360 = vextract.low.u32 %v1359
        %v1361 = vextract.high.u32 %v1359
        %v1362 = vmul.u32 %v1355, %v1346
        %v1363 = vadd.s32 %v1358, %v1360
        %vm1364 = vc.u32 %v1358, %v1360
        %v1365 = vadd.s32 %v1361, 1
        %v1366 = vsel %vm1364, %v1365, %v1361
        %v1367 = vadd.s32 %v1362, %v1366
        %v1368 = vadd.s32 %v1367, 536870912
        %v1369 = vshrl.u32 %v1368, 30
        %v1370 = vshll.u32 %v1369, 30
        %v1371 = vsub.s32 %v1367, %v1370
        %vm1372 = vcmp.lt.s32.totalorder %v1371, 0
        %v1373 = vsub.s32 0, %v1371
        %v1374 = vsel %vm1372, %v1373, %v1371
        %v1375 = vclz %v1374
        %v1376 = vsub.s32 %v1375, 2
        %vm1377 = vcmp.gt.s32.totalorder 0, %v1376
        %v1378 = vsel %vm1377, 0, %v1376
        %v1379 = vsub.s32 32, %v1378
        %v1380 = vshll.u32 %v1371, %v1378
        %v1381 = vshrl.u32 %v1363, %v1379
        %v1382 = vor.u32 %v1380, %v1381
        %v1383 = vsub.s32 4294967266, %v1378
        %v1384 = vadd.s32 %v1383, 127
        %v1385 = vshll.u32 %v1384, 23
        %v1386 = vor.u32 4788187, %v1385
        %v1387 = vand.u32 2147483647, %v1386
        %v1389 = vcvt.s32.f32 %v1382
        %v1390 = vmul.f32 %v1389, %v1387
        %v1391 = vxor.u32 %v1390, 2147483648
        %v1392 = vsel %vm1309, %v1391, %v1390
        %v1393 = vsub.s32 4, %v1369
        %v1394 = vsel %vm1309, %v1393, %v1369
        %v1395 = vsel %vm1308, %v364, %v1392
        %v1396 = vsel %vm1308, 0, %v1394
        %v1397 = vcosq.f32.pop %v1395
        %v1398 = vsinq.f32.pop %v1395
        %vm1399 = vweird.f32 %v364
        %v1400 = vadd.s32 %v1396, 3
        %v1401 = vand.u32 %v1400, 3
        %vm1402 = vcmp.lt.s32.totalorder %v1401, 2
        %vm1403 = vcmp.eq.s32.totalorder %v1401, 0
        %v1404 = vxor.u32 %v1398, 2147483648
        %v1405 = vsel %vm1403, %v1397, %v1404
        %vm1406 = vcmp.eq.s32.totalorder %v1401, 2
        %v1407 = vxor.u32 %v1397, 2147483648
        %v1408 = vsel %vm1406, %v1407, %v1398
        %v1409 = vsel %vm1402, %v1405, %v1408
        %v1410 = vsel %vm1399, nan, %v1409
        %v1411 = vand.u32 2147483647, %v366
        %vm1412 = vcmp.le.f32.partialorder %v1411, 0.7853982
        %vm1413 = vcmp.lt.s32.totalorder %v366, 0
        %v1414 = vand.u32 %v366, 2139095040
        %v1415 = vshrl.u32 %v1414, 23
        %v1416 = vsub.s32 %v1415, 127
        %v1417 = vand.u32 2147483647, %v366
        %v1418 = vand.u32 %v1417, 8388607
        %v1419 = vor.u32 %v1418, 8388608
        %v1420 = vsub.s32 0, %v1419
        %v1421 = vadd.s32 %v1416, 1
        %vm1422 = vcmp.gt.s32.totalorder %v1421, 0
        %v1423 = vsel %vm1422, %v1421, 0
        %v1424 = vshrl.u32 %v1423, 5
        %v1425 = vand.u32 %v1423, 31
        %v1426 = vsub.s32 32, %v1425
        %v1427 = vshrl.u32 683565275, %v1426
        %v1428 = vshll.u32 683565275, %v1425
        %v1429 = vshrl.u32 2475754826, %v1426
        %v1430 = vor.u32 %v1428, %v1429
        %v1431 = vshll.u32 2475754826, %v1425
        %v1432 = vshrl.u32 2131351028, %v1426
        %v1433 = vor.u32 %v1431, %v1432
        %v1434 = vshll.u32 2131351028, %v1425
        %v1435 = vshrl.u32 2102212464, %v1426
        %v1436 = vor.u32 %v1434, %v1435
        %v1437 = vshll.u32 2102212464, %v1425
        %v1438 = vshrl.u32 920167782, %v1426
        %v1439 = vor.u32 %v1437, %v1438
        %v1440 = vshll.u32 920167782, %v1425
        %v1441 = vshrl.u32 1326507024, %v1426
        %v1442 = vor.u32 %v1440, %v1441
        %vm1443 = vcmp.lt.s32.totalorder %v1424, 1
        %vm1444 = vcmp.lt.s32.totalorder %v1424, 2
        %vm1445 = vcmp.lt.s32.totalorder %v1424, 3
        %vm1446 = vcmp.lt.s32.totalorder %v1424, 4
        %v1447 = vsel %vm1443, %v1427, %v1430
        %v1448 = vsel %vm1446, %v1436, 2102212464
        %v1449 = vsel %vm1445, %v1433, %v1448
        %v1450 = vsel %vm1444, %v1447, %v1449
        %v1451 = vsel %vm1443, %v1430, %v1433
        %v1452 = vsel %vm1446, %v1439, 920167782
        %v1453 = vsel %vm1445, %v1436, %v1452
        %v1454 = vsel %vm1444, %v1451, %v1453
        %v1455 = vsel %vm1443, %v1433, %v1436
        %v1456 = vsel %vm1446, %v1442, 1326507024
        %v1457 = vsel %vm1445, %v1439, %v1456
        %v1458 = vsel %vm1444, %v1455, %v1457
        %v1459 = vshll.u32 %v1419, 8
        %v1460 = vmul.u32.u64.compose %v1459, %v1458
        %v1461 = vextract.low.u32 %v1460
        %v1462 = vextract.high.u32 %v1460
        %v1463 = vmul.u32.u64.compose %v1459, %v1454
        %v1464 = vextract.low.u32 %v1463
        %v1465 = vextract.high.u32 %v1463
        %v1466 = vmul.u32 %v1459, %v1450
        %v1467 = vadd.s32 %v1462, %v1464
        %vm1468 = vc.u32 %v1462, %v1464
        %v1469 = vadd.s32 %v1465, 1
        %v1470 = vsel %vm1468, %v1469, %v1465
        %v1471 = vadd.s32 %v1466, %v1470
        %v1472 = vadd.s32 %v1471, 536870912
        %v1473 = vshrl.u32 %v1472, 30
        %v1474 = vshll.u32 %v1473, 30
        %v1475 = vsub.s32 %v1471, %v1474
        %vm1476 = vcmp.lt.s32.totalorder %v1475, 0
        %v1477 = vsub.s32 0, %v1475
        %v1478 = vsel %vm1476, %v1477, %v1475
        %v1479 = vclz %v1478
        %v1480 = vsub.s32 %v1479, 2
        %vm1481 = vcmp.gt.s32.totalorder 0, %v1480
        %v1482 = vsel %vm1481, 0, %v1480
        %v1483 = vsub.s32 32, %v1482
        %v1484 = vshll.u32 %v1475, %v1482
        %v1485 = vshrl.u32 %v1467, %v1483
        %v1486 = vor.u32 %v1484, %v1485
        %v1487 = vsub.s32 4294967266, %v1482
        %v1488 = vadd.s32 %v1487, 127
        %v1489 = vshll.u32 %v1488, 23
        %v1490 = vor.u32 4788187, %v1489
        %v1491 = vand.u32 2147483647, %v1490
        %v1493 = vcvt.s32.f32 %v1486
        %v1494 = vmul.f32 %v1493, %v1491
        %v1495 = vxor.u32 %v1494, 2147483648
        %v1496 = vsel %vm1413, %v1495, %v1494
        %v1497 = vsub.s32 4, %v1473
        %v1498 = vsel %vm1413, %v1497, %v1473
        %v1499 = vsel %vm1412, %v366, %v1496
        %v1500 = vsel %vm1412, 0, %v1498
        %v1501 = vcosq.f32.pop %v1499
        %v1502 = vsinq.f32.pop %v1499
        %vm1503 = vweird.f32 %v366
        %v1504 = vadd.s32 %v1500, 3
        %v1505 = vand.u32 %v1504, 3
        %vm1506 = vcmp.lt.s32.totalorder %v1505, 2
        %vm1507 = vcmp.eq.s32.totalorder %v1505, 0
        %v1508 = vxor.u32 %v1502, 2147483648
        %v1509 = vsel %vm1507, %v1501, %v1508
        %vm1510 = vcmp.eq.s32.totalorder %v1505, 2
        %v1511 = vxor.u32 %v1501, 2147483648
        %v1512 = vsel %vm1510, %v1511, %v1502
        %v1513 = vsel %vm1506, %v1509, %v1512
        %v1514 = vsel %vm1503, nan, %v1513
        %v1515 = vand.u32 2147483647, %v459
        %vm1516 = vcmp.le.f32.partialorder %v1515, 0.7853982
        %vm1517 = vcmp.lt.s32.totalorder %v459, 0
        %v1518 = vand.u32 %v459, 2139095040
        %v1519 = vshrl.u32 %v1518, 23
        %v1520 = vsub.s32 %v1519, 127
        %v1521 = vand.u32 2147483647, %v459
        %v1522 = vand.u32 %v1521, 8388607
        %v1523 = vor.u32 %v1522, 8388608
        %v1524 = vsub.s32 0, %v1523
        %v1525 = vadd.s32 %v1520, 1
        %vm1526 = vcmp.gt.s32.totalorder %v1525, 0
        %v1527 = vsel %vm1526, %v1525, 0
        %v1528 = vshrl.u32 %v1527, 5
        %v1529 = vand.u32 %v1527, 31
        %v1530 = vsub.s32 32, %v1529
        %v1531 = vshrl.u32 683565275, %v1530
        %v1532 = vshll.u32 683565275, %v1529
        %v1533 = vshrl.u32 2475754826, %v1530
        %v1534 = vor.u32 %v1532, %v1533
        %v1535 = vshll.u32 2475754826, %v1529
        %v1536 = vshrl.u32 2131351028, %v1530
        %v1537 = vor.u32 %v1535, %v1536
        %v1538 = vshll.u32 2131351028, %v1529
        %v1539 = vshrl.u32 2102212464, %v1530
        %v1540 = vor.u32 %v1538, %v1539
        %v1541 = vshll.u32 2102212464, %v1529
        %v1542 = vshrl.u32 920167782, %v1530
        %v1543 = vor.u32 %v1541, %v1542
        %v1544 = vshll.u32 920167782, %v1529
        %v1545 = vshrl.u32 1326507024, %v1530
        %v1546 = vor.u32 %v1544, %v1545
        %vm1547 = vcmp.lt.s32.totalorder %v1528, 1
        %vm1548 = vcmp.lt.s32.totalorder %v1528, 2
        %vm1549 = vcmp.lt.s32.totalorder %v1528, 3
        %vm1550 = vcmp.lt.s32.totalorder %v1528, 4
        %v1551 = vsel %vm1547, %v1531, %v1534
        %v1552 = vsel %vm1550, %v1540, 2102212464
        %v1553 = vsel %vm1549, %v1537, %v1552
        %v1554 = vsel %vm1548, %v1551, %v1553
        %v1555 = vsel %vm1547, %v1534, %v1537
        %v1556 = vsel %vm1550, %v1543, 920167782
        %v1557 = vsel %vm1549, %v1540, %v1556
        %v1558 = vsel %vm1548, %v1555, %v1557
        %v1559 = vsel %vm1547, %v1537, %v1540
        %v1560 = vsel %vm1550, %v1546, 1326507024
        %v1561 = vsel %vm1549, %v1543, %v1560
        %v1562 = vsel %vm1548, %v1559, %v1561
        %v1563 = vshll.u32 %v1523, 8
        %v1564 = vmul.u32.u64.compose %v1563, %v1562
        %v1565 = vextract.low.u32 %v1564
        %v1566 = vextract.high.u32 %v1564
        %v1567 = vmul.u32.u64.compose %v1563, %v1558
        %v1568 = vextract.low.u32 %v1567
        %v1569 = vextract.high.u32 %v1567
        %v1570 = vmul.u32 %v1563, %v1554
        %v1571 = vadd.s32 %v1566, %v1568
        %vm1572 = vc.u32 %v1566, %v1568
        %v1573 = vadd.s32 %v1569, 1
        %v1574 = vsel %vm1572, %v1573, %v1569
        %v1575 = vadd.s32 %v1570, %v1574
        %v1576 = vadd.s32 %v1575, 536870912
        %v1577 = vshrl.u32 %v1576, 30
        %v1578 = vshll.u32 %v1577, 30
        %v1579 = vsub.s32 %v1575, %v1578
        %vm1580 = vcmp.lt.s32.totalorder %v1579, 0
        %v1581 = vsub.s32 0, %v1579
        %v1582 = vsel %vm1580, %v1581, %v1579
        %v1583 = vclz %v1582
        %v1584 = vsub.s32 %v1583, 2
        %vm1585 = vcmp.gt.s32.totalorder 0, %v1584
        %v1586 = vsel %vm1585, 0, %v1584
        %v1587 = vsub.s32 32, %v1586
        %v1588 = vshll.u32 %v1579, %v1586
        %v1589 = vshrl.u32 %v1571, %v1587
        %v1590 = vor.u32 %v1588, %v1589
        %v1591 = vsub.s32 4294967266, %v1586
        %v1592 = vadd.s32 %v1591, 127
        %v1593 = vshll.u32 %v1592, 23
        %v1594 = vor.u32 4788187, %v1593
        %v1595 = vand.u32 2147483647, %v1594
        %v1597 = vcvt.s32.f32 %v1590
        %v1598 = vmul.f32 %v1597, %v1595
        %v1599 = vxor.u32 %v1598, 2147483648
        %v1600 = vsel %vm1517, %v1599, %v1598
        %v1601 = vsub.s32 4, %v1577
        %v1602 = vsel %vm1517, %v1601, %v1577
        %v1603 = vsel %vm1516, %v459, %v1600
        %v1604 = vsel %vm1516, 0, %v1602
        %v1605 = vcosq.f32.pop %v1603
        %v1606 = vsinq.f32.pop %v1603
        %vm1607 = vweird.f32 %v459
        %v1608 = vadd.s32 %v1604, 3
        %v1609 = vand.u32 %v1608, 3
        %vm1610 = vcmp.lt.s32.totalorder %v1609, 2
        %vm1611 = vcmp.eq.s32.totalorder %v1609, 0
        %v1612 = vxor.u32 %v1606, 2147483648
        %v1613 = vsel %vm1611, %v1605, %v1612
        %vm1614 = vcmp.eq.s32.totalorder %v1609, 2
        %v1615 = vxor.u32 %v1605, 2147483648
        %v1616 = vsel %vm1614, %v1615, %v1606
        %v1617 = vsel %vm1610, %v1613, %v1616
        %v1618 = vsel %vm1607, nan, %v1617
        %v1619 = vand.u32 2147483647, %v461
        %vm1620 = vcmp.le.f32.partialorder %v1619, 0.7853982
        %vm1621 = vcmp.lt.s32.totalorder %v461, 0
        %v1622 = vand.u32 %v461, 2139095040
        %v1623 = vshrl.u32 %v1622, 23
        %v1624 = vsub.s32 %v1623, 127
        %v1625 = vand.u32 2147483647, %v461
        %v1626 = vand.u32 %v1625, 8388607
        %v1627 = vor.u32 %v1626, 8388608
        %v1628 = vsub.s32 0, %v1627
        %v1629 = vadd.s32 %v1624, 1
        %vm1630 = vcmp.gt.s32.totalorder %v1629, 0
        %v1631 = vsel %vm1630, %v1629, 0
        %v1632 = vshrl.u32 %v1631, 5
        %v1633 = vand.u32 %v1631, 31
        %v1634 = vsub.s32 32, %v1633
        %v1635 = vshrl.u32 683565275, %v1634
        %v1636 = vshll.u32 683565275, %v1633
        %v1637 = vshrl.u32 2475754826, %v1634
        %v1638 = vor.u32 %v1636, %v1637
        %v1639 = vshll.u32 2475754826, %v1633
        %v1640 = vshrl.u32 2131351028, %v1634
        %v1641 = vor.u32 %v1639, %v1640
        %v1642 = vshll.u32 2131351028, %v1633
        %v1643 = vshrl.u32 2102212464, %v1634
        %v1644 = vor.u32 %v1642, %v1643
        %v1645 = vshll.u32 2102212464, %v1633
        %v1646 = vshrl.u32 920167782, %v1634
        %v1647 = vor.u32 %v1645, %v1646
        %v1648 = vshll.u32 920167782, %v1633
        %v1649 = vshrl.u32 1326507024, %v1634
        %v1650 = vor.u32 %v1648, %v1649
        %vm1651 = vcmp.lt.s32.totalorder %v1632, 1
        %vm1652 = vcmp.lt.s32.totalorder %v1632, 2
        %vm1653 = vcmp.lt.s32.totalorder %v1632, 3
        %vm1654 = vcmp.lt.s32.totalorder %v1632, 4
        %v1655 = vsel %vm1651, %v1635, %v1638
        %v1656 = vsel %vm1654, %v1644, 2102212464
        %v1657 = vsel %vm1653, %v1641, %v1656
        %v1658 = vsel %vm1652, %v1655, %v1657
        %v1659 = vsel %vm1651, %v1638, %v1641
        %v1660 = vsel %vm1654, %v1647, 920167782
        %v1661 = vsel %vm1653, %v1644, %v1660
        %v1662 = vsel %vm1652, %v1659, %v1661
        %v1663 = vsel %vm1651, %v1641, %v1644
        %v1664 = vsel %vm1654, %v1650, 1326507024
        %v1665 = vsel %vm1653, %v1647, %v1664
        %v1666 = vsel %vm1652, %v1663, %v1665
        %v1667 = vshll.u32 %v1627, 8
        %v1668 = vmul.u32.u64.compose %v1667, %v1666
        %v1669 = vextract.low.u32 %v1668
        %v1670 = vextract.high.u32 %v1668
        %v1671 = vmul.u32.u64.compose %v1667, %v1662
        %v1672 = vextract.low.u32 %v1671
        %v1673 = vextract.high.u32 %v1671
        %v1674 = vmul.u32 %v1667, %v1658
        %v1675 = vadd.s32 %v1670, %v1672
        %vm1676 = vc.u32 %v1670, %v1672
        %v1677 = vadd.s32 %v1673, 1
        %v1678 = vsel %vm1676, %v1677, %v1673
        %v1679 = vadd.s32 %v1674, %v1678
        %v1680 = vadd.s32 %v1679, 536870912
        %v1681 = vshrl.u32 %v1680, 30
        %v1682 = vshll.u32 %v1681, 30
        %v1683 = vsub.s32 %v1679, %v1682
        %vm1684 = vcmp.lt.s32.totalorder %v1683, 0
        %v1685 = vsub.s32 0, %v1683
        %v1686 = vsel %vm1684, %v1685, %v1683
        %v1687 = vclz %v1686
        %v1688 = vsub.s32 %v1687, 2
        %vm1689 = vcmp.gt.s32.totalorder 0, %v1688
        %v1690 = vsel %vm1689, 0, %v1688
        %v1691 = vsub.s32 32, %v1690
        %v1692 = vshll.u32 %v1683, %v1690
        %v1693 = vshrl.u32 %v1675, %v1691
        %v1694 = vor.u32 %v1692, %v1693
        %v1695 = vsub.s32 4294967266, %v1690
        %v1696 = vadd.s32 %v1695, 127
        %v1697 = vshll.u32 %v1696, 23
        %v1698 = vor.u32 4788187, %v1697
        %v1699 = vand.u32 2147483647, %v1698
        %v1701 = vcvt.s32.f32 %v1694
        %v1702 = vmul.f32 %v1701, %v1699
        %v1703 = vxor.u32 %v1702, 2147483648
        %v1704 = vsel %vm1621, %v1703, %v1702
        %v1705 = vsub.s32 4, %v1681
        %v1706 = vsel %vm1621, %v1705, %v1681
        %v1707 = vsel %vm1620, %v461, %v1704
        %v1708 = vsel %vm1620, 0, %v1706
        %v1709 = vcosq.f32.pop %v1707
        %v1710 = vsinq.f32.pop %v1707
        %vm1711 = vweird.f32 %v461
        %v1712 = vadd.s32 %v1708, 3
        %v1713 = vand.u32 %v1712, 3
        %vm1714 = vcmp.lt.s32.totalorder %v1713, 2
        %vm1715 = vcmp.eq.s32.totalorder %v1713, 0
        %v1716 = vxor.u32 %v1710, 2147483648
        %v1717 = vsel %vm1715, %v1709, %v1716
        %vm1718 = vcmp.eq.s32.totalorder %v1713, 2
        %v1719 = vxor.u32 %v1709, 2147483648
        %v1720 = vsel %vm1718, %v1719, %v1710
        %v1721 = vsel %vm1714, %v1717, %v1720
        %v1722 = vsel %vm1711, nan, %v1721
        %v1723 = vand.u32 2147483647, %v370
        %vm1724 = vcmp.le.f32.partialorder %v1723, 0.7853982
        %vm1725 = vcmp.lt.s32.totalorder %v370, 0
        %v1726 = vand.u32 %v370, 2139095040
        %v1727 = vshrl.u32 %v1726, 23
        %v1728 = vsub.s32 %v1727, 127
        %v1729 = vand.u32 2147483647, %v370
        %v1730 = vand.u32 %v1729, 8388607
        %v1731 = vor.u32 %v1730, 8388608
        %v1732 = vsub.s32 0, %v1731
        %v1733 = vadd.s32 %v1728, 1
        %vm1734 = vcmp.gt.s32.totalorder %v1733, 0
        %v1735 = vsel %vm1734, %v1733, 0
        %v1736 = vshrl.u32 %v1735, 5
        %v1737 = vand.u32 %v1735, 31
        %v1738 = vsub.s32 32, %v1737
        %v1739 = vshrl.u32 683565275, %v1738
        %v1740 = vshll.u32 683565275, %v1737
        %v1741 = vshrl.u32 2475754826, %v1738
        %v1742 = vor.u32 %v1740, %v1741
        %v1743 = vshll.u32 2475754826, %v1737
        %v1744 = vshrl.u32 2131351028, %v1738
        %v1745 = vor.u32 %v1743, %v1744
        %v1746 = vshll.u32 2131351028, %v1737
        %v1747 = vshrl.u32 2102212464, %v1738
        %v1748 = vor.u32 %v1746, %v1747
        %v1749 = vshll.u32 2102212464, %v1737
        %v1750 = vshrl.u32 920167782, %v1738
        %v1751 = vor.u32 %v1749, %v1750
        %v1752 = vshll.u32 920167782, %v1737
        %v1753 = vshrl.u32 1326507024, %v1738
        %v1754 = vor.u32 %v1752, %v1753
        %vm1755 = vcmp.lt.s32.totalorder %v1736, 1
        %vm1756 = vcmp.lt.s32.totalorder %v1736, 2
        %vm1757 = vcmp.lt.s32.totalorder %v1736, 3
        %vm1758 = vcmp.lt.s32.totalorder %v1736, 4
        %v1759 = vsel %vm1755, %v1739, %v1742
        %v1760 = vsel %vm1758, %v1748, 2102212464
        %v1761 = vsel %vm1757, %v1745, %v1760
        %v1762 = vsel %vm1756, %v1759, %v1761
        %v1763 = vsel %vm1755, %v1742, %v1745
        %v1764 = vsel %vm1758, %v1751, 920167782
        %v1765 = vsel %vm1757, %v1748, %v1764
        %v1766 = vsel %vm1756, %v1763, %v1765
        %v1767 = vsel %vm1755, %v1745, %v1748
        %v1768 = vsel %vm1758, %v1754, 1326507024
        %v1769 = vsel %vm1757, %v1751, %v1768
        %v1770 = vsel %vm1756, %v1767, %v1769
        %v1771 = vshll.u32 %v1731, 8
        %v1772 = vmul.u32.u64.compose %v1771, %v1770
        %v1773 = vextract.low.u32 %v1772
        %v1774 = vextract.high.u32 %v1772
        %v1775 = vmul.u32.u64.compose %v1771, %v1766
        %v1776 = vextract.low.u32 %v1775
        %v1777 = vextract.high.u32 %v1775
        %v1778 = vmul.u32 %v1771, %v1762
        %v1779 = vadd.s32 %v1774, %v1776
        %vm1780 = vc.u32 %v1774, %v1776
        %v1781 = vadd.s32 %v1777, 1
        %v1782 = vsel %vm1780, %v1781, %v1777
        %v1783 = vadd.s32 %v1778, %v1782
        %v1784 = vadd.s32 %v1783, 536870912
        %v1785 = vshrl.u32 %v1784, 30
        %v1786 = vshll.u32 %v1785, 30
        %v1787 = vsub.s32 %v1783, %v1786
        %vm1788 = vcmp.lt.s32.totalorder %v1787, 0
        %v1789 = vsub.s32 0, %v1787
        %v1790 = vsel %vm1788, %v1789, %v1787
        %v1791 = vclz %v1790
        %v1792 = vsub.s32 %v1791, 2
        %vm1793 = vcmp.gt.s32.totalorder 0, %v1792
        %v1794 = vsel %vm1793, 0, %v1792
        %v1795 = vsub.s32 32, %v1794
        %v1796 = vshll.u32 %v1787, %v1794
        %v1797 = vshrl.u32 %v1779, %v1795
        %v1798 = vor.u32 %v1796, %v1797
        %v1799 = vsub.s32 4294967266, %v1794
        %v1800 = vadd.s32 %v1799, 127
        %v1801 = vshll.u32 %v1800, 23
        %v1802 = vor.u32 4788187, %v1801
        %v1803 = vand.u32 2147483647, %v1802
        %v1805 = vcvt.s32.f32 %v1798
        %v1806 = vmul.f32 %v1805, %v1803
        %v1807 = vxor.u32 %v1806, 2147483648
        %v1808 = vsel %vm1725, %v1807, %v1806
        %v1809 = vsub.s32 4, %v1785
        %v1810 = vsel %vm1725, %v1809, %v1785
        %v1811 = vsel %vm1724, %v370, %v1808
        %v1812 = vsel %vm1724, 0, %v1810
        %v1813 = vcosq.f32.pop %v1811
        %v1814 = vsinq.f32.pop %v1811
        %vm1815 = vweird.f32 %v370
        %v1816 = vadd.s32 %v1812, 3
        %v1817 = vand.u32 %v1816, 3
        %vm1818 = vcmp.lt.s32.totalorder %v1817, 2
        %vm1819 = vcmp.eq.s32.totalorder %v1817, 0
        %v1820 = vxor.u32 %v1814, 2147483648
        %v1821 = vsel %vm1819, %v1813, %v1820
        %vm1822 = vcmp.eq.s32.totalorder %v1817, 2
        %v1823 = vxor.u32 %v1813, 2147483648
        %v1824 = vsel %vm1822, %v1823, %v1814
        %v1825 = vsel %vm1818, %v1821, %v1824
        %v1826 = vsel %vm1815, nan, %v1825
        %v1827 = vand.u32 2147483647, %v372
        %vm1828 = vcmp.le.f32.partialorder %v1827, 0.7853982
        %vm1829 = vcmp.lt.s32.totalorder %v372, 0
        %v1830 = vand.u32 %v372, 2139095040
        %v1831 = vshrl.u32 %v1830, 23
        %v1832 = vsub.s32 %v1831, 127
        %v1833 = vand.u32 2147483647, %v372
        %v1834 = vand.u32 %v1833, 8388607
        %v1835 = vor.u32 %v1834, 8388608
        %v1836 = vsub.s32 0, %v1835
        %v1837 = vadd.s32 %v1832, 1
        %vm1838 = vcmp.gt.s32.totalorder %v1837, 0
        %v1839 = vsel %vm1838, %v1837, 0
        %v1840 = vshrl.u32 %v1839, 5
        %v1841 = vand.u32 %v1839, 31
        %v1842 = vsub.s32 32, %v1841
        %v1843 = vshrl.u32 683565275, %v1842
        %v1844 = vshll.u32 683565275, %v1841
        %v1845 = vshrl.u32 2475754826, %v1842
        %v1846 = vor.u32 %v1844, %v1845
        %v1847 = vshll.u32 2475754826, %v1841
        %v1848 = vshrl.u32 2131351028, %v1842
        %v1849 = vor.u32 %v1847, %v1848
        %v1850 = vshll.u32 2131351028, %v1841
        %v1851 = vshrl.u32 2102212464, %v1842
        %v1852 = vor.u32 %v1850, %v1851
        %v1853 = vshll.u32 2102212464, %v1841
        %v1854 = vshrl.u32 920167782, %v1842
        %v1855 = vor.u32 %v1853, %v1854
        %v1856 = vshll.u32 920167782, %v1841
        %v1857 = vshrl.u32 1326507024, %v1842
        %v1858 = vor.u32 %v1856, %v1857
        %vm1859 = vcmp.lt.s32.totalorder %v1840, 1
        %vm1860 = vcmp.lt.s32.totalorder %v1840, 2
        %vm1861 = vcmp.lt.s32.totalorder %v1840, 3
        %vm1862 = vcmp.lt.s32.totalorder %v1840, 4
        %v1863 = vsel %vm1859, %v1843, %v1846
        %v1864 = vsel %vm1862, %v1852, 2102212464
        %v1865 = vsel %vm1861, %v1849, %v1864
        %v1866 = vsel %vm1860, %v1863, %v1865
        %v1867 = vsel %vm1859, %v1846, %v1849
        %v1868 = vsel %vm1862, %v1855, 920167782
        %v1869 = vsel %vm1861, %v1852, %v1868
        %v1870 = vsel %vm1860, %v1867, %v1869
        %v1871 = vsel %vm1859, %v1849, %v1852
        %v1872 = vsel %vm1862, %v1858, 1326507024
        %v1873 = vsel %vm1861, %v1855, %v1872
        %v1874 = vsel %vm1860, %v1871, %v1873
        %v1875 = vshll.u32 %v1835, 8
        %v1876 = vmul.u32.u64.compose %v1875, %v1874
        %v1877 = vextract.low.u32 %v1876
        %v1878 = vextract.high.u32 %v1876
        %v1879 = vmul.u32.u64.compose %v1875, %v1870
        %v1880 = vextract.low.u32 %v1879
        %v1881 = vextract.high.u32 %v1879
        %v1882 = vmul.u32 %v1875, %v1866
        %v1883 = vadd.s32 %v1878, %v1880
        %vm1884 = vc.u32 %v1878, %v1880
        %v1885 = vadd.s32 %v1881, 1
        %v1886 = vsel %vm1884, %v1885, %v1881
        %v1887 = vadd.s32 %v1882, %v1886
        %v1888 = vadd.s32 %v1887, 536870912
        %v1889 = vshrl.u32 %v1888, 30
        %v1890 = vshll.u32 %v1889, 30
        %v1891 = vsub.s32 %v1887, %v1890
        %vm1892 = vcmp.lt.s32.totalorder %v1891, 0
        %v1893 = vsub.s32 0, %v1891
        %v1894 = vsel %vm1892, %v1893, %v1891
        %v1895 = vclz %v1894
        %v1896 = vsub.s32 %v1895, 2
        %vm1897 = vcmp.gt.s32.totalorder 0, %v1896
        %v1898 = vsel %vm1897, 0, %v1896
        %v1899 = vsub.s32 32, %v1898
        %v1900 = vshll.u32 %v1891, %v1898
        %v1901 = vshrl.u32 %v1883, %v1899
        %v1902 = vor.u32 %v1900, %v1901
        %v1903 = vsub.s32 4294967266, %v1898
        %v1904 = vadd.s32 %v1903, 127
        %v1905 = vshll.u32 %v1904, 23
        %v1906 = vor.u32 4788187, %v1905
        %v1907 = vand.u32 2147483647, %v1906
        %v1909 = vcvt.s32.f32 %v1902
        %v1910 = vmul.f32 %v1909, %v1907
        %v1911 = vxor.u32 %v1910, 2147483648
        %v1912 = vsel %vm1829, %v1911, %v1910
        %v1913 = vsub.s32 4, %v1889
        %v1914 = vsel %vm1829, %v1913, %v1889
        %v1915 = vsel %vm1828, %v372, %v1912
        %v1916 = vsel %vm1828, 0, %v1914
        %v1917 = vcosq.f32.pop %v1915
        %v1918 = vsinq.f32.pop %v1915
        %vm1919 = vweird.f32 %v372
        %v1920 = vadd.s32 %v1916, 3
        %v1921 = vand.u32 %v1920, 3
        %vm1922 = vcmp.lt.s32.totalorder %v1921, 2
        %vm1923 = vcmp.eq.s32.totalorder %v1921, 0
        %v1924 = vxor.u32 %v1918, 2147483648
        %v1925 = vsel %vm1923, %v1917, %v1924
        %vm1926 = vcmp.eq.s32.totalorder %v1921, 2
        %v1927 = vxor.u32 %v1917, 2147483648
        %v1928 = vsel %vm1926, %v1927, %v1918
        %v1929 = vsel %vm1922, %v1925, %v1928
        %v1930 = vsel %vm1919, nan, %v1929
        %v1931 = vand.u32 2147483647, %v465
        %vm1932 = vcmp.le.f32.partialorder %v1931, 0.7853982
        %vm1933 = vcmp.lt.s32.totalorder %v465, 0
        %v1934 = vand.u32 %v465, 2139095040
        %v1935 = vshrl.u32 %v1934, 23
        %v1936 = vsub.s32 %v1935, 127
        %v1937 = vand.u32 2147483647, %v465
        %v1938 = vand.u32 %v1937, 8388607
        %v1939 = vor.u32 %v1938, 8388608
        %v1940 = vsub.s32 0, %v1939
        %v1941 = vadd.s32 %v1936, 1
        %vm1942 = vcmp.gt.s32.totalorder %v1941, 0
        %v1943 = vsel %vm1942, %v1941, 0
        %v1944 = vshrl.u32 %v1943, 5
        %v1945 = vand.u32 %v1943, 31
        %v1946 = vsub.s32 32, %v1945
        %v1947 = vshrl.u32 683565275, %v1946
        %v1948 = vshll.u32 683565275, %v1945
        %v1949 = vshrl.u32 2475754826, %v1946
        %v1950 = vor.u32 %v1948, %v1949
        %v1951 = vshll.u32 2475754826, %v1945
        %v1952 = vshrl.u32 2131351028, %v1946
        %v1953 = vor.u32 %v1951, %v1952
        %v1954 = vshll.u32 2131351028, %v1945
        %v1955 = vshrl.u32 2102212464, %v1946
        %v1956 = vor.u32 %v1954, %v1955
        %v1957 = vshll.u32 2102212464, %v1945
        %v1958 = vshrl.u32 920167782, %v1946
        %v1959 = vor.u32 %v1957, %v1958
        %v1960 = vshll.u32 920167782, %v1945
        %v1961 = vshrl.u32 1326507024, %v1946
        %v1962 = vor.u32 %v1960, %v1961
        %vm1963 = vcmp.lt.s32.totalorder %v1944, 1
        %vm1964 = vcmp.lt.s32.totalorder %v1944, 2
        %vm1965 = vcmp.lt.s32.totalorder %v1944, 3
        %vm1966 = vcmp.lt.s32.totalorder %v1944, 4
        %v1967 = vsel %vm1963, %v1947, %v1950
        %v1968 = vsel %vm1966, %v1956, 2102212464
        %v1969 = vsel %vm1965, %v1953, %v1968
        %v1970 = vsel %vm1964, %v1967, %v1969
        %v1971 = vsel %vm1963, %v1950, %v1953
        %v1972 = vsel %vm1966, %v1959, 920167782
        %v1973 = vsel %vm1965, %v1956, %v1972
        %v1974 = vsel %vm1964, %v1971, %v1973
        %v1975 = vsel %vm1963, %v1953, %v1956
        %v1976 = vsel %vm1966, %v1962, 1326507024
        %v1977 = vsel %vm1965, %v1959, %v1976
        %v1978 = vsel %vm1964, %v1975, %v1977
        %v1979 = vshll.u32 %v1939, 8
        %v1980 = vmul.u32.u64.compose %v1979, %v1978
        %v1981 = vextract.low.u32 %v1980
        %v1982 = vextract.high.u32 %v1980
        %v1983 = vmul.u32.u64.compose %v1979, %v1974
        %v1984 = vextract.low.u32 %v1983
        %v1985 = vextract.high.u32 %v1983
        %v1986 = vmul.u32 %v1979, %v1970
        %v1987 = vadd.s32 %v1982, %v1984
        %vm1988 = vc.u32 %v1982, %v1984
        %v1989 = vadd.s32 %v1985, 1
        %v1990 = vsel %vm1988, %v1989, %v1985
        %v1991 = vadd.s32 %v1986, %v1990
        %v1992 = vadd.s32 %v1991, 536870912
        %v1993 = vshrl.u32 %v1992, 30
        %v1994 = vshll.u32 %v1993, 30
        %v1995 = vsub.s32 %v1991, %v1994
        %vm1996 = vcmp.lt.s32.totalorder %v1995, 0
        %v1997 = vsub.s32 0, %v1995
        %v1998 = vsel %vm1996, %v1997, %v1995
        %v1999 = vclz %v1998
        %v2000 = vsub.s32 %v1999, 2
        %vm2001 = vcmp.gt.s32.totalorder 0, %v2000
        %v2002 = vsel %vm2001, 0, %v2000
        %v2003 = vsub.s32 32, %v2002
        %v2004 = vshll.u32 %v1995, %v2002
        %v2005 = vshrl.u32 %v1987, %v2003
        %v2006 = vor.u32 %v2004, %v2005
        %v2007 = vsub.s32 4294967266, %v2002
        %v2008 = vadd.s32 %v2007, 127
        %v2009 = vshll.u32 %v2008, 23
        %v2010 = vor.u32 4788187, %v2009
        %v2011 = vand.u32 2147483647, %v2010
        %v2013 = vcvt.s32.f32 %v2006
        %v2014 = vmul.f32 %v2013, %v2011
        %v2015 = vxor.u32 %v2014, 2147483648
        %v2016 = vsel %vm1933, %v2015, %v2014
        %v2017 = vsub.s32 4, %v1993
        %v2018 = vsel %vm1933, %v2017, %v1993
        %v2019 = vsel %vm1932, %v465, %v2016
        %v2020 = vsel %vm1932, 0, %v2018
        %v2021 = vcosq.f32.pop %v2019
        %v2022 = vsinq.f32.pop %v2019
        %vm2023 = vweird.f32 %v465
        %v2024 = vadd.s32 %v2020, 3
        %v2025 = vand.u32 %v2024, 3
        %vm2026 = vcmp.lt.s32.totalorder %v2025, 2
        %vm2027 = vcmp.eq.s32.totalorder %v2025, 0
        %v2028 = vxor.u32 %v2022, 2147483648
        %v2029 = vsel %vm2027, %v2021, %v2028
        %vm2030 = vcmp.eq.s32.totalorder %v2025, 2
        %v2031 = vxor.u32 %v2021, 2147483648
        %v2032 = vsel %vm2030, %v2031, %v2022
        %v2033 = vsel %vm2026, %v2029, %v2032
        %v2034 = vsel %vm2023, nan, %v2033
        %v2035 = vand.u32 2147483647, %v467
        %vm2036 = vcmp.le.f32.partialorder %v2035, 0.7853982
        %vm2037 = vcmp.lt.s32.totalorder %v467, 0
        %v2038 = vand.u32 %v467, 2139095040
        %v2039 = vshrl.u32 %v2038, 23
        %v2040 = vsub.s32 %v2039, 127
        %v2041 = vand.u32 2147483647, %v467
        %v2042 = vand.u32 %v2041, 8388607
        %v2043 = vor.u32 %v2042, 8388608
        %v2044 = vsub.s32 0, %v2043
        %v2045 = vadd.s32 %v2040, 1
        %vm2046 = vcmp.gt.s32.totalorder %v2045, 0
        %v2047 = vsel %vm2046, %v2045, 0
        %v2048 = vshrl.u32 %v2047, 5
        %v2049 = vand.u32 %v2047, 31
        %v2050 = vsub.s32 32, %v2049
        %v2051 = vshrl.u32 683565275, %v2050
        %v2052 = vshll.u32 683565275, %v2049
        %v2053 = vshrl.u32 2475754826, %v2050
        %v2054 = vor.u32 %v2052, %v2053
        %v2055 = vshll.u32 2475754826, %v2049
        %v2056 = vshrl.u32 2131351028, %v2050
        %v2057 = vor.u32 %v2055, %v2056
        %v2058 = vshll.u32 2131351028, %v2049
        %v2059 = vshrl.u32 2102212464, %v2050
        %v2060 = vor.u32 %v2058, %v2059
        %v2061 = vshll.u32 2102212464, %v2049
        %v2062 = vshrl.u32 920167782, %v2050
        %v2063 = vor.u32 %v2061, %v2062
        %v2064 = vshll.u32 920167782, %v2049
        %v2065 = vshrl.u32 1326507024, %v2050
        %v2066 = vor.u32 %v2064, %v2065
        %vm2067 = vcmp.lt.s32.totalorder %v2048, 1
        %vm2068 = vcmp.lt.s32.totalorder %v2048, 2
        %vm2069 = vcmp.lt.s32.totalorder %v2048, 3
        %vm2070 = vcmp.lt.s32.totalorder %v2048, 4
        %v2071 = vsel %vm2067, %v2051, %v2054
        %v2072 = vsel %vm2070, %v2060, 2102212464
        %v2073 = vsel %vm2069, %v2057, %v2072
        %v2074 = vsel %vm2068, %v2071, %v2073
        %v2075 = vsel %vm2067, %v2054, %v2057
        %v2076 = vsel %vm2070, %v2063, 920167782
        %v2077 = vsel %vm2069, %v2060, %v2076
        %v2078 = vsel %vm2068, %v2075, %v2077
        %v2079 = vsel %vm2067, %v2057, %v2060
        %v2080 = vsel %vm2070, %v2066, 1326507024
        %v2081 = vsel %vm2069, %v2063, %v2080
        %v2082 = vsel %vm2068, %v2079, %v2081
        %v2083 = vshll.u32 %v2043, 8
        %v2084 = vmul.u32.u64.compose %v2083, %v2082
        %v2085 = vextract.low.u32 %v2084
        %v2086 = vextract.high.u32 %v2084
        %v2087 = vmul.u32.u64.compose %v2083, %v2078
        %v2088 = vextract.low.u32 %v2087
        %v2089 = vextract.high.u32 %v2087
        %v2090 = vmul.u32 %v2083, %v2074
        %v2091 = vadd.s32 %v2086, %v2088
        %vm2092 = vc.u32 %v2086, %v2088
        %v2093 = vadd.s32 %v2089, 1
        %v2094 = vsel %vm2092, %v2093, %v2089
        %v2095 = vadd.s32 %v2090, %v2094
        %v2096 = vadd.s32 %v2095, 536870912
        %v2097 = vshrl.u32 %v2096, 30
        %v2098 = vshll.u32 %v2097, 30
        %v2099 = vsub.s32 %v2095, %v2098
        %vm2100 = vcmp.lt.s32.totalorder %v2099, 0
        %v2101 = vsub.s32 0, %v2099
        %v2102 = vsel %vm2100, %v2101, %v2099
        %v2103 = vclz %v2102
        %v2104 = vsub.s32 %v2103, 2
        %vm2105 = vcmp.gt.s32.totalorder 0, %v2104
        %v2106 = vsel %vm2105, 0, %v2104
        %v2107 = vsub.s32 32, %v2106
        %v2108 = vshll.u32 %v2099, %v2106
        %v2109 = vshrl.u32 %v2091, %v2107
        %v2110 = vor.u32 %v2108, %v2109
        %v2111 = vsub.s32 4294967266, %v2106
        %v2112 = vadd.s32 %v2111, 127
        %v2113 = vshll.u32 %v2112, 23
        %v2114 = vor.u32 4788187, %v2113
        %v2115 = vand.u32 2147483647, %v2114
        %v2117 = vcvt.s32.f32 %v2110
        %v2118 = vmul.f32 %v2117, %v2115
        %v2119 = vxor.u32 %v2118, 2147483648
        %v2120 = vsel %vm2037, %v2119, %v2118
        %v2121 = vsub.s32 4, %v2097
        %v2122 = vsel %vm2037, %v2121, %v2097
        %v2123 = vsel %vm2036, %v467, %v2120
        %v2124 = vsel %vm2036, 0, %v2122
        %v2125 = vcosq.f32.pop %v2123
        %v2126 = vsinq.f32.pop %v2123
        %vm2127 = vweird.f32 %v467
        %v2128 = vadd.s32 %v2124, 3
        %v2129 = vand.u32 %v2128, 3
        %vm2130 = vcmp.lt.s32.totalorder %v2129, 2
        %vm2131 = vcmp.eq.s32.totalorder %v2129, 0
        %v2132 = vxor.u32 %v2126, 2147483648
        %v2133 = vsel %vm2131, %v2125, %v2132
        %vm2134 = vcmp.eq.s32.totalorder %v2129, 2
        %v2135 = vxor.u32 %v2125, 2147483648
        %v2136 = vsel %vm2134, %v2135, %v2126
        %v2137 = vsel %vm2130, %v2133, %v2136
        %v2138 = vsel %vm2127, nan, %v2137
        %v2139 = vand.u32 2147483647, %v376
        %vm2140 = vcmp.le.f32.partialorder %v2139, 0.7853982
        %vm2141 = vcmp.lt.s32.totalorder %v376, 0
        %v2142 = vand.u32 %v376, 2139095040
        %v2143 = vshrl.u32 %v2142, 23
        %v2144 = vsub.s32 %v2143, 127
        %v2145 = vand.u32 2147483647, %v376
        %v2146 = vand.u32 %v2145, 8388607
        %v2147 = vor.u32 %v2146, 8388608
        %v2148 = vsub.s32 0, %v2147
        %v2149 = vadd.s32 %v2144, 1
        %vm2150 = vcmp.gt.s32.totalorder %v2149, 0
        %v2151 = vsel %vm2150, %v2149, 0
        %v2152 = vshrl.u32 %v2151, 5
        %v2153 = vand.u32 %v2151, 31
        %v2154 = vsub.s32 32, %v2153
        %v2155 = vshrl.u32 683565275, %v2154
        %v2156 = vshll.u32 683565275, %v2153
        %v2157 = vshrl.u32 2475754826, %v2154
        %v2158 = vor.u32 %v2156, %v2157
        %v2159 = vshll.u32 2475754826, %v2153
        %v2160 = vshrl.u32 2131351028, %v2154
        %v2161 = vor.u32 %v2159, %v2160
        %v2162 = vshll.u32 2131351028, %v2153
        %v2163 = vshrl.u32 2102212464, %v2154
        %v2164 = vor.u32 %v2162, %v2163
        %v2165 = vshll.u32 2102212464, %v2153
        %v2166 = vshrl.u32 920167782, %v2154
        %v2167 = vor.u32 %v2165, %v2166
        %v2168 = vshll.u32 920167782, %v2153
        %v2169 = vshrl.u32 1326507024, %v2154
        %v2170 = vor.u32 %v2168, %v2169
        %vm2171 = vcmp.lt.s32.totalorder %v2152, 1
        %vm2172 = vcmp.lt.s32.totalorder %v2152, 2
        %vm2173 = vcmp.lt.s32.totalorder %v2152, 3
        %vm2174 = vcmp.lt.s32.totalorder %v2152, 4
        %v2175 = vsel %vm2171, %v2155, %v2158
        %v2176 = vsel %vm2174, %v2164, 2102212464
        %v2177 = vsel %vm2173, %v2161, %v2176
        %v2178 = vsel %vm2172, %v2175, %v2177
        %v2179 = vsel %vm2171, %v2158, %v2161
        %v2180 = vsel %vm2174, %v2167, 920167782
        %v2181 = vsel %vm2173, %v2164, %v2180
        %v2182 = vsel %vm2172, %v2179, %v2181
        %v2183 = vsel %vm2171, %v2161, %v2164
        %v2184 = vsel %vm2174, %v2170, 1326507024
        %v2185 = vsel %vm2173, %v2167, %v2184
        %v2186 = vsel %vm2172, %v2183, %v2185
        %v2187 = vshll.u32 %v2147, 8
        %v2188 = vmul.u32.u64.compose %v2187, %v2186
        %v2189 = vextract.low.u32 %v2188
        %v2190 = vextract.high.u32 %v2188
        %v2191 = vmul.u32.u64.compose %v2187, %v2182
        %v2192 = vextract.low.u32 %v2191
        %v2193 = vextract.high.u32 %v2191
        %v2194 = vmul.u32 %v2187, %v2178
        %v2195 = vadd.s32 %v2190, %v2192
        %vm2196 = vc.u32 %v2190, %v2192
        %v2197 = vadd.s32 %v2193, 1
        %v2198 = vsel %vm2196, %v2197, %v2193
        %v2199 = vadd.s32 %v2194, %v2198
        %v2200 = vadd.s32 %v2199, 536870912
        %v2201 = vshrl.u32 %v2200, 30
        %v2202 = vshll.u32 %v2201, 30
        %v2203 = vsub.s32 %v2199, %v2202
        %vm2204 = vcmp.lt.s32.totalorder %v2203, 0
        %v2205 = vsub.s32 0, %v2203
        %v2206 = vsel %vm2204, %v2205, %v2203
        %v2207 = vclz %v2206
        %v2208 = vsub.s32 %v2207, 2
        %vm2209 = vcmp.gt.s32.totalorder 0, %v2208
        %v2210 = vsel %vm2209, 0, %v2208
        %v2211 = vsub.s32 32, %v2210
        %v2212 = vshll.u32 %v2203, %v2210
        %v2213 = vshrl.u32 %v2195, %v2211
        %v2214 = vor.u32 %v2212, %v2213
        %v2215 = vsub.s32 4294967266, %v2210
        %v2216 = vadd.s32 %v2215, 127
        %v2217 = vshll.u32 %v2216, 23
        %v2218 = vor.u32 4788187, %v2217
        %v2219 = vand.u32 2147483647, %v2218
        %v2221 = vcvt.s32.f32 %v2214
        %v2222 = vmul.f32 %v2221, %v2219
        %v2223 = vxor.u32 %v2222, 2147483648
        %v2224 = vsel %vm2141, %v2223, %v2222
        %v2225 = vsub.s32 4, %v2201
        %v2226 = vsel %vm2141, %v2225, %v2201
        %v2227 = vsel %vm2140, %v376, %v2224
        %v2228 = vsel %vm2140, 0, %v2226
        %v2229 = vcosq.f32.pop %v2227
        %v2230 = vsinq.f32.pop %v2227
        %vm2231 = vweird.f32 %v376
        %v2232 = vadd.s32 %v2228, 3
        %v2233 = vand.u32 %v2232, 3
        %vm2234 = vcmp.lt.s32.totalorder %v2233, 2
        %vm2235 = vcmp.eq.s32.totalorder %v2233, 0
        %v2236 = vxor.u32 %v2230, 2147483648
        %v2237 = vsel %vm2235, %v2229, %v2236
        %vm2238 = vcmp.eq.s32.totalorder %v2233, 2
        %v2239 = vxor.u32 %v2229, 2147483648
        %v2240 = vsel %vm2238, %v2239, %v2230
        %v2241 = vsel %vm2234, %v2237, %v2240
        %v2242 = vsel %vm2231, nan, %v2241
        %v2243 = vand.u32 2147483647, %v378
        %vm2244 = vcmp.le.f32.partialorder %v2243, 0.7853982
        %vm2245 = vcmp.lt.s32.totalorder %v378, 0
        %v2246 = vand.u32 %v378, 2139095040
        %v2247 = vshrl.u32 %v2246, 23
        %v2248 = vsub.s32 %v2247, 127
        %v2249 = vand.u32 2147483647, %v378
        %v2250 = vand.u32 %v2249, 8388607
        %v2251 = vor.u32 %v2250, 8388608
        %v2252 = vsub.s32 0, %v2251
        %v2253 = vadd.s32 %v2248, 1
        %vm2254 = vcmp.gt.s32.totalorder %v2253, 0
        %v2255 = vsel %vm2254, %v2253, 0
        %v2256 = vshrl.u32 %v2255, 5
        %v2257 = vand.u32 %v2255, 31
        %v2258 = vsub.s32 32, %v2257
        %v2259 = vshrl.u32 683565275, %v2258
        %v2260 = vshll.u32 683565275, %v2257
        %v2261 = vshrl.u32 2475754826, %v2258
        %v2262 = vor.u32 %v2260, %v2261
        %v2263 = vshll.u32 2475754826, %v2257
        %v2264 = vshrl.u32 2131351028, %v2258
        %v2265 = vor.u32 %v2263, %v2264
        %v2266 = vshll.u32 2131351028, %v2257
        %v2267 = vshrl.u32 2102212464, %v2258
        %v2268 = vor.u32 %v2266, %v2267
        %v2269 = vshll.u32 2102212464, %v2257
        %v2270 = vshrl.u32 920167782, %v2258
        %v2271 = vor.u32 %v2269, %v2270
        %v2272 = vshll.u32 920167782, %v2257
        %v2273 = vshrl.u32 1326507024, %v2258
        %v2274 = vor.u32 %v2272, %v2273
        %vm2275 = vcmp.lt.s32.totalorder %v2256, 1
        %vm2276 = vcmp.lt.s32.totalorder %v2256, 2
        %vm2277 = vcmp.lt.s32.totalorder %v2256, 3
        %vm2278 = vcmp.lt.s32.totalorder %v2256, 4
        %v2279 = vsel %vm2275, %v2259, %v2262
        %v2280 = vsel %vm2278, %v2268, 2102212464
        %v2281 = vsel %vm2277, %v2265, %v2280
        %v2282 = vsel %vm2276, %v2279, %v2281
        %v2283 = vsel %vm2275, %v2262, %v2265
        %v2284 = vsel %vm2278, %v2271, 920167782
        %v2285 = vsel %vm2277, %v2268, %v2284
        %v2286 = vsel %vm2276, %v2283, %v2285
        %v2287 = vsel %vm2275, %v2265, %v2268
        %v2288 = vsel %vm2278, %v2274, 1326507024
        %v2289 = vsel %vm2277, %v2271, %v2288
        %v2290 = vsel %vm2276, %v2287, %v2289
        %v2291 = vshll.u32 %v2251, 8
        %v2292 = vmul.u32.u64.compose %v2291, %v2290
        %v2293 = vextract.low.u32 %v2292
        %v2294 = vextract.high.u32 %v2292
        %v2295 = vmul.u32.u64.compose %v2291, %v2286
        %v2296 = vextract.low.u32 %v2295
        %v2297 = vextract.high.u32 %v2295
        %v2298 = vmul.u32 %v2291, %v2282
        %v2299 = vadd.s32 %v2294, %v2296
        %vm2300 = vc.u32 %v2294, %v2296
        %v2301 = vadd.s32 %v2297, 1
        %v2302 = vsel %vm2300, %v2301, %v2297
        %v2303 = vadd.s32 %v2298, %v2302
        %v2304 = vadd.s32 %v2303, 536870912
        %v2305 = vshrl.u32 %v2304, 30
        %v2306 = vshll.u32 %v2305, 30
        %v2307 = vsub.s32 %v2303, %v2306
        %vm2308 = vcmp.lt.s32.totalorder %v2307, 0
        %v2309 = vsub.s32 0, %v2307
        %v2310 = vsel %vm2308, %v2309, %v2307
        %v2311 = vclz %v2310
        %v2312 = vsub.s32 %v2311, 2
        %vm2313 = vcmp.gt.s32.totalorder 0, %v2312
        %v2314 = vsel %vm2313, 0, %v2312
        %v2315 = vsub.s32 32, %v2314
        %v2316 = vshll.u32 %v2307, %v2314
        %v2317 = vshrl.u32 %v2299, %v2315
        %v2318 = vor.u32 %v2316, %v2317
        %v2319 = vsub.s32 4294967266, %v2314
        %v2320 = vadd.s32 %v2319, 127
        %v2321 = vshll.u32 %v2320, 23
        %v2322 = vor.u32 4788187, %v2321
        %v2323 = vand.u32 2147483647, %v2322
        %v2325 = vcvt.s32.f32 %v2318
        %v2326 = vmul.f32 %v2325, %v2323
        %v2327 = vxor.u32 %v2326, 2147483648
        %v2328 = vsel %vm2245, %v2327, %v2326
        %v2329 = vsub.s32 4, %v2305
        %v2330 = vsel %vm2245, %v2329, %v2305
        %v2331 = vsel %vm2244, %v378, %v2328
        %v2332 = vsel %vm2244, 0, %v2330
        %v2333 = vcosq.f32.pop %v2331
        %v2334 = vsinq.f32.pop %v2331
        %vm2335 = vweird.f32 %v378
        %v2336 = vadd.s32 %v2332, 3
        %v2337 = vand.u32 %v2336, 3
        %vm2338 = vcmp.lt.s32.totalorder %v2337, 2
        %vm2339 = vcmp.eq.s32.totalorder %v2337, 0
        %v2340 = vxor.u32 %v2334, 2147483648
        %v2341 = vsel %vm2339, %v2333, %v2340
        %vm2342 = vcmp.eq.s32.totalorder %v2337, 2
        %v2343 = vxor.u32 %v2333, 2147483648
        %v2344 = vsel %vm2342, %v2343, %v2334
        %v2345 = vsel %vm2338, %v2341, %v2344
        %v2346 = vsel %vm2335, nan, %v2345
        %v2347 = vand.u32 2147483647, %v471
        %vm2348 = vcmp.le.f32.partialorder %v2347, 0.7853982
        %vm2349 = vcmp.lt.s32.totalorder %v471, 0
        %v2350 = vand.u32 %v471, 2139095040
        %v2351 = vshrl.u32 %v2350, 23
        %v2352 = vsub.s32 %v2351, 127
        %v2353 = vand.u32 2147483647, %v471
        %v2354 = vand.u32 %v2353, 8388607
        %v2355 = vor.u32 %v2354, 8388608
        %v2356 = vsub.s32 0, %v2355
        %v2357 = vadd.s32 %v2352, 1
        %vm2358 = vcmp.gt.s32.totalorder %v2357, 0
        %v2359 = vsel %vm2358, %v2357, 0
        %v2360 = vshrl.u32 %v2359, 5
        %v2361 = vand.u32 %v2359, 31
        %v2362 = vsub.s32 32, %v2361
        %v2363 = vshrl.u32 683565275, %v2362
        %v2364 = vshll.u32 683565275, %v2361
        %v2365 = vshrl.u32 2475754826, %v2362
        %v2366 = vor.u32 %v2364, %v2365
        %v2367 = vshll.u32 2475754826, %v2361
        %v2368 = vshrl.u32 2131351028, %v2362
        %v2369 = vor.u32 %v2367, %v2368
        %v2370 = vshll.u32 2131351028, %v2361
        %v2371 = vshrl.u32 2102212464, %v2362
        %v2372 = vor.u32 %v2370, %v2371
        %v2373 = vshll.u32 2102212464, %v2361
        %v2374 = vshrl.u32 920167782, %v2362
        %v2375 = vor.u32 %v2373, %v2374
        %v2376 = vshll.u32 920167782, %v2361
        %v2377 = vshrl.u32 1326507024, %v2362
        %v2378 = vor.u32 %v2376, %v2377
        %vm2379 = vcmp.lt.s32.totalorder %v2360, 1
        %vm2380 = vcmp.lt.s32.totalorder %v2360, 2
        %vm2381 = vcmp.lt.s32.totalorder %v2360, 3
        %vm2382 = vcmp.lt.s32.totalorder %v2360, 4
        %v2383 = vsel %vm2379, %v2363, %v2366
        %v2384 = vsel %vm2382, %v2372, 2102212464
        %v2385 = vsel %vm2381, %v2369, %v2384
        %v2386 = vsel %vm2380, %v2383, %v2385
        %v2387 = vsel %vm2379, %v2366, %v2369
        %v2388 = vsel %vm2382, %v2375, 920167782
        %v2389 = vsel %vm2381, %v2372, %v2388
        %v2390 = vsel %vm2380, %v2387, %v2389
        %v2391 = vsel %vm2379, %v2369, %v2372
        %v2392 = vsel %vm2382, %v2378, 1326507024
        %v2393 = vsel %vm2381, %v2375, %v2392
        %v2394 = vsel %vm2380, %v2391, %v2393
        %v2395 = vshll.u32 %v2355, 8
        %v2396 = vmul.u32.u64.compose %v2395, %v2394
        %v2397 = vextract.low.u32 %v2396
        %v2398 = vextract.high.u32 %v2396
        %v2399 = vmul.u32.u64.compose %v2395, %v2390
        %v2400 = vextract.low.u32 %v2399
        %v2401 = vextract.high.u32 %v2399
        %v2402 = vmul.u32 %v2395, %v2386
        %v2403 = vadd.s32 %v2398, %v2400
        %vm2404 = vc.u32 %v2398, %v2400
        %v2405 = vadd.s32 %v2401, 1
        %v2406 = vsel %vm2404, %v2405, %v2401
        %v2407 = vadd.s32 %v2402, %v2406
        %v2408 = vadd.s32 %v2407, 536870912
        %v2409 = vshrl.u32 %v2408, 30
        %v2410 = vshll.u32 %v2409, 30
        %v2411 = vsub.s32 %v2407, %v2410
        %vm2412 = vcmp.lt.s32.totalorder %v2411, 0
        %v2413 = vsub.s32 0, %v2411
        %v2414 = vsel %vm2412, %v2413, %v2411
        %v2415 = vclz %v2414
        %v2416 = vsub.s32 %v2415, 2
        %vm2417 = vcmp.gt.s32.totalorder 0, %v2416
        %v2418 = vsel %vm2417, 0, %v2416
        %v2419 = vsub.s32 32, %v2418
        %v2420 = vshll.u32 %v2411, %v2418
        %v2421 = vshrl.u32 %v2403, %v2419
        %v2422 = vor.u32 %v2420, %v2421
        %v2423 = vsub.s32 4294967266, %v2418
        %v2424 = vadd.s32 %v2423, 127
        %v2425 = vshll.u32 %v2424, 23
        %v2426 = vor.u32 4788187, %v2425
        %v2427 = vand.u32 2147483647, %v2426
        %v2429 = vcvt.s32.f32 %v2422
        %v2430 = vmul.f32 %v2429, %v2427
        %v2431 = vxor.u32 %v2430, 2147483648
        %v2432 = vsel %vm2349, %v2431, %v2430
        %v2433 = vsub.s32 4, %v2409
        %v2434 = vsel %vm2349, %v2433, %v2409
        %v2435 = vsel %vm2348, %v471, %v2432
        %v2436 = vsel %vm2348, 0, %v2434
        %v2437 = vcosq.f32.pop %v2435
        %v2438 = vsinq.f32.pop %v2435
        %vm2439 = vweird.f32 %v471
        %v2440 = vadd.s32 %v2436, 3
        %v2441 = vand.u32 %v2440, 3
        %vm2442 = vcmp.lt.s32.totalorder %v2441, 2
        %vm2443 = vcmp.eq.s32.totalorder %v2441, 0
        %v2444 = vxor.u32 %v2438, 2147483648
        %v2445 = vsel %vm2443, %v2437, %v2444
        %vm2446 = vcmp.eq.s32.totalorder %v2441, 2
        %v2447 = vxor.u32 %v2437, 2147483648
        %v2448 = vsel %vm2446, %v2447, %v2438
        %v2449 = vsel %vm2442, %v2445, %v2448
        %v2450 = vsel %vm2439, nan, %v2449
        %v2451 = vand.u32 2147483647, %v473
        %vm2452 = vcmp.le.f32.partialorder %v2451, 0.7853982
        %vm2453 = vcmp.lt.s32.totalorder %v473, 0
        %v2454 = vand.u32 %v473, 2139095040
        %v2455 = vshrl.u32 %v2454, 23
        %v2456 = vsub.s32 %v2455, 127
        %v2457 = vand.u32 2147483647, %v473
        %v2458 = vand.u32 %v2457, 8388607
        %v2459 = vor.u32 %v2458, 8388608
        %v2460 = vsub.s32 0, %v2459
        %v2461 = vadd.s32 %v2456, 1
        %vm2462 = vcmp.gt.s32.totalorder %v2461, 0
        %v2463 = vsel %vm2462, %v2461, 0
        %v2464 = vshrl.u32 %v2463, 5
        %v2465 = vand.u32 %v2463, 31
        %v2466 = vsub.s32 32, %v2465
        %v2467 = vshrl.u32 683565275, %v2466
        %v2468 = vshll.u32 683565275, %v2465
        %v2469 = vshrl.u32 2475754826, %v2466
        %v2470 = vor.u32 %v2468, %v2469
        %v2471 = vshll.u32 2475754826, %v2465
        %v2472 = vshrl.u32 2131351028, %v2466
        %v2473 = vor.u32 %v2471, %v2472
        %v2474 = vshll.u32 2131351028, %v2465
        %v2475 = vshrl.u32 2102212464, %v2466
        %v2476 = vor.u32 %v2474, %v2475
        %v2477 = vshll.u32 2102212464, %v2465
        %v2478 = vshrl.u32 920167782, %v2466
        %v2479 = vor.u32 %v2477, %v2478
        %v2480 = vshll.u32 920167782, %v2465
        %v2481 = vshrl.u32 1326507024, %v2466
        %v2482 = vor.u32 %v2480, %v2481
        %vm2483 = vcmp.lt.s32.totalorder %v2464, 1
        %vm2484 = vcmp.lt.s32.totalorder %v2464, 2
        %vm2485 = vcmp.lt.s32.totalorder %v2464, 3
        %vm2486 = vcmp.lt.s32.totalorder %v2464, 4
        %v2487 = vsel %vm2483, %v2467, %v2470
        %v2488 = vsel %vm2486, %v2476, 2102212464
        %v2489 = vsel %vm2485, %v2473, %v2488
        %v2490 = vsel %vm2484, %v2487, %v2489
        %v2491 = vsel %vm2483, %v2470, %v2473
        %v2492 = vsel %vm2486, %v2479, 920167782
        %v2493 = vsel %vm2485, %v2476, %v2492
        %v2494 = vsel %vm2484, %v2491, %v2493
        %v2495 = vsel %vm2483, %v2473, %v2476
        %v2496 = vsel %vm2486, %v2482, 1326507024
        %v2497 = vsel %vm2485, %v2479, %v2496
        %v2498 = vsel %vm2484, %v2495, %v2497
        %v2499 = vshll.u32 %v2459, 8
        %v2500 = vmul.u32.u64.compose %v2499, %v2498
        %v2501 = vextract.low.u32 %v2500
        %v2502 = vextract.high.u32 %v2500
        %v2503 = vmul.u32.u64.compose %v2499, %v2494
        %v2504 = vextract.low.u32 %v2503
        %v2505 = vextract.high.u32 %v2503
        %v2506 = vmul.u32 %v2499, %v2490
        %v2507 = vadd.s32 %v2502, %v2504
        %vm2508 = vc.u32 %v2502, %v2504
        %v2509 = vadd.s32 %v2505, 1
        %v2510 = vsel %vm2508, %v2509, %v2505
        %v2511 = vadd.s32 %v2506, %v2510
        %v2512 = vadd.s32 %v2511, 536870912
        %v2513 = vshrl.u32 %v2512, 30
        %v2514 = vshll.u32 %v2513, 30
        %v2515 = vsub.s32 %v2511, %v2514
        %vm2516 = vcmp.lt.s32.totalorder %v2515, 0
        %v2517 = vsub.s32 0, %v2515
        %v2518 = vsel %vm2516, %v2517, %v2515
        %v2519 = vclz %v2518
        %v2520 = vsub.s32 %v2519, 2
        %vm2521 = vcmp.gt.s32.totalorder 0, %v2520
        %v2522 = vsel %vm2521, 0, %v2520
        %v2523 = vsub.s32 32, %v2522
        %v2524 = vshll.u32 %v2515, %v2522
        %v2525 = vshrl.u32 %v2507, %v2523
        %v2526 = vor.u32 %v2524, %v2525
        %v2527 = vsub.s32 4294967266, %v2522
        %v2528 = vadd.s32 %v2527, 127
        %v2529 = vshll.u32 %v2528, 23
        %v2530 = vor.u32 4788187, %v2529
        %v2531 = vand.u32 2147483647, %v2530
        %v2533 = vcvt.s32.f32 %v2526
        %v2534 = vmul.f32 %v2533, %v2531
        %v2535 = vxor.u32 %v2534, 2147483648
        %v2536 = vsel %vm2453, %v2535, %v2534
        %v2537 = vsub.s32 4, %v2513
        %v2538 = vsel %vm2453, %v2537, %v2513
        %v2539 = vsel %vm2452, %v473, %v2536
        %v2540 = vsel %vm2452, 0, %v2538
        %v2541 = vcosq.f32.pop %v2539
        %v2542 = vsinq.f32.pop %v2539
        %vm2543 = vweird.f32 %v473
        %v2544 = vadd.s32 %v2540, 3
        %v2545 = vand.u32 %v2544, 3
        %vm2546 = vcmp.lt.s32.totalorder %v2545, 2
        %vm2547 = vcmp.eq.s32.totalorder %v2545, 0
        %v2548 = vxor.u32 %v2542, 2147483648
        %v2549 = vsel %vm2547, %v2541, %v2548
        %vm2550 = vcmp.eq.s32.totalorder %v2545, 2
        %v2551 = vxor.u32 %v2541, 2147483648
        %v2552 = vsel %vm2550, %v2551, %v2542
        %v2553 = vsel %vm2546, %v2549, %v2552
        %v2554 = vsel %vm2543, nan, %v2553
        %v2555 = vld [vmem:[%s2] sm:$0xff]
        %v2556 = vld [vmem:[%s2 + $0x8] sm:$0xff]
        %v2557 = vld [vmem:[%s2 + $0x10] sm:$0xff]
        %v2558 = vld [vmem:[%s2 + $0x18] sm:$0xff]
        %v2559 = vld [vmem:[%s2 + $0x20] sm:$0xff]
        %v2560 = vld [vmem:[%s2 + $0x28] sm:$0xff]
        %v2561 = vld [vmem:[%s2 + $0x30] sm:$0xff]
        %v2562 = vld [vmem:[%s2 + $0x38] sm:$0xff]
        %v2563 = vld [vmem:[%s3] sm:$0xff]
        %v2564 = vld [vmem:[%s3 + $0x8] sm:$0xff]
        %v2565 = vld [vmem:[%s3 + $0x10] sm:$0xff]
        %v2566 = vld [vmem:[%s3 + $0x18] sm:$0xff]
        %v2567 = vld [vmem:[%s3 + $0x20] sm:$0xff]
        %v2568 = vld [vmem:[%s3 + $0x28] sm:$0xff]
        %v2569 = vld [vmem:[%s3 + $0x30] sm:$0xff]
        %v2570 = vld [vmem:[%s3 + $0x38] sm:$0xff]
        %2572 = vset.pattern.permute.xlu0 0
        %2573 = vperm.xlu0 %2572, %v2563
        %v2574 = vpop.permute.xlu0 %2573
        %2577 = vset.pattern.permute.xlu0 0
        %2578 = vperm.xlu0 %2577, %v2564
        %v2579 = vpop.permute.xlu0 %2578
        %2582 = vset.pattern.permute.xlu0 0
        %2583 = vperm.xlu0 %2582, %v2565
        %v2584 = vpop.permute.xlu0 %2583
        %2587 = vset.pattern.permute.xlu0 0
        %2588 = vperm.xlu0 %2587, %v2566
        %v2589 = vpop.permute.xlu0 %2588
        %2592 = vset.pattern.permute.xlu0 0
        %2593 = vperm.xlu0 %2592, %v2567
        %v2594 = vpop.permute.xlu0 %2593
        %2597 = vset.pattern.permute.xlu0 0
        %2598 = vperm.xlu0 %2597, %v2568
        %v2599 = vpop.permute.xlu0 %2598
        %2602 = vset.pattern.permute.xlu0 0
        %2603 = vperm.xlu0 %2602, %v2569
        %v2604 = vpop.permute.xlu0 %2603
        %2607 = vset.pattern.permute.xlu0 0
        %2608 = vperm.xlu0 %2607, %v2570
        %v2609 = vpop.permute.xlu0 %2608
        %vm2611 = vcmask 293888
        %v2613 = vsel %vm2611, %v2555, 0
        %v2616 = vsel %vm2611, %v2556, 0
        %v2619 = vsel %vm2611, %v2557, 0
        %v2622 = vsel %vm2611, %v2558, 0
        %v2625 = vsel %vm2611, %v2559, 0
        %v2628 = vsel %vm2611, %v2560, 0
        %v2631 = vsel %vm2611, %v2561, 0
        %v2634 = vsel %vm2611, %v2562, 0
        %v2637 = vsel %vm276, %v2242, 0
        %v2640 = vsel %vm276, %v2346, 0
        %v2643 = vsel %vm276, %v2450, 0
        %v2646 = vsel %vm276, %v2554, 0
        %2648 = vmatprep.subr.mxu0 %v682
        %2649 = vmatpush1.msra.mxu0 %v578
        %2650 = vmatprep.subr.mxu0 %v1098
        %2651 = vmatpush1.msra.mxu0 %v994
        %2652 = vmatprep.subr.mxu0 %v1514
        %2653 = vmatpush1.msra.mxu0 %v1410
        %2654 = vmatprep.subr.mxu0 %v1930
        %2655 = vmatpush1.msra.mxu0 %v1826
        %2656 = vmatprep.subr.mxu0 %v2640
        %2657 = vmatpush1.msra.mxu0 %v2637
        %2658 = vmatprep.subr.mxu0 0.0
        %2659 = vmatpush1.msra.mxu0 0.0
        %2660 = vmatprep.subr.mxu0 0.0
        %2661 = vmatpush1.msra.mxu0 0.0
        %2662 = vmatprep.subr.mxu0 0.0
        %2663 = vmatpush1.msra.mxu0 0.0
        %2664 = vmatprep.subr.mxu0 0.0
        %2665 = vmatpush1.msra.mxu0 0.0
        %2666 = vmatprep.subr.mxu0 0.0
        %2667 = vmatpush1.msra.mxu0 0.0
        %2668 = vmatprep.subr.mxu0 0.0
        %2669 = vmatpush1.msra.mxu0 0.0
        %2670 = vmatprep.subr.mxu0 0.0
        %2671 = vmatpush1.msra.mxu0 0.0
        %2672 = vmatprep.subr.mxu0 0.0
        %2673 = vmatpush1.msra.mxu0 0.0
        %2674 = vmatprep.subr.mxu0 0.0
        %2675 = vmatpush1.msra.mxu0 0.0
        %2676 = vmatprep.subr.mxu0 0.0
        %2677 = vmatpush1.msra.mxu0 0.0
        %2678 = vmatprep.subr.mxu0 0.0
        %2679 = vmatpush1.msra.mxu0 0.0
        %2680 = vmatprep.subr.mxu0 0.0
        %2681 = vmatpush1.msra.mxu0 0.0
        %2682 = vmatprep.subr.mxu0 0.0
        %2683 = vmatpush1.msra.mxu0 0.0
        %2684 = vmatprep.subr.mxu0 0.0
        %2685 = vmatpush1.msra.mxu0 0.0
        %2686 = vmatprep.subr.mxu0 0.0
        %2687 = vmatpush1.msra.mxu0 0.0
        %2688 = vmatprep.subr.mxu0 0.0
        %2689 = vmatpush1.msra.mxu0 0.0
        %2690 = vmatprep.subr.mxu0 0.0
        %2691 = vmatpush1.msra.mxu0 0.0
        %2692 = vmatprep.subr.mxu0 0.0
        %2693 = vmatpush1.msra.mxu0 0.0
        %2694 = vmatprep.subr.mxu0 0.0
        %2695 = vmatpush1.msra.mxu0 0.0
        %2696 = vmatprep.subr.mxu0 0.0
        %2697 = vmatpush1.msra.mxu0 0.0
        %2698 = vmatprep.subr.mxu0 0.0
        %2699 = vmatpush1.msra.mxu0 0.0
        %2700 = vmatprep.subr.mxu0 0.0
        %2701 = vmatpush1.msra.mxu0 0.0
        %2702 = vmatprep.subr.mxu0 0.0
        %2703 = vmatpush1.msra.mxu0 0.0
        %2704 = vmatprep.subr.mxu0 0.0
        %2705 = vmatpush1.msra.mxu0 0.0
        %2706 = vmatprep.subr.mxu0 0.0
        %2707 = vmatpush1.msra.mxu0 0.0
        %2708 = vmatprep.subr.mxu0 0.0
        %2709 = vmatpush1.msra.mxu0 0.0
        %2710 = vmatprep.subr.mxu0 0.0
        %2711 = vmatpush1.msra.mxu0 0.0
        %2712 = vmatprep.mubr.f32.mxu0 0.0
        %2713 = vmatmul.mubr.f32.gmra.mrb[0].mxu0 %v2613
        %v2714 = vpop.f32.mrb[0].mxu0
        %v2715 = vadd.f32 %v2574, %v2714
        %v2716 = vpop.f32.mrb[0].mxu0
        %v2717 = vadd.f32 %v2574, %v2716
        %2718 = vmatprep.mubr.f32.mxu0 0.0
        %2719 = vmatmul.mubr.f32.gmra.mrb[0].mxu0 %v2616
        %v2720 = vpop.f32.mrb[0].mxu0
        %v2721 = vadd.f32 %v2579, %v2720
        %v2722 = vpop.f32.mrb[0].mxu0
        %v2723 = vadd.f32 %v2579, %v2722
        %2724 = vmatprep.mubr.f32.mxu0 0.0
        %2725 = vmatmul.mubr.f32.gmra.mrb[0].mxu0 %v2619
        %v2726 = vpop.f32.mrb[0].mxu0
        %v2727 = vadd.f32 %v2584, %v2726
        %v2728 = vpop.f32.mrb[0].mxu0
        %v2729 = vadd.f32 %v2584, %v2728
        %2730 = vmatprep.mubr.f32.mxu0 0.0
        %2731 = vmatmul.mubr.f32.gmra.mrb[0].mxu0 %v2622
        %v2732 = vpop.f32.mrb[0].mxu0
        %v2733 = vadd.f32 %v2589, %v2732
        %v2734 = vpop.f32.mrb[0].mxu0
        %v2735 = vadd.f32 %v2589, %v2734
        %2736 = vmatprep.mubr.f32.mxu0 0.0
        %2737 = vmatmul.mubr.f32.gmra.mrb[0].mxu0 %v2625
        %v2738 = vpop.f32.mrb[0].mxu0
        %v2739 = vadd.f32 %v2594, %v2738
        %v2740 = vpop.f32.mrb[0].mxu0
        %v2741 = vadd.f32 %v2594, %v2740
        %2742 = vmatprep.mubr.f32.mxu0 0.0
        %2743 = vmatmul.mubr.f32.gmra.mrb[0].mxu0 %v2628
        %v2744 = vpop.f32.mrb[0].mxu0
        %v2745 = vadd.f32 %v2599, %v2744
        %v2746 = vpop.f32.mrb[0].mxu0
        %v2747 = vadd.f32 %v2599, %v2746
        %2748 = vmatprep.mubr.f32.mxu0 0.0
        %2749 = vmatmul.mubr.f32.gmra.mrb[0].mxu0 %v2631
        %v2750 = vpop.f32.mrb[0].mxu0
        %v2751 = vadd.f32 %v2604, %v2750
        %v2752 = vpop.f32.mrb[0].mxu0
        %v2753 = vadd.f32 %v2604, %v2752
        %2754 = vmatprep.mubr.f32.mxu0 0.0
        %2755 = vmatmul.mubr.f32.gmra.mrb[0].mxu0 %v2634
        %v2756 = vpop.f32.mrb[0].mxu0
        %v2757 = vadd.f32 %v2609, %v2756
        %v2758 = vpop.f32.mrb[0].mxu0
        %v2759 = vadd.f32 %v2609, %v2758
        %2760 = vdwg.mxu0
        %2761 = vmatprep.subr.mxu0 %v890
        %2762 = vmatpush1.msra.mxu0 %v786
        %2763 = vmatprep.subr.mxu0 %v1306
        %2764 = vmatpush1.msra.mxu0 %v1202
        %2765 = vmatprep.subr.mxu0 %v1722
        %2766 = vmatpush1.msra.mxu0 %v1618
        %2767 = vmatprep.subr.mxu0 %v2138
        %2768 = vmatpush1.msra.mxu0 %v2034
        %2769 = vmatprep.subr.mxu0 %v2646
        %2770 = vmatpush1.msra.mxu0 %v2643
        %2771 = vmatprep.subr.mxu0 0.0
        %2772 = vmatpush1.msra.mxu0 0.0
        %2773 = vmatprep.subr.mxu0 0.0
        %2774 = vmatpush1.msra.mxu0 0.0
        %2775 = vmatprep.subr.mxu0 0.0
        %2776 = vmatpush1.msra.mxu0 0.0
        %2777 = vmatprep.subr.mxu0 0.0
        %2778 = vmatpush1.msra.mxu0 0.0
        %2779 = vmatprep.subr.mxu0 0.0
        %2780 = vmatpush1.msra.mxu0 0.0
        %2781 = vmatprep.subr.mxu0 0.0
        %2782 = vmatpush1.msra.mxu0 0.0
        %2783 = vmatprep.subr.mxu0 0.0
        %2784 = vmatpush1.msra.mxu0 0.0
        %2785 = vmatprep.subr.mxu0 0.0
        %2786 = vmatpush1.msra.mxu0 0.0
        %2787 = vmatprep.subr.mxu0 0.0
        %2788 = vmatpush1.msra.mxu0 0.0
        %2789 = vmatprep.subr.mxu0 0.0
        %2790 = vmatpush1.msra.mxu0 0.0
        %2791 = vmatprep.subr.mxu0 0.0
        %2792 = vmatpush1.msra.mxu0 0.0
        %2793 = vmatprep.subr.mxu0 0.0
        %2794 = vmatpush1.msra.mxu0 0.0
        %2795 = vmatprep.subr.mxu0 0.0
        %2796 = vmatpush1.msra.mxu0 0.0
        %2797 = vmatprep.subr.mxu0 0.0
        %2798 = vmatpush1.msra.mxu0 0.0
        %2799 = vmatprep.subr.mxu0 0.0
        %2800 = vmatpush1.msra.mxu0 0.0
        %2801 = vmatprep.subr.mxu0 0.0
        %2802 = vmatpush1.msra.mxu0 0.0
        %2803 = vmatprep.subr.mxu0 0.0
        %2804 = vmatpush1.msra.mxu0 0.0
        %2805 = vmatprep.subr.mxu0 0.0
        %2806 = vmatpush1.msra.mxu0 0.0
        %2807 = vmatprep.subr.mxu0 0.0
        %2808 = vmatpush1.msra.mxu0 0.0
        %2809 = vmatprep.subr.mxu0 0.0
        %2810 = vmatpush1.msra.mxu0 0.0
        %2811 = vmatprep.subr.mxu0 0.0
        %2812 = vmatpush1.msra.mxu0 0.0
        %2813 = vmatprep.subr.mxu0 0.0
        %2814 = vmatpush1.msra.mxu0 0.0
        %2815 = vmatprep.subr.mxu0 0.0
        %2816 = vmatpush1.msra.mxu0 0.0
        %2817 = vmatprep.subr.mxu0 0.0
        %2818 = vmatpush1.msra.mxu0 0.0
        %2819 = vmatprep.subr.mxu0 0.0
        %2820 = vmatpush1.msra.mxu0 0.0
        %2821 = vmatprep.subr.mxu0 0.0
        %2822 = vmatpush1.msra.mxu0 0.0
        %2823 = vmatprep.subr.mxu0 0.0
        %2824 = vmatpush1.msra.mxu0 0.0
        %2825 = vmatprep.mubr.f32.mxu0 0.0
        %2826 = vmatmul.mubr.f32.gmra.mrb[0].mxu0 %v2613
        %v2827 = vpop.f32.mrb[0].mxu0
        %v2828 = vadd.f32 %v2574, %v2827
        %v2829 = vpop.f32.mrb[0].mxu0
        %v2830 = vadd.f32 %v2574, %v2829
        %2831 = vmatprep.mubr.f32.mxu0 0.0
        %2832 = vmatmul.mubr.f32.gmra.mrb[0].mxu0 %v2616
        %v2833 = vpop.f32.mrb[0].mxu0
        %v2834 = vadd.f32 %v2579, %v2833
        %v2835 = vpop.f32.mrb[0].mxu0
        %v2836 = vadd.f32 %v2579, %v2835
        %2837 = vmatprep.mubr.f32.mxu0 0.0
        %2838 = vmatmul.mubr.f32.gmra.mrb[0].mxu0 %v2619
        %v2839 = vpop.f32.mrb[0].mxu0
        %v2840 = vadd.f32 %v2584, %v2839
        %v2841 = vpop.f32.mrb[0].mxu0
        %v2842 = vadd.f32 %v2584, %v2841
        %2843 = vmatprep.mubr.f32.mxu0 0.0
        %2844 = vmatmul.mubr.f32.gmra.mrb[0].mxu0 %v2622
        %v2845 = vpop.f32.mrb[0].mxu0
        %v2846 = vadd.f32 %v2589, %v2845
        %v2847 = vpop.f32.mrb[0].mxu0
        %v2848 = vadd.f32 %v2589, %v2847
        %2849 = vmatprep.mubr.f32.mxu0 0.0
        %2850 = vmatmul.mubr.f32.gmra.mrb[0].mxu0 %v2625
        %v2851 = vpop.f32.mrb[0].mxu0
        %v2852 = vadd.f32 %v2594, %v2851
        %v2853 = vpop.f32.mrb[0].mxu0
        %v2854 = vadd.f32 %v2594, %v2853
        %2855 = vmatprep.mubr.f32.mxu0 0.0
        %2856 = vmatmul.mubr.f32.gmra.mrb[0].mxu0 %v2628
        %v2857 = vpop.f32.mrb[0].mxu0
        %v2858 = vadd.f32 %v2599, %v2857
        %v2859 = vpop.f32.mrb[0].mxu0
        %v2860 = vadd.f32 %v2599, %v2859
        %2861 = vmatprep.mubr.f32.mxu0 0.0
        %2862 = vmatmul.mubr.f32.gmra.mrb[0].mxu0 %v2631
        %v2863 = vpop.f32.mrb[0].mxu0
        %v2864 = vadd.f32 %v2604, %v2863
        %v2865 = vpop.f32.mrb[0].mxu0
        %v2866 = vadd.f32 %v2604, %v2865
        %2867 = vmatprep.mubr.f32.mxu0 0.0
        %2868 = vmatmul.mubr.f32.gmra.mrb[0].mxu0 %v2634
        %v2869 = vpop.f32.mrb[0].mxu0
        %v2870 = vadd.f32 %v2609, %v2869
        %v2871 = vpop.f32.mrb[0].mxu0
        %v2872 = vadd.f32 %v2609, %v2871
        %2873 = vdwg.mxu0
        %v2874 = vmax.f32 %v2715, 0.0
        %v2875 = vmax.f32 %v2717, 0.0
        %v2876 = vmax.f32 %v2828, 0.0
        %v2877 = vmax.f32 %v2830, 0.0
        %v2878 = vmax.f32 %v2721, 0.0
        %v2879 = vmax.f32 %v2723, 0.0
        %v2880 = vmax.f32 %v2834, 0.0
        %v2881 = vmax.f32 %v2836, 0.0
        %v2882 = vmax.f32 %v2727, 0.0
        %v2883 = vmax.f32 %v2729, 0.0
        %v2884 = vmax.f32 %v2840, 0.0
        %v2885 = vmax.f32 %v2842, 0.0
        %v2886 = vmax.f32 %v2733, 0.0
        %v2887 = vmax.f32 %v2735, 0.0
        %v2888 = vmax.f32 %v2846, 0.0
        %v2889 = vmax.f32 %v2848, 0.0
        %v2890 = vmax.f32 %v2739, 0.0
        %v2891 = vmax.f32 %v2741, 0.0
        %v2892 = vmax.f32 %v2852, 0.0
        %v2893 = vmax.f32 %v2854, 0.0
        %v2894 = vmax.f32 %v2745, 0.0
        %v2895 = vmax.f32 %v2747, 0.0
        %v2896 = vmax.f32 %v2858, 0.0
        %v2897 = vmax.f32 %v2860, 0.0
        %v2898 = vmax.f32 %v2751, 0.0
        %v2899 = vmax.f32 %v2753, 0.0
        %v2900 = vmax.f32 %v2864, 0.0
        %v2901 = vmax.f32 %v2866, 0.0
        %v2902 = vmax.f32 %v2757, 0.0
        %v2903 = vmax.f32 %v2759, 0.0
        %v2904 = vmax.f32 %v2870, 0.0
        %v2905 = vmax.f32 %v2872, 0.0
        %v2906 = vld [vmem:[%s4] sm:$0xff]
        %v2907 = vld [vmem:[%s4 + $0x8] sm:$0xff]
        %v2908 = vld [vmem:[%s4 + $0x10] sm:$0xff]
        %v2909 = vld [vmem:[%s4 + $0x18] sm:$0xff]
        %v2910 = vld [vmem:[%s4 + $0x20] sm:$0xff]
        %v2911 = vld [vmem:[%s4 + $0x28] sm:$0xff]
        %v2912 = vld [vmem:[%s4 + $0x30] sm:$0xff]
        %v2913 = vld [vmem:[%s4 + $0x38] sm:$0xff]
        %vm2914 = vcmask 523264
        %v2916 = vsel %vm2914, %v2906, 0
        %v2919 = vsel %vm2914, %v2907, 0
        %v2922 = vsel %vm2914, %v2908, 0
        %v2925 = vsel %vm2914, %v2909, 0
        %v2928 = vsel %vm2914, %v2910, 0
        %v2931 = vsel %vm2914, %v2911, 0
        %v2934 = vsel %vm2914, %v2912, 0
        %v2937 = vsel %vm2914, %v2913, 0
        %2939 = vmatprep.subr.mxu0 %v2875
        %2940 = vmatpush1.msra.mxu0 %v2874
        %2941 = vmatprep.subr.mxu0 %v2879
        %2942 = vmatpush1.msra.mxu0 %v2878
        %2943 = vmatprep.subr.mxu0 %v2883
        %2944 = vmatpush1.msra.mxu0 %v2882
        %2945 = vmatprep.subr.mxu0 %v2887
        %2946 = vmatpush1.msra.mxu0 %v2886
        %2947 = vmatprep.subr.mxu0 %v2891
        %2948 = vmatpush1.msra.mxu0 %v2890
        %2949 = vmatprep.subr.mxu0 %v2895
        %2950 = vmatpush1.msra.mxu0 %v2894
        %2951 = vmatprep.subr.mxu0 %v2899
        %2952 = vmatpush1.msra.mxu0 %v2898
        %2953 = vmatprep.subr.mxu0 %v2903
        %2954 = vmatpush1.msra.mxu0 %v2902
        %2955 = vmatprep.subr.mxu0 0.0
        %2956 = vmatpush1.msra.mxu0 0.0
        %2957 = vmatprep.subr.mxu0 0.0
        %2958 = vmatpush1.msra.mxu0 0.0
        %2959 = vmatprep.subr.mxu0 0.0
        %2960 = vmatpush1.msra.mxu0 0.0
        %2961 = vmatprep.subr.mxu0 0.0
        %2962 = vmatpush1.msra.mxu0 0.0
        %2963 = vmatprep.subr.mxu0 0.0
        %2964 = vmatpush1.msra.mxu0 0.0
        %2965 = vmatprep.subr.mxu0 0.0
        %2966 = vmatpush1.msra.mxu0 0.0
        %2967 = vmatprep.subr.mxu0 0.0
        %2968 = vmatpush1.msra.mxu0 0.0
        %2969 = vmatprep.subr.mxu0 0.0
        %2970 = vmatpush1.msra.mxu0 0.0
        %2971 = vmatprep.subr.mxu0 0.0
        %2972 = vmatpush1.msra.mxu0 0.0
        %2973 = vmatprep.subr.mxu0 0.0
        %2974 = vmatpush1.msra.mxu0 0.0
        %2975 = vmatprep.subr.mxu0 0.0
        %2976 = vmatpush1.msra.mxu0 0.0
        %2977 = vmatprep.subr.mxu0 0.0
        %2978 = vmatpush1.msra.mxu0 0.0
        %2979 = vmatprep.subr.mxu0 0.0
        %2980 = vmatpush1.msra.mxu0 0.0
        %2981 = vmatprep.subr.mxu0 0.0
        %2982 = vmatpush1.msra.mxu0 0.0
        %2983 = vmatprep.subr.mxu0 0.0
        %2984 = vmatpush1.msra.mxu0 0.0
        %2985 = vmatprep.subr.mxu0 0.0
        %2986 = vmatpush1.msra.mxu0 0.0
        %2987 = vmatprep.subr.mxu0 0.0
        %2988 = vmatpush1.msra.mxu0 0.0
        %2989 = vmatprep.subr.mxu0 0.0
        %2990 = vmatpush1.msra.mxu0 0.0
        %2991 = vmatprep.subr.mxu0 0.0
        %2992 = vmatpush1.msra.mxu0 0.0
        %2993 = vmatprep.subr.mxu0 0.0
        %2994 = vmatpush1.msra.mxu0 0.0
        %2995 = vmatprep.subr.mxu0 0.0
        %2996 = vmatpush1.msra.mxu0 0.0
        %2997 = vmatprep.subr.mxu0 0.0
        %2998 = vmatpush1.msra.mxu0 0.0
        %2999 = vmatprep.subr.mxu0 0.0
        %3000 = vmatpush1.msra.mxu0 0.0
        %3001 = vmatprep.subr.mxu0 0.0
        %3002 = vmatpush1.msra.mxu0 0.0
        %3003 = vmatprep.mubr.f32.mxu0 0.0
        %3004 = vmatmul.mubr.f32.gmra.mrb[0].mxu0 %v2916
        %v3005 = vpop.f32.mrb[0].mxu0
        %v3006 = vadd.f32 0.0, %v3005
        %v3007 = vpop.f32.mrb[0].mxu0
        %v3008 = vadd.f32 0.0, %v3007
        %3009 = vmatprep.mubr.f32.mxu0 0.0
        %3010 = vmatmul.mubr.f32.gmra.mrb[0].mxu0 %v2919
        %v3011 = vpop.f32.mrb[0].mxu0
        %v3012 = vadd.f32 0.0, %v3011
        %v3013 = vpop.f32.mrb[0].mxu0
        %v3014 = vadd.f32 0.0, %v3013
        %3015 = vmatprep.mubr.f32.mxu0 0.0
        %3016 = vmatmul.mubr.f32.gmra.mrb[0].mxu0 %v2922
        %v3017 = vpop.f32.mrb[0].mxu0
        %v3018 = vadd.f32 0.0, %v3017
        %v3019 = vpop.f32.mrb[0].mxu0
        %v3020 = vadd.f32 0.0, %v3019
        %3021 = vmatprep.mubr.f32.mxu0 0.0
        %3022 = vmatmul.mubr.f32.gmra.mrb[0].mxu0 %v2925
        %v3023 = vpop.f32.mrb[0].mxu0
        %v3024 = vadd.f32 0.0, %v3023
        %v3025 = vpop.f32.mrb[0].mxu0
        %v3026 = vadd.f32 0.0, %v3025
        %3027 = vmatprep.mubr.f32.mxu0 0.0
        %3028 = vmatmul.mubr.f32.gmra.mrb[0].mxu0 %v2928
        %v3029 = vpop.f32.mrb[0].mxu0
        %v3030 = vadd.f32 0.0, %v3029
        %v3031 = vpop.f32.mrb[0].mxu0
        %v3032 = vadd.f32 0.0, %v3031
        %3033 = vmatprep.mubr.f32.mxu0 0.0
        %3034 = vmatmul.mubr.f32.gmra.mrb[0].mxu0 %v2931
        %v3035 = vpop.f32.mrb[0].mxu0
        %v3036 = vadd.f32 0.0, %v3035
        %v3037 = vpop.f32.mrb[0].mxu0
        %v3038 = vadd.f32 0.0, %v3037
        %3039 = vmatprep.mubr.f32.mxu0 0.0
        %3040 = vmatmul.mubr.f32.gmra.mrb[0].mxu0 %v2934
        %v3041 = vpop.f32.mrb[0].mxu0
        %v3042 = vadd.f32 0.0, %v3041
        %v3043 = vpop.f32.mrb[0].mxu0
        %v3044 = vadd.f32 0.0, %v3043
        %3045 = vmatprep.mubr.f32.mxu0 0.0
        %3046 = vmatmul.mubr.f32.gmra.mrb[0].mxu0 %v2937
        %v3047 = vpop.f32.mrb[0].mxu0
        %v3048 = vadd.f32 0.0, %v3047
        %v3049 = vpop.f32.mrb[0].mxu0
        %v3050 = vadd.f32 0.0, %v3049
        %3051 = vdwg.mxu0
        %3052 = vmatprep.subr.mxu0 %v2877
        %3053 = vmatpush1.msra.mxu0 %v2876
        %3054 = vmatprep.subr.mxu0 %v2881
        %3055 = vmatpush1.msra.mxu0 %v2880
        %3056 = vmatprep.subr.mxu0 %v2885
        %3057 = vmatpush1.msra.mxu0 %v2884
        %3058 = vmatprep.subr.mxu0 %v2889
        %3059 = vmatpush1.msra.mxu0 %v2888
        %3060 = vmatprep.subr.mxu0 %v2893
        %3061 = vmatpush1.msra.mxu0 %v2892
        %3062 = vmatprep.subr.mxu0 %v2897
        %3063 = vmatpush1.msra.mxu0 %v2896
        %3064 = vmatprep.subr.mxu0 %v2901
        %3065 = vmatpush1.msra.mxu0 %v2900
        %3066 = vmatprep.subr.mxu0 %v2905
        %3067 = vmatpush1.msra.mxu0 %v2904
        %3068 = vmatprep.subr.mxu0 0.0
        %3069 = vmatpush1.msra.mxu0 0.0
        %3070 = vmatprep.subr.mxu0 0.0
        %3071 = vmatpush1.msra.mxu0 0.0
        %3072 = vmatprep.subr.mxu0 0.0
        %3073 = vmatpush1.msra.mxu0 0.0
        %3074 = vmatprep.subr.mxu0 0.0
        %3075 = vmatpush1.msra.mxu0 0.0
        %3076 = vmatprep.subr.mxu0 0.0
        %3077 = vmatpush1.msra.mxu0 0.0
        %3078 = vmatprep.subr.mxu0 0.0
        %3079 = vmatpush1.msra.mxu0 0.0
        %3080 = vmatprep.subr.mxu0 0.0
        %3081 = vmatpush1.msra.mxu0 0.0
        %3082 = vmatprep.subr.mxu0 0.0
        %3083 = vmatpush1.msra.mxu0 0.0
        %3084 = vmatprep.subr.mxu0 0.0
        %3085 = vmatpush1.msra.mxu0 0.0
        %3086 = vmatprep.subr.mxu0 0.0
        %3087 = vmatpush1.msra.mxu0 0.0
        %3088 = vmatprep.subr.mxu0 0.0
        %3089 = vmatpush1.msra.mxu0 0.0
        %3090 = vmatprep.subr.mxu0 0.0
        %3091 = vmatpush1.msra.mxu0 0.0
        %3092 = vmatprep.subr.mxu0 0.0
        %3093 = vmatpush1.msra.mxu0 0.0
        %3094 = vmatprep.subr.mxu0 0.0
        %3095 = vmatpush1.msra.mxu0 0.0
        %3096 = vmatprep.subr.mxu0 0.0
        %3097 = vmatpush1.msra.mxu0 0.0
        %3098 = vmatprep.subr.mxu0 0.0
        %3099 = vmatpush1.msra.mxu0 0.0
        %3100 = vmatprep.subr.mxu0 0.0
        %3101 = vmatpush1.msra.mxu0 0.0
        %3102 = vmatprep.subr.mxu0 0.0
        %3103 = vmatpush1.msra.mxu0 0.0
        %3104 = vmatprep.subr.mxu0 0.0
        %3105 = vmatpush1.msra.mxu0 0.0
        %3106 = vmatprep.subr.mxu0 0.0
        %3107 = vmatpush1.msra.mxu0 0.0
        %3108 = vmatprep.subr.mxu0 0.0
        %3109 = vmatpush1.msra.mxu0 0.0
        %3110 = vmatprep.subr.mxu0 0.0
        %3111 = vmatpush1.msra.mxu0 0.0
        %3112 = vmatprep.subr.mxu0 0.0
        %3113 = vmatpush1.msra.mxu0 0.0
        %3114 = vmatprep.subr.mxu0 0.0
        %3115 = vmatpush1.msra.mxu0 0.0
        %3116 = vmatprep.mubr.f32.mxu0 0.0
        %3117 = vmatmul.mubr.f32.gmra.mrb[0].mxu0 %v2916
        %v3118 = vpop.f32.mrb[0].mxu0
        %v3119 = vadd.f32 0.0, %v3118
        %v3120 = vpop.f32.mrb[0].mxu0
        %v3121 = vadd.f32 0.0, %v3120
        %3122 = vmatprep.mubr.f32.mxu0 0.0
        %3123 = vmatmul.mubr.f32.gmra.mrb[0].mxu0 %v2919
        %v3124 = vpop.f32.mrb[0].mxu0
        %v3125 = vadd.f32 0.0, %v3124
        %v3126 = vpop.f32.mrb[0].mxu0
        %v3127 = vadd.f32 0.0, %v3126
        %3128 = vmatprep.mubr.f32.mxu0 0.0
        %3129 = vmatmul.mubr.f32.gmra.mrb[0].mxu0 %v2922
        %v3130 = vpop.f32.mrb[0].mxu0
        %v3131 = vadd.f32 0.0, %v3130
        %v3132 = vpop.f32.mrb[0].mxu0
        %v3133 = vadd.f32 0.0, %v3132
        %3134 = vmatprep.mubr.f32.mxu0 0.0
        %3135 = vmatmul.mubr.f32.gmra.mrb[0].mxu0 %v2925
        %v3136 = vpop.f32.mrb[0].mxu0
        %v3137 = vadd.f32 0.0, %v3136
        %v3138 = vpop.f32.mrb[0].mxu0
        %v3139 = vadd.f32 0.0, %v3138
        %3140 = vmatprep.mubr.f32.mxu0 0.0
        %3141 = vmatmul.mubr.f32.gmra.mrb[0].mxu0 %v2928
        %v3142 = vpop.f32.mrb[0].mxu0
        %v3143 = vadd.f32 0.0, %v3142
        %v3144 = vpop.f32.mrb[0].mxu0
        %v3145 = vadd.f32 0.0, %v3144
        %3146 = vmatprep.mubr.f32.mxu0 0.0
        %3147 = vmatmul.mubr.f32.gmra.mrb[0].mxu0 %v2931
        %v3148 = vpop.f32.mrb[0].mxu0
        %v3149 = vadd.f32 0.0, %v3148
        %v3150 = vpop.f32.mrb[0].mxu0
        %v3151 = vadd.f32 0.0, %v3150
        %3152 = vmatprep.mubr.f32.mxu0 0.0
        %3153 = vmatmul.mubr.f32.gmra.mrb[0].mxu0 %v2934
        %v3154 = vpop.f32.mrb[0].mxu0
        %v3155 = vadd.f32 0.0, %v3154
        %v3156 = vpop.f32.mrb[0].mxu0
        %v3157 = vadd.f32 0.0, %v3156
        %3158 = vmatprep.mubr.f32.mxu0 0.0
        %3159 = vmatmul.mubr.f32.gmra.mrb[0].mxu0 %v2937
        %v3160 = vpop.f32.mrb[0].mxu0
        %v3161 = vadd.f32 0.0, %v3160
        %v3162 = vpop.f32.mrb[0].mxu0
        %v3163 = vadd.f32 0.0, %v3162
        %3164 = vdwg.mxu0
        %v3165 = vmax.f32 %v3006, 0.0
        %v3166 = vmax.f32 %v3008, 0.0
        %v3167 = vmax.f32 %v3119, 0.0
        %v3168 = vmax.f32 %v3121, 0.0
        %v3169 = vmax.f32 %v3012, 0.0
        %v3170 = vmax.f32 %v3014, 0.0
        %v3171 = vmax.f32 %v3125, 0.0
        %v3172 = vmax.f32 %v3127, 0.0
        %v3173 = vmax.f32 %v3018, 0.0
        %v3174 = vmax.f32 %v3020, 0.0
        %v3175 = vmax.f32 %v3131, 0.0
        %v3176 = vmax.f32 %v3133, 0.0
        %v3177 = vmax.f32 %v3024, 0.0
        %v3178 = vmax.f32 %v3026, 0.0
        %v3179 = vmax.f32 %v3137, 0.0
        %v3180 = vmax.f32 %v3139, 0.0
        %v3181 = vmax.f32 %v3030, 0.0
        %v3182 = vmax.f32 %v3032, 0.0
        %v3183 = vmax.f32 %v3143, 0.0
        %v3184 = vmax.f32 %v3145, 0.0
        %v3185 = vmax.f32 %v3036, 0.0
        %v3186 = vmax.f32 %v3038, 0.0
        %v3187 = vmax.f32 %v3149, 0.0
        %v3188 = vmax.f32 %v3151, 0.0
        %v3189 = vmax.f32 %v3042, 0.0
        %v3190 = vmax.f32 %v3044, 0.0
        %v3191 = vmax.f32 %v3155, 0.0
        %v3192 = vmax.f32 %v3157, 0.0
        %v3193 = vmax.f32 %v3048, 0.0
        %v3194 = vmax.f32 %v3050, 0.0
        %v3195 = vmax.f32 %v3161, 0.0
        %v3196 = vmax.f32 %v3163, 0.0
        %v3197 = vld [vmem:[%s5] sm:$0xff]
        %v3198 = vld [vmem:[%s5 + $0x8] sm:$0xff]
        %v3200 = vsel %vm2914, %v3197, 0
        %v3203 = vsel %vm2914, %v3198, 0
        %3205 = vmatprep.subr.mxu0 %v3166
        %3206 = vmatpush1.msra.mxu0 %v3165
        %3207 = vmatprep.subr.mxu0 %v3170
        %3208 = vmatpush1.msra.mxu0 %v3169
        %3209 = vmatprep.subr.mxu0 %v3174
        %3210 = vmatpush1.msra.mxu0 %v3173
        %3211 = vmatprep.subr.mxu0 %v3178
        %3212 = vmatpush1.msra.mxu0 %v3177
        %3213 = vmatprep.subr.mxu0 %v3182
        %3214 = vmatpush1.msra.mxu0 %v3181
        %3215 = vmatprep.subr.mxu0 %v3186
        %3216 = vmatpush1.msra.mxu0 %v3185
        %3217 = vmatprep.subr.mxu0 %v3190
        %3218 = vmatpush1.msra.mxu0 %v3189
        %3219 = vmatprep.subr.mxu0 %v3194
        %3220 = vmatpush1.msra.mxu0 %v3193
        %3221 = vmatprep.subr.mxu0 0.0
        %3222 = vmatpush1.msra.mxu0 0.0
        %3223 = vmatprep.subr.mxu0 0.0
        %3224 = vmatpush1.msra.mxu0 0.0
        %3225 = vmatprep.subr.mxu0 0.0
        %3226 = vmatpush1.msra.mxu0 0.0
        %3227 = vmatprep.subr.mxu0 0.0
        %3228 = vmatpush1.msra.mxu0 0.0
        %3229 = vmatprep.subr.mxu0 0.0
        %3230 = vmatpush1.msra.mxu0 0.0
        %3231 = vmatprep.subr.mxu0 0.0
        %3232 = vmatpush1.msra.mxu0 0.0
        %3233 = vmatprep.subr.mxu0 0.0
        %3234 = vmatpush1.msra.mxu0 0.0
        %3235 = vmatprep.subr.mxu0 0.0
        %3236 = vmatpush1.msra.mxu0 0.0
        %3237 = vmatprep.subr.mxu0 0.0
        %3238 = vmatpush1.msra.mxu0 0.0
        %3239 = vmatprep.subr.mxu0 0.0
        %3240 = vmatpush1.msra.mxu0 0.0
        %3241 = vmatprep.subr.mxu0 0.0
        %3242 = vmatpush1.msra.mxu0 0.0
        %3243 = vmatprep.subr.mxu0 0.0
        %3244 = vmatpush1.msra.mxu0 0.0
        %3245 = vmatprep.subr.mxu0 0.0
        %3246 = vmatpush1.msra.mxu0 0.0
        %3247 = vmatprep.subr.mxu0 0.0
        %3248 = vmatpush1.msra.mxu0 0.0
        %3249 = vmatprep.subr.mxu0 0.0
        %3250 = vmatpush1.msra.mxu0 0.0
        %3251 = vmatprep.subr.mxu0 0.0
        %3252 = vmatpush1.msra.mxu0 0.0
        %3253 = vmatprep.subr.mxu0 0.0
        %3254 = vmatpush1.msra.mxu0 0.0
        %3255 = vmatprep.subr.mxu0 0.0
        %3256 = vmatpush1.msra.mxu0 0.0
        %3257 = vmatprep.subr.mxu0 0.0
        %3258 = vmatpush1.msra.mxu0 0.0
        %3259 = vmatprep.subr.mxu0 0.0
        %3260 = vmatpush1.msra.mxu0 0.0
        %3261 = vmatprep.subr.mxu0 0.0
        %3262 = vmatpush1.msra.mxu0 0.0
        %3263 = vmatprep.subr.mxu0 0.0
        %3264 = vmatpush1.msra.mxu0 0.0
        %3265 = vmatprep.subr.mxu0 0.0
        %3266 = vmatpush1.msra.mxu0 0.0
        %3267 = vmatprep.subr.mxu0 0.0
        %3268 = vmatpush1.msra.mxu0 0.0
        %3269 = vmatprep.mubr.f32.mxu0 0.0
        %3270 = vmatmul.mubr.f32.gmra.mrb[0].mxu0 %v3200
        %v3271 = vpop.f32.mrb[0].mxu0
        %v3272 = vadd.f32 0.0, %v3271
        %v3273 = vpop.f32.mrb[0].mxu0
        %v3274 = vadd.f32 0.0, %v3273
        %3275 = vmatprep.mubr.f32.mxu0 0.0
        %3276 = vmatmul.mubr.f32.gmra.mrb[0].mxu0 %v3203
        %v3277 = vpop.f32.mrb[0].mxu0
        %v3278 = vadd.f32 0.0, %v3277
        %v3279 = vpop.f32.mrb[0].mxu0
        %v3280 = vadd.f32 0.0, %v3279
        %3281 = vdwg.mxu0
        %3282 = vmatprep.subr.mxu0 %v3168
        %3283 = vmatpush1.msra.mxu0 %v3167
        %3284 = vmatprep.subr.mxu0 %v3172
        %3285 = vmatpush1.msra.mxu0 %v3171
        %3286 = vmatprep.subr.mxu0 %v3176
        %3287 = vmatpush1.msra.mxu0 %v3175
        %3288 = vmatprep.subr.mxu0 %v3180
        %3289 = vmatpush1.msra.mxu0 %v3179
        %3290 = vmatprep.subr.mxu0 %v3184
        %3291 = vmatpush1.msra.mxu0 %v3183
        %3292 = vmatprep.subr.mxu0 %v3188
        %3293 = vmatpush1.msra.mxu0 %v3187
        %3294 = vmatprep.subr.mxu0 %v3192
        %3295 = vmatpush1.msra.mxu0 %v3191
        %3296 = vmatprep.subr.mxu0 %v3196
        %3297 = vmatpush1.msra.mxu0 %v3195
        %3298 = vmatprep.subr.mxu0 0.0
        %3299 = vmatpush1.msra.mxu0 0.0
        %3300 = vmatprep.subr.mxu0 0.0
        %3301 = vmatpush1.msra.mxu0 0.0
        %3302 = vmatprep.subr.mxu0 0.0
        %3303 = vmatpush1.msra.mxu0 0.0
        %3304 = vmatprep.subr.mxu0 0.0
        %3305 = vmatpush1.msra.mxu0 0.0
        %3306 = vmatprep.subr.mxu0 0.0
        %3307 = vmatpush1.msra.mxu0 0.0
        %3308 = vmatprep.subr.mxu0 0.0
        %3309 = vmatpush1.msra.mxu0 0.0
        %3310 = vmatprep.subr.mxu0 0.0
        %3311 = vmatpush1.msra.mxu0 0.0
        %3312 = vmatprep.subr.mxu0 0.0
        %3313 = vmatpush1.msra.mxu0 0.0
        %3314 = vmatprep.subr.mxu0 0.0
        %3315 = vmatpush1.msra.mxu0 0.0
        %3316 = vmatprep.subr.mxu0 0.0
        %3317 = vmatpush1.msra.mxu0 0.0
        %3318 = vmatprep.subr.mxu0 0.0
        %3319 = vmatpush1.msra.mxu0 0.0
        %3320 = vmatprep.subr.mxu0 0.0
        %3321 = vmatpush1.msra.mxu0 0.0
        %3322 = vmatprep.subr.mxu0 0.0
        %3323 = vmatpush1.msra.mxu0 0.0
        %3324 = vmatprep.subr.mxu0 0.0
        %3325 = vmatpush1.msra.mxu0 0.0
        %3326 = vmatprep.subr.mxu0 0.0
        %3327 = vmatpush1.msra.mxu0 0.0
        %3328 = vmatprep.subr.mxu0 0.0
        %3329 = vmatpush1.msra.mxu0 0.0
        %3330 = vmatprep.subr.mxu0 0.0
        %3331 = vmatpush1.msra.mxu0 0.0
        %3332 = vmatprep.subr.mxu0 0.0
        %3333 = vmatpush1.msra.mxu0 0.0
        %3334 = vmatprep.subr.mxu0 0.0
        %3335 = vmatpush1.msra.mxu0 0.0
        %3336 = vmatprep.subr.mxu0 0.0
        %3337 = vmatpush1.msra.mxu0 0.0
        %3338 = vmatprep.subr.mxu0 0.0
        %3339 = vmatpush1.msra.mxu0 0.0
        %3340 = vmatprep.subr.mxu0 0.0
        %3341 = vmatpush1.msra.mxu0 0.0
        %3342 = vmatprep.subr.mxu0 0.0
        %3343 = vmatpush1.msra.mxu0 0.0
        %3344 = vmatprep.subr.mxu0 0.0
        %3345 = vmatpush1.msra.mxu0 0.0
        %3346 = vmatprep.mubr.f32.mxu0 0.0
        %3347 = vmatmul.mubr.f32.gmra.mrb[0].mxu0 %v3200
        %v3348 = vpop.f32.mrb[0].mxu0
        %v3349 = vadd.f32 0.0, %v3348
        %v3350 = vpop.f32.mrb[0].mxu0
        %v3351 = vadd.f32 0.0, %v3350
        %3352 = vmatprep.mubr.f32.mxu0 0.0
        %3353 = vmatmul.mubr.f32.gmra.mrb[0].mxu0 %v3203
        %v3354 = vpop.f32.mrb[0].mxu0
        %v3355 = vadd.f32 0.0, %v3354
        %v3356 = vpop.f32.mrb[0].mxu0
        %v3357 = vadd.f32 0.0, %v3356
        %3358 = vdwg.mxu0
        %3359 = vst [vmem:[%s241] sm:$0xff] %v3272
        %3360 = vst [vmem:[%s241 + $0x8] sm:$0xff] %v3274
        %3361 = vst [vmem:[%s241 + $0x10] sm:$0xff] %v3349
        %3362 = vst [vmem:[%s241 + $0x18] sm:$0xff] %v3351
        %3363 = vst [vmem:[%s241 + $0x20] sm:$0xff] %v3278
        %3364 = vst [vmem:[%s241 + $0x28] sm:$0xff] %v3280
        %3365 = vst [vmem:[%s241 + $0x30] sm:$0xff] %v3355
        %3366 = vst [vmem:[%s241 + $0x38] sm:$0xff] %v3357
        %s3367 = sand.u32 %s156, 1
        %s3368 = sand.u32 %s156, 1
        %s3369 = smul.addr %s3368, 64
        %s3370 = scalar_lea.vmem [#allocation2], %s3369
        // Predicated region
        $region45: #{tcnn_network_with_input_encoding.1} parent=43 // pred_check
          %p3371 = pneg %p166
        $region46: #{tcnn_network_with_input_encoding.1} parent=43 // pred_check_branch
          %3373 = sbr.rel (%p3371) target = $region48
        $region47: #{tcnn_network_with_input_encoding.1} parent=43 // pred_region
          %s3374 = smul.u32 4, %s17
          %s3375 = smul.addr %s3374, 8
          %s3376 = scalar_lea.vmem %s6, %s3375
          // Predicated region
          $region49: #{tcnn_network_with_input_encoding.1} parent=47 // pred_check
            _
          $region50: #{tcnn_network_with_input_encoding.1} parent=47 // pred_check_branch
            %3378 = sbr.rel (0) target = $region52
          $region51: #{tcnn_network_with_input_encoding.1} parent=47 // pred_region
            // Predicated region
            $region53: #{tcnn_network_with_input_encoding.1} parent=51 // pred_check
              _
            $region54: #{tcnn_network_with_input_encoding.1} parent=51 // pred_check_branch
              %3380 = sbr.rel (0) target = $region56
            $region55: #{tcnn_network_with_input_encoding.1} parent=51 // pred_region
              loop: start=0, step=1, limit=1
              $region57: #{tcnn_network_with_input_encoding.1} parent=55 // loop_pre_header
                _
              $region58: #{tcnn_network_with_input_encoding.1} parent=55 // loop_header
                %s3382 = sphi 0, %s3386
                %p3383 = scmp.ge.s32.totalorder %s3382, 1
                %s3387 = sphi %s3370, %s3370
                %s3388 = sphi %s3376, %s3376
              $region59: #{tcnn_network_with_input_encoding.1} parent=55 // loop_header_branch
                %3385 = sbr.rel (%p3383) target = $region63
              $region60: #{tcnn_network_with_input_encoding.1} parent=55 // loop_body
                %v3389 = vld [vmem:[%s3387] sm:$0xff]
                %3390 = vst [vmem:[%s3388] sm:$0xff] %v3389
                %v3391 = vld [vmem:[%s3387 + $0x8] sm:$0xff]
                %3392 = vst [vmem:[%s3388 + $0x8] sm:$0xff] %v3391
                %v3393 = vld [vmem:[%s3387 + $0x10] sm:$0xff]
                %3394 = vst [vmem:[%s3388 + $0x10] sm:$0xff] %v3393
                %v3395 = vld [vmem:[%s3387 + $0x18] sm:$0xff]
                %3396 = vst [vmem:[%s3388 + $0x18] sm:$0xff] %v3395
                %v3397 = vld [vmem:[%s3387 + $0x20] sm:$0xff]
                %3398 = vst [vmem:[%s3388 + $0x40] sm:$0xff] %v3397
                %v3399 = vld [vmem:[%s3387 + $0x28] sm:$0xff]
                %3400 = vst [vmem:[%s3388 + $0x48] sm:$0xff] %v3399
                %v3401 = vld [vmem:[%s3387 + $0x30] sm:$0xff]
                %3402 = vst [vmem:[%s3388 + $0x50] sm:$0xff] %v3401
                %v3403 = vld [vmem:[%s3387 + $0x38] sm:$0xff]
                %3404 = vst [vmem:[%s3388 + $0x58] sm:$0xff] %v3403
              $region61: #{tcnn_network_with_input_encoding.1} parent=55 // loop_footer
                %s3386 = sadd.s32 1, %s3382
              $region62: #{tcnn_network_with_input_encoding.1} parent=55 // loop_footer_branch
                %3381 = sbr.rel target = $region58
              $region63: #{tcnn_network_with_input_encoding.1} parent=55 // loop_exit
                _
            $region56: #{tcnn_network_with_input_encoding.1} parent=51 // pred_fallthru
              _
            // Predicated region
            $region64: #{tcnn_network_with_input_encoding.1} parent=51 // pred_check
              _
            $region65: #{tcnn_network_with_input_encoding.1} parent=51 // pred_check_branch
              %3406 = sbr.rel target = $region67
            $region66: #{tcnn_network_with_input_encoding.1} parent=51 // pred_region
              _
            $region67: #{tcnn_network_with_input_encoding.1} parent=51 // pred_fallthru
              _
          $region52: #{tcnn_network_with_input_encoding.1} parent=47 // pred_fallthru
            _
          %3407 = vnop
        $region48: #{tcnn_network_with_input_encoding.1} parent=43 // pred_fallthru
          _
      $region44: #{tcnn_network_with_input_encoding.1} parent=5 // pred_fallthru
        _
      %p3408 = scmp.le.s32.totalorder 2, %s12
      // Predicated region
      $region68: #{tcnn_network_with_input_encoding.1} parent=5 // pred_check
        %p3409 = pneg %p3408
      $region69: #{tcnn_network_with_input_encoding.1} parent=5 // pred_check_branch
        %3411 = sbr.rel (%p3409) target = $region71
      $region70: #{tcnn_network_with_input_encoding.1} parent=5 // pred_region
        %s3412 = ssub.s32 %s12, 2
        // Predicated region
        $region72: #{tcnn_network_with_input_encoding.1} parent=70 // pred_check
          %p3413 = pneg %p172
        $region73: #{tcnn_network_with_input_encoding.1} parent=70 // pred_check_branch
          %3415 = sbr.rel (%p3413) target = $region75
        $region74: #{tcnn_network_with_input_encoding.1} parent=70 // pred_region
          %s3416 = sand.u32 %s157, 1
          %s3417 = sand.u32 %s157, 1
          %s3418 = smul.addr %s3417, 64
          %s3419 = scalar_lea.vmem [#allocation2], %s3418
        $region75: #{tcnn_network_with_input_encoding.1} parent=70 // pred_fallthru
          _
      $region71: #{tcnn_network_with_input_encoding.1} parent=5 // pred_fallthru
        _
    $region6: #{tcnn_network_with_input_encoding.1} parent=1 // loop_footer
      %s16 = sadd.s32 1, %s12
    $region7: #{tcnn_network_with_input_encoding.1} parent=1 // loop_footer_branch
      %11 = sbr.rel target = $region3
    $region8: #{tcnn_network_with_input_encoding.1} parent=1 // loop_exit
      _

</llo_original>
